<compile_context>
chip_gen: v6e
topology: v6e:2x2x1
jax: 0.10.0
libtpu: 0.0.40
codegen_flags: <defaults>
</compile_context>

<pallas_src>
import math
from functools import partial

import jax
import jax.numpy as jnp
import numpy as np
from jax.experimental import pallas as pl
from jax.experimental.pallas import tpu as pltpu


# ----------------------------------------------------------------------------
# Scaled-down BERT configuration (num_labels=4 as in the spec's BertConfig).
# ----------------------------------------------------------------------------
NUM_LAYERS = 2
HIDDEN = 128                       # lane-aligned (multiple of 128)
NUM_HEADS = 2
HEAD_DIM = HIDDEN // NUM_HEADS     # 64, same head_dim as bert-base
FFN = 4 * HIDDEN                   # 512
NUM_LABELS = 4
VOCAB = 512
MAX_POS = 64
TYPE_VOCAB = 2
LN_EPS = 1e-12
NEG_BIG = -1e9

SEQ = 16
BATCH = 2

LAYER_PARAM_NAMES = ("w_qkv", "b_qkv", "w_o", "b_o", "ln1_g", "ln1_b",
                     "w_ffn1", "b_ffn1", "w_ffn2", "b_ffn2", "ln2_g", "ln2_b")


# ----------------------------------------------------------------------------
# Shared pure-value math (used both inside the Pallas kernel and by the
# pure-JAX reference, so the two traces are identical up to Mosaic vs XLA).
# ----------------------------------------------------------------------------
def _gelu(x):
    # BERT GELU (tanh approximation) -> EUP tanh.
    c = math.sqrt(2.0 / math.pi)
    return 0.5 * x * (1.0 + jnp.tanh(c * (x + 0.044715 * x * x * x)))


def _layer_norm(x, gamma, beta):
    mu = jnp.mean(x, axis=-1, keepdims=True)
    var = jnp.mean((x - mu) ** 2, axis=-1, keepdims=True)
    return (x - mu) * jax.lax.rsqrt(var + LN_EPS) * gamma + beta


def _softmax_last(x):
    m = jnp.max(x, axis=-1, keepdims=True)
    p = jnp.exp(x - m)
    return p / jnp.sum(p, axis=-1, keepdims=True)


def _encoder_math(x, attn_bias, layers, w_pool, b_pool, w_cls, b_cls,
                  ln_emb_g, ln_emb_b, batch, seq):
    """x: (batch*seq, HIDDEN) summed embeddings; attn_bias: (batch, seq) additive
    mask bias (0 keep / NEG_BIG pad). Returns (batch, NUM_LABELS) logits."""
    h = _layer_norm(x, ln_emb_g, ln_emb_b)
    scale = 1.0 / math.sqrt(HEAD_DIM)

    for (w_qkv, b_qkv, w_o, b_o, ln1_g, ln1_b,
         w_ffn1, b_ffn1, w_ffn2, b_ffn2, ln2_g, ln2_b) in layers:
        # Fused QKV projection: one MXU matmul per layer; 128-lane-aligned splits.
        qkv = jnp.dot(h, w_qkv, preferred_element_type=jnp.float32) + b_qkv
        q = qkv[:, 0 * HIDDEN:1 * HIDDEN]
        k = qkv[:, 1 * HIDDEN:2 * HIDDEN]
        v = qkv[:, 2 * HIDDEN:3 * HIDDEN]

        ctx_rows = []
        for b in range(batch):                      # static unroll: tiny B
            r0, r1 = b * seq, (b + 1) * seq
            bias_b = attn_bias[b:b + 1, :]          # (1, seq) -> broadcast over queries
            head_outs = []
            for hd in range(NUM_HEADS):             # static unroll: tiny nH
                c0, c1 = hd * HEAD_DIM, (hd + 1) * HEAD_DIM
                qh = q[r0:r1, c0:c1]                # (seq, HEAD_DIM)
                kh = k[r0:r1, c0:c1]
                vh = v[r0:r1, c0:c1]
                scores = jnp.einsum("qd,kd->qk", qh, kh,
                                    preferred_element_type=jnp.float32) * scale
                probs = _softmax_last(scores + bias_b)
                head_outs.append(
                    jnp.dot(probs, vh, preferred_element_type=jnp.float32))
            ctx_rows.append(jnp.concatenate(head_outs, axis=-1))     # (seq, HIDDEN)
        ctx = jnp.concatenate(ctx_rows, axis=0)                      # (batch*seq, HIDDEN)

        attn_out = jnp.dot(ctx, w_o, preferred_element_type=jnp.float32) + b_o
        h = _layer_norm(h + attn_out, ln1_g, ln1_b)

        ff = _gelu(jnp.dot(h, w_ffn1, preferred_element_type=jnp.float32) + b_ffn1)
        ff = jnp.dot(ff, w_ffn2, preferred_element_type=jnp.float32) + b_ffn2
        h = _layer_norm(h + ff, ln2_g, ln2_b)

    # Pooler on the [CLS] token of each sequence, then classification head.
    cls = jnp.concatenate([h[b * seq:b * seq + 1, :] for b in range(batch)], axis=0)
    pooled = jnp.tanh(jnp.dot(cls, w_pool, preferred_element_type=jnp.float32) + b_pool)
    logits = jnp.dot(pooled, w_cls, preferred_element_type=jnp.float32) + b_cls
    return logits


# ----------------------------------------------------------------------------
# Pallas kernel: single invocation, everything VMEM-resident.
# ----------------------------------------------------------------------------
def bert_classifier_kernel(x_ref, bias_ref,
                           w_qkv_ref, b_qkv_ref, w_o_ref, b_o_ref,
                           ln1_g_ref, ln1_b_ref,
                           w_ffn1_ref, b_ffn1_ref, w_ffn2_ref, b_ffn2_ref,
                           ln2_g_ref, ln2_b_ref,
                           ln_emb_g_ref, ln_emb_b_ref,
                           w_pool_ref, b_pool_ref, w_cls_ref, b_cls_ref,
                           out_ref, *, batch, seq):
    layers = []
    for l in range(NUM_LAYERS):                     # static unroll over layers
        layers.append((w_qkv_ref[l], b_qkv_ref[l], w_o_ref[l], b_o_ref[l],
                       ln1_g_ref[l], ln1_b_ref[l],
                       w_ffn1_ref[l], b_ffn1_ref[l],
                       w_ffn2_ref[l], b_ffn2_ref[l],
                       ln2_g_ref[l], ln2_b_ref[l]))
    logits = _encoder_math(x_ref[...], bias_ref[...], layers,
                           w_pool_ref[...], b_pool_ref[...],
                           w_cls_ref[...], b_cls_ref[...],
                           ln_emb_g_ref[...], ln_emb_b_ref[...],
                           batch, seq)
    out_ref[...] = logits.astype(out_ref.dtype)


def bert_classifier_forward(src, attention_mask, params):
    """src: (B, S) int32 token ids; attention_mask: (B, S) in {0,1}.
    Returns (B, NUM_LABELS) float32 logits."""
    batch, seq = src.shape

    # Plain-JAX glue: embedding gathers (word + position + token-type).
    word = params["word_emb"][src]                            # (B, S, H)
    pos = params["pos_emb"][jnp.arange(seq)][None, :, :]      # (1, S, H)
    typ = params["type_emb"][0][None, None, :]                # (1, 1, H)
    x = (word + pos + typ).reshape(batch * seq, HIDDEN)       # lane-dense 2-D layout

    # Additive attention-mask bias (applied in-kernel; no per-step mask DMAs).
    attn_bias = (1.0 - attention_mask.astype(jnp.float32)) * NEG_BIG   # (B, S)

    inputs = (
        x, attn_bias,
        params["w_qkv"], params["b_qkv"], params["w_o"], params["b_o"],
        params["ln1_g"], params["ln1_b"],
        params["w_ffn1"], params["b_ffn1"], params["w_ffn2"], params["b_ffn2"],
        params["ln2_g"], params["ln2_b"],
        params["ln_emb_g"], params["ln_emb_b"],
        params["w_pool"], params["b_pool"], params["w_cls"], params["b_cls"],
    )

    vmem = pl.BlockSpec(memory_space=pltpu.MemorySpace.VMEM)
    return pl.pallas_call(
        partial(bert_classifier_kernel, batch=batch, seq=seq),
        out_shape=jax.ShapeDtypeStruct((batch, NUM_LABELS), jnp.float32),
        in_specs=[vmem] * len(inputs),
        out_specs=vmem,
    )(*inputs)


# ----------------------------------------------------------------------------
# Pure-JAX reference (same math, XLA-lowered).
# ----------------------------------------------------------------------------
def bert_classifier_reference(src, attention_mask, params):
    batch, seq = src.shape
    word = params["word_emb"][src]
    pos = params["pos_emb"][jnp.arange(seq)][None, :, :]
    typ = params["type_emb"][0][None, None, :]
    x = (word + pos + typ).reshape(batch * seq, HIDDEN)
    attn_bias = (1.0 - attention_mask.astype(jnp.float32)) * NEG_BIG
    layers = [tuple(params[name][l] for name in LAYER_PARAM_NAMES)
              for l in range(NUM_LAYERS)]
    return _encoder_math(x, attn_bias, layers,
                         params["w_pool"], params["b_pool"],
                         params["w_cls"], params["b_cls"],
                         params["ln_emb_g"], params["ln_emb_b"], batch, seq)


def init_params(key):
    shapes = {
        "word_emb": (VOCAB, HIDDEN),
        "pos_emb": (MAX_POS, HIDDEN),
        "type_emb": (TYPE_VOCAB, HIDDEN),
        "ln_emb_g": (1, HIDDEN),
        "ln_emb_b": (1, HIDDEN),
        "w_qkv": (NUM_LAYERS, HIDDEN, 3 * HIDDEN),
        "b_qkv": (NUM_LAYERS, 1, 3 * HIDDEN),
        "w_o": (NUM_LAYERS, HIDDEN, HIDDEN),
        "b_o": (NUM_LAYERS, 1, HIDDEN),
        "ln1_g": (NUM_LAYERS, 1, HIDDEN),
        "ln1_b": (NUM_LAYERS, 1, HIDDEN),
        "w_ffn1": (NUM_LAYERS, HIDDEN, FFN),
        "b_ffn1": (NUM_LAYERS, 1, FFN),
        "w_ffn2": (NUM_LAYERS, FFN, HIDDEN),
        "b_ffn2": (NUM_LAYERS, 1, HIDDEN),
        "ln2_g": (NUM_LAYERS, 1, HIDDEN),
        "ln2_b": (NUM_LAYERS, 1, HIDDEN),
        "w_pool": (HIDDEN, HIDDEN),
        "b_pool": (1, HIDDEN),
        "w_cls": (HIDDEN, NUM_LABELS),
        "b_cls": (1, NUM_LABELS),
    }
    keys = jax.random.split(key, len(shapes))
    params = {}
    for (name, shape), k in zip(shapes.items(), keys):
        val = 0.05 * jax.random.normal(k, shape, jnp.float32)
        if name.endswith("_g"):          # LayerNorm gains near 1
            val = val + 1.0
        params[name] = val
    return params


if __name__ == "__main__":
    key = jax.random.PRNGKey(0)
    k_param, k_src, k_len = jax.random.split(key, 3)

    params = init_params(k_param)
    src = jax.random.randint(k_src, (BATCH, SEQ), 0, VOCAB, dtype=jnp.int32)
    lengths = jax.random.randint(k_len, (BATCH,), 2, SEQ + 1, dtype=jnp.int32)
    attention_mask = (jnp.arange(SEQ)[None, :] < lengths[:, None]).astype(jnp.int32)

    out = jax.block_until_ready(bert_classifier_forward(src, attention_mask, params))
    assert out.shape == (BATCH, NUM_LABELS)

    ref = jax.block_until_ready(bert_classifier_reference(src, attention_mask, params))
    np.testing.assert_allclose(np.asarray(out), np.asarray(ref), rtol=2e-3, atol=2e-3)

    print("KERNEL_OK")
</pallas_src>

<mosaic_0001>
module attributes {stable_mosaic.version = 11 : i64} {
  func.func @bert_classifier_kernel(%arg0: memref<32x128xf32, #tpu.memory_space<vmem>>, %arg1: memref<2x16xf32, #tpu.memory_space<vmem>>, %arg2: memref<2x128x384xf32, #tpu.memory_space<vmem>>, %arg3: memref<2x1x384xf32, #tpu.memory_space<vmem>>, %arg4: memref<2x128x128xf32, #tpu.memory_space<vmem>>, %arg5: memref<2x1x128xf32, #tpu.memory_space<vmem>>, %arg6: memref<2x1x128xf32, #tpu.memory_space<vmem>>, %arg7: memref<2x1x128xf32, #tpu.memory_space<vmem>>, %arg8: memref<2x128x512xf32, #tpu.memory_space<vmem>>, %arg9: memref<2x1x512xf32, #tpu.memory_space<vmem>>, %arg10: memref<2x512x128xf32, #tpu.memory_space<vmem>>, %arg11: memref<2x1x128xf32, #tpu.memory_space<vmem>>, %arg12: memref<2x1x128xf32, #tpu.memory_space<vmem>>, %arg13: memref<2x1x128xf32, #tpu.memory_space<vmem>>, %arg14: memref<1x128xf32, #tpu.memory_space<vmem>>, %arg15: memref<1x128xf32, #tpu.memory_space<vmem>>, %arg16: memref<128x128xf32, #tpu.memory_space<vmem>>, %arg17: memref<1x128xf32, #tpu.memory_space<vmem>>, %arg18: memref<128x4xf32, #tpu.memory_space<vmem>>, %arg19: memref<1x4xf32, #tpu.memory_space<vmem>>, %arg20: memref<2x4xf32, #tpu.memory_space<vmem>>) attributes {dimension_semantics = [], scalar_prefetch = 0 : i64, scratch_operands = 0 : i64, tpu.core_type = #tpu.core_type<tc>} {
    %c0 = arith.constant 0 : index
    %c0_0 = arith.constant 0 : index
    %c0_1 = arith.constant 0 : index
    %0 = vector.load %arg2[%c0, %c0_0, %c0_1] : memref<2x128x384xf32, #tpu.memory_space<vmem>>, vector<1x128x384xf32>
    %1 = vector.shape_cast %0 : vector<1x128x384xf32> to vector<128x384xf32>
    %c0_2 = arith.constant 0 : index
    %c0_3 = arith.constant 0 : index
    %c0_4 = arith.constant 0 : index
    %2 = vector.load %arg3[%c0_2, %c0_3, %c0_4] : memref<2x1x384xf32, #tpu.memory_space<vmem>>, vector<1x1x384xf32>
    %3 = vector.shape_cast %2 : vector<1x1x384xf32> to vector<1x384xf32>
    %c0_5 = arith.constant 0 : index
    %c0_6 = arith.constant 0 : index
    %c0_7 = arith.constant 0 : index
    %4 = vector.load %arg4[%c0_5, %c0_6, %c0_7] : memref<2x128x128xf32, #tpu.memory_space<vmem>>, vector<1x128x128xf32>
    %5 = vector.shape_cast %4 : vector<1x128x128xf32> to vector<128x128xf32>
    %c0_8 = arith.constant 0 : index
    %c0_9 = arith.constant 0 : index
    %c0_10 = arith.constant 0 : index
    %6 = vector.load %arg5[%c0_8, %c0_9, %c0_10] : memref<2x1x128xf32, #tpu.memory_space<vmem>>, vector<1x1x128xf32>
    %7 = vector.shape_cast %6 : vector<1x1x128xf32> to vector<1x128xf32>
    %c0_11 = arith.constant 0 : index
    %c0_12 = arith.constant 0 : index
    %c0_13 = arith.constant 0 : index
    %8 = vector.load %arg6[%c0_11, %c0_12, %c0_13] : memref<2x1x128xf32, #tpu.memory_space<vmem>>, vector<1x1x128xf32>
    %9 = vector.shape_cast %8 : vector<1x1x128xf32> to vector<1x128xf32>
    %c0_14 = arith.constant 0 : index
    %c0_15 = arith.constant 0 : index
    %c0_16 = arith.constant 0 : index
    %10 = vector.load %arg7[%c0_14, %c0_15, %c0_16] : memref<2x1x128xf32, #tpu.memory_space<vmem>>, vector<1x1x128xf32>
    %11 = vector.shape_cast %10 : vector<1x1x128xf32> to vector<1x128xf32>
    %c0_17 = arith.constant 0 : index
    %c0_18 = arith.constant 0 : index
    %c0_19 = arith.constant 0 : index
    %12 = vector.load %arg8[%c0_17, %c0_18, %c0_19] : memref<2x128x512xf32, #tpu.memory_space<vmem>>, vector<1x128x512xf32>
    %13 = vector.shape_cast %12 : vector<1x128x512xf32> to vector<128x512xf32>
    %c0_20 = arith.constant 0 : index
    %c0_21 = arith.constant 0 : index
    %c0_22 = arith.constant 0 : index
    %14 = vector.load %arg9[%c0_20, %c0_21, %c0_22] : memref<2x1x512xf32, #tpu.memory_space<vmem>>, vector<1x1x512xf32>
    %15 = vector.shape_cast %14 : vector<1x1x512xf32> to vector<1x512xf32>
    %c0_23 = arith.constant 0 : index
    %c0_24 = arith.constant 0 : index
    %c0_25 = arith.constant 0 : index
    %16 = vector.load %arg10[%c0_23, %c0_24, %c0_25] : memref<2x512x128xf32, #tpu.memory_space<vmem>>, vector<1x512x128xf32>
    %17 = vector.shape_cast %16 : vector<1x512x128xf32> to vector<512x128xf32>
    %c0_26 = arith.constant 0 : index
    %c0_27 = arith.constant 0 : index
    %c0_28 = arith.constant 0 : index
    %18 = vector.load %arg11[%c0_26, %c0_27, %c0_28] : memref<2x1x128xf32, #tpu.memory_space<vmem>>, vector<1x1x128xf32>
    %19 = vector.shape_cast %18 : vector<1x1x128xf32> to vector<1x128xf32>
    %c0_29 = arith.constant 0 : index
    %c0_30 = arith.constant 0 : index
    %c0_31 = arith.constant 0 : index
    %20 = vector.load %arg12[%c0_29, %c0_30, %c0_31] : memref<2x1x128xf32, #tpu.memory_space<vmem>>, vector<1x1x128xf32>
    %21 = vector.shape_cast %20 : vector<1x1x128xf32> to vector<1x128xf32>
    %c0_32 = arith.constant 0 : index
    %c0_33 = arith.constant 0 : index
    %c0_34 = arith.constant 0 : index
    %22 = vector.load %arg13[%c0_32, %c0_33, %c0_34] : memref<2x1x128xf32, #tpu.memory_space<vmem>>, vector<1x1x128xf32>
    %23 = vector.shape_cast %22 : vector<1x1x128xf32> to vector<1x128xf32>
    %c1 = arith.constant 1 : index
    %c0_35 = arith.constant 0 : index
    %c0_36 = arith.constant 0 : index
    %24 = vector.load %arg2[%c1, %c0_35, %c0_36] : memref<2x128x384xf32, #tpu.memory_space<vmem>>, vector<1x128x384xf32>
    %25 = vector.shape_cast %24 : vector<1x128x384xf32> to vector<128x384xf32>
    %c1_37 = arith.constant 1 : index
    %c0_38 = arith.constant 0 : index
    %c0_39 = arith.constant 0 : index
    %26 = vector.load %arg3[%c1_37, %c0_38, %c0_39] : memref<2x1x384xf32, #tpu.memory_space<vmem>>, vector<1x1x384xf32>
    %27 = vector.shape_cast %26 : vector<1x1x384xf32> to vector<1x384xf32>
    %c1_40 = arith.constant 1 : index
    %c0_41 = arith.constant 0 : index
    %c0_42 = arith.constant 0 : index
    %28 = vector.load %arg4[%c1_40, %c0_41, %c0_42] : memref<2x128x128xf32, #tpu.memory_space<vmem>>, vector<1x128x128xf32>
    %29 = vector.shape_cast %28 : vector<1x128x128xf32> to vector<128x128xf32>
    %c1_43 = arith.constant 1 : index
    %c0_44 = arith.constant 0 : index
    %c0_45 = arith.constant 0 : index
    %30 = vector.load %arg5[%c1_43, %c0_44, %c0_45] : memref<2x1x128xf32, #tpu.memory_space<vmem>>, vector<1x1x128xf32>
    %31 = vector.shape_cast %30 : vector<1x1x128xf32> to vector<1x128xf32>
    %c1_46 = arith.constant 1 : index
    %c0_47 = arith.constant 0 : index
    %c0_48 = arith.constant 0 : index
    %32 = vector.load %arg6[%c1_46, %c0_47, %c0_48] : memref<2x1x128xf32, #tpu.memory_space<vmem>>, vector<1x1x128xf32>
    %33 = vector.shape_cast %32 : vector<1x1x128xf32> to vector<1x128xf32>
    %c1_49 = arith.constant 1 : index
    %c0_50 = arith.constant 0 : index
    %c0_51 = arith.constant 0 : index
    %34 = vector.load %arg7[%c1_49, %c0_50, %c0_51] : memref<2x1x128xf32, #tpu.memory_space<vmem>>, vector<1x1x128xf32>
    %35 = vector.shape_cast %34 : vector<1x1x128xf32> to vector<1x128xf32>
    %c1_52 = arith.constant 1 : index
    %c0_53 = arith.constant 0 : index
    %c0_54 = arith.constant 0 : index
    %36 = vector.load %arg8[%c1_52, %c0_53, %c0_54] : memref<2x128x512xf32, #tpu.memory_space<vmem>>, vector<1x128x512xf32>
    %37 = vector.shape_cast %36 : vector<1x128x512xf32> to vector<128x512xf32>
    %c1_55 = arith.constant 1 : index
    %c0_56 = arith.constant 0 : index
    %c0_57 = arith.constant 0 : index
    %38 = vector.load %arg9[%c1_55, %c0_56, %c0_57] : memref<2x1x512xf32, #tpu.memory_space<vmem>>, vector<1x1x512xf32>
    %39 = vector.shape_cast %38 : vector<1x1x512xf32> to vector<1x512xf32>
    %c1_58 = arith.constant 1 : index
    %c0_59 = arith.constant 0 : index
    %c0_60 = arith.constant 0 : index
    %40 = vector.load %arg10[%c1_58, %c0_59, %c0_60] : memref<2x512x128xf32, #tpu.memory_space<vmem>>, vector<1x512x128xf32>
    %41 = vector.shape_cast %40 : vector<1x512x128xf32> to vector<512x128xf32>
    %c1_61 = arith.constant 1 : index
    %c0_62 = arith.constant 0 : index
    %c0_63 = arith.constant 0 : index
    %42 = vector.load %arg11[%c1_61, %c0_62, %c0_63] : memref<2x1x128xf32, #tpu.memory_space<vmem>>, vector<1x1x128xf32>
    %43 = vector.shape_cast %42 : vector<1x1x128xf32> to vector<1x128xf32>
    %c1_64 = arith.constant 1 : index
    %c0_65 = arith.constant 0 : index
    %c0_66 = arith.constant 0 : index
    %44 = vector.load %arg12[%c1_64, %c0_65, %c0_66] : memref<2x1x128xf32, #tpu.memory_space<vmem>>, vector<1x1x128xf32>
    %45 = vector.shape_cast %44 : vector<1x1x128xf32> to vector<1x128xf32>
    %c1_67 = arith.constant 1 : index
    %c0_68 = arith.constant 0 : index
    %c0_69 = arith.constant 0 : index
    %46 = vector.load %arg13[%c1_67, %c0_68, %c0_69] : memref<2x1x128xf32, #tpu.memory_space<vmem>>, vector<1x1x128xf32>
    %47 = vector.shape_cast %46 : vector<1x1x128xf32> to vector<1x128xf32>
    %c0_70 = arith.constant 0 : index
    %c0_71 = arith.constant 0 : index
    %48 = vector.load %arg0[%c0_70, %c0_71] : memref<32x128xf32, #tpu.memory_space<vmem>>, vector<32x128xf32>
    %c0_72 = arith.constant 0 : index
    %c0_73 = arith.constant 0 : index
    %49 = vector.load %arg1[%c0_72, %c0_73] : memref<2x16xf32, #tpu.memory_space<vmem>>, vector<2x16xf32>
    %c0_74 = arith.constant 0 : index
    %c0_75 = arith.constant 0 : index
    %50 = vector.load %arg16[%c0_74, %c0_75] : memref<128x128xf32, #tpu.memory_space<vmem>>, vector<128x128xf32>
    %c0_76 = arith.constant 0 : index
    %c0_77 = arith.constant 0 : index
    %51 = vector.load %arg17[%c0_76, %c0_77] : memref<1x128xf32, #tpu.memory_space<vmem>>, vector<1x128xf32>
    %c0_78 = arith.constant 0 : index
    %c0_79 = arith.constant 0 : index
    %52 = vector.load %arg18[%c0_78, %c0_79] : memref<128x4xf32, #tpu.memory_space<vmem>>, vector<128x4xf32>
    %c0_80 = arith.constant 0 : index
    %c0_81 = arith.constant 0 : index
    %53 = vector.load %arg19[%c0_80, %c0_81] : memref<1x4xf32, #tpu.memory_space<vmem>>, vector<1x4xf32>
    %c0_82 = arith.constant 0 : index
    %c0_83 = arith.constant 0 : index
    %54 = vector.load %arg14[%c0_82, %c0_83] : memref<1x128xf32, #tpu.memory_space<vmem>>, vector<1x128xf32>
    %c0_84 = arith.constant 0 : index
    %c0_85 = arith.constant 0 : index
    %55 = vector.load %arg15[%c0_84, %c0_85] : memref<1x128xf32, #tpu.memory_space<vmem>>, vector<1x128xf32>
    %cst = arith.constant dense<0.000000e+00> : vector<32xf32>
    %56 = vector.multi_reduction <add>, %48, %cst [1] : vector<32x128xf32> to vector<32xf32>
    %57 = vector.shape_cast %56 : vector<32xf32> to vector<32x1xf32>
    %cst_86 = arith.constant 1.280000e+02 : f32
    %58 = vector.broadcast %cst_86 : f32 to vector<32x1xf32>
    %59 = arith.divf %57, %58 : vector<32x1xf32>
    %60 = vector.broadcast %59 : vector<32x1xf32> to vector<32x128xf32>
    %61 = arith.subf %48, %60 : vector<32x128xf32>
    %62 = arith.mulf %61, %61 : vector<32x128xf32>
    %cst_87 = arith.constant dense<0.000000e+00> : vector<32xf32>
    %63 = vector.multi_reduction <add>, %62, %cst_87 [1] : vector<32x128xf32> to vector<32xf32>
    %64 = vector.shape_cast %63 : vector<32xf32> to vector<32x1xf32>
    %cst_88 = arith.constant 1.280000e+02 : f32
    %65 = vector.broadcast %cst_88 : f32 to vector<32x1xf32>
    %66 = arith.divf %64, %65 : vector<32x1xf32>
    %67 = vector.broadcast %59 : vector<32x1xf32> to vector<32x128xf32>
    %68 = arith.subf %48, %67 : vector<32x128xf32>
    %cst_89 = arith.constant 9.99999996E-13 : f32
    %69 = vector.broadcast %cst_89 : f32 to vector<32x1xf32>
    %70 = arith.addf %66, %69 : vector<32x1xf32>
    %71 = math.rsqrt %70 : vector<32x1xf32>
    %72 = vector.broadcast %71 : vector<32x1xf32> to vector<32x128xf32>
    %73 = arith.mulf %68, %72 : vector<32x128xf32>
    %74 = vector.broadcast %54 : vector<1x128xf32> to vector<32x128xf32>
    %75 = arith.mulf %73, %74 : vector<32x128xf32>
    %76 = vector.broadcast %55 : vector<1x128xf32> to vector<32x128xf32>
    %77 = arith.addf %75, %76 : vector<32x128xf32>
    %cst_90 = arith.constant dense<0.000000e+00> : vector<32x384xf32>
    %78 = tpu.matmul %77, %1, %cst_90 {dimension_numbers = #tpu.dot_dimension_numbers<[1], [0], [0], [1], [0, 0, 1, 1], [], []>} : vector<32x128xf32>, vector<128x384xf32>, vector<32x384xf32> -> vector<32x384xf32>
    %79 = vector.broadcast %3 : vector<1x384xf32> to vector<32x384xf32>
    %80 = arith.addf %78, %79 : vector<32x384xf32>
    %81 = vector.extract_strided_slice %80 {offsets = [0, 0], sizes = [32, 128], strides = [1, 1]} : vector<32x384xf32> to vector<32x128xf32>
    %82 = vector.extract_strided_slice %80 {offsets = [0, 128], sizes = [32, 128], strides = [1, 1]} : vector<32x384xf32> to vector<32x128xf32>
    %83 = vector.extract_strided_slice %80 {offsets = [0, 256], sizes = [32, 128], strides = [1, 1]} : vector<32x384xf32> to vector<32x128xf32>
    %84 = vector.extract_strided_slice %49 {offsets = [0, 0], sizes = [1, 16], strides = [1, 1]} : vector<2x16xf32> to vector<1x16xf32>
    %85 = vector.extract_strided_slice %81 {offsets = [0, 0], sizes = [16, 64], strides = [1, 1]} : vector<32x128xf32> to vector<16x64xf32>
    %86 = vector.extract_strided_slice %82 {offsets = [0, 0], sizes = [16, 64], strides = [1, 1]} : vector<32x128xf32> to vector<16x64xf32>
    %87 = vector.extract_strided_slice %83 {offsets = [0, 0], sizes = [16, 64], strides = [1, 1]} : vector<32x128xf32> to vector<16x64xf32>
    "tpu.trace_start"() <{level = 10 : i32, message = "qd,kd->qk"}> : () -> ()
    %cst_91 = arith.constant dense<0.000000e+00> : vector<16x16xf32>
    %88 = tpu.matmul %85, %86, %cst_91 {dimension_numbers = #tpu.dot_dimension_numbers<[1], [1], [0], [0], [0, 0, 1, 0], [], []>} : vector<16x64xf32>, vector<16x64xf32>, vector<16x16xf32> -> vector<16x16xf32>
    "tpu.trace_stop"() : () -> ()
    %cst_92 = arith.constant 1.250000e-01 : f32
    %89 = vector.broadcast %cst_92 : f32 to vector<16x16xf32>
    %90 = arith.mulf %88, %89 : vector<16x16xf32>
    %91 = vector.broadcast %84 : vector<1x16xf32> to vector<16x16xf32>
    %92 = arith.addf %90, %91 : vector<16x16xf32>
    %cst_93 = arith.constant dense<0xFF800000> : vector<16xf32>
    %93 = vector.multi_reduction <maximumf>, %92, %cst_93 [1] : vector<16x16xf32> to vector<16xf32>
    %94 = vector.shape_cast %93 : vector<16xf32> to vector<16x1xf32>
    %95 = vector.broadcast %94 : vector<16x1xf32> to vector<16x16xf32>
    %96 = arith.subf %92, %95 : vector<16x16xf32>
    %97 = math.exp %96 : vector<16x16xf32>
    %cst_94 = arith.constant dense<0.000000e+00> : vector<16xf32>
    %98 = vector.multi_reduction <add>, %97, %cst_94 [1] : vector<16x16xf32> to vector<16xf32>
    %99 = vector.shape_cast %98 : vector<16xf32> to vector<16x1xf32>
    %100 = vector.broadcast %99 : vector<16x1xf32> to vector<16x16xf32>
    %101 = arith.divf %97, %100 : vector<16x16xf32>
    %cst_95 = arith.constant dense<0.000000e+00> : vector<16x64xf32>
    %102 = tpu.matmul %101, %87, %cst_95 {dimension_numbers = #tpu.dot_dimension_numbers<[1], [0], [0], [1], [0, 0, 1, 1], [], []>} : vector<16x16xf32>, vector<16x64xf32>, vector<16x64xf32> -> vector<16x64xf32>
    %103 = vector.extract_strided_slice %81 {offsets = [0, 64], sizes = [16, 64], strides = [1, 1]} : vector<32x128xf32> to vector<16x64xf32>
    %104 = vector.extract_strided_slice %82 {offsets = [0, 64], sizes = [16, 64], strides = [1, 1]} : vector<32x128xf32> to vector<16x64xf32>
    %105 = vector.extract_strided_slice %83 {offsets = [0, 64], sizes = [16, 64], strides = [1, 1]} : vector<32x128xf32> to vector<16x64xf32>
    "tpu.trace_start"() <{level = 10 : i32, message = "qd,kd->qk"}> : () -> ()
    %cst_96 = arith.constant dense<0.000000e+00> : vector<16x16xf32>
    %106 = tpu.matmul %103, %104, %cst_96 {dimension_numbers = #tpu.dot_dimension_numbers<[1], [1], [0], [0], [0, 0, 1, 0], [], []>} : vector<16x64xf32>, vector<16x64xf32>, vector<16x16xf32> -> vector<16x16xf32>
    "tpu.trace_stop"() : () -> ()
    %cst_97 = arith.constant 1.250000e-01 : f32
    %107 = vector.broadcast %cst_97 : f32 to vector<16x16xf32>
    %108 = arith.mulf %106, %107 : vector<16x16xf32>
    %109 = vector.broadcast %84 : vector<1x16xf32> to vector<16x16xf32>
    %110 = arith.addf %108, %109 : vector<16x16xf32>
    %cst_98 = arith.constant dense<0xFF800000> : vector<16xf32>
    %111 = vector.multi_reduction <maximumf>, %110, %cst_98 [1] : vector<16x16xf32> to vector<16xf32>
    %112 = vector.shape_cast %111 : vector<16xf32> to vector<16x1xf32>
    %113 = vector.broadcast %112 : vector<16x1xf32> to vector<16x16xf32>
    %114 = arith.subf %110, %113 : vector<16x16xf32>
    %115 = math.exp %114 : vector<16x16xf32>
    %cst_99 = arith.constant dense<0.000000e+00> : vector<16xf32>
    %116 = vector.multi_reduction <add>, %115, %cst_99 [1] : vector<16x16xf32> to vector<16xf32>
    %117 = vector.shape_cast %116 : vector<16xf32> to vector<16x1xf32>
    %118 = vector.broadcast %117 : vector<16x1xf32> to vector<16x16xf32>
    %119 = arith.divf %115, %118 : vector<16x16xf32>
    %cst_100 = arith.constant dense<0.000000e+00> : vector<16x64xf32>
    %120 = tpu.matmul %119, %105, %cst_100 {dimension_numbers = #tpu.dot_dimension_numbers<[1], [0], [0], [1], [0, 0, 1, 1], [], []>} : vector<16x16xf32>, vector<16x64xf32>, vector<16x64xf32> -> vector<16x64xf32>
    %121 = tpu.concatenate %102, %120 in 1 : vector<16x64xf32>, vector<16x64xf32> -> vector<16x128xf32>
    %122 = vector.extract_strided_slice %49 {offsets = [1, 0], sizes = [1, 16], strides = [1, 1]} : vector<2x16xf32> to vector<1x16xf32>
    %123 = vector.extract_strided_slice %81 {offsets = [16, 0], sizes = [16, 64], strides = [1, 1]} : vector<32x128xf32> to vector<16x64xf32>
    %124 = vector.extract_strided_slice %82 {offsets = [16, 0], sizes = [16, 64], strides = [1, 1]} : vector<32x128xf32> to vector<16x64xf32>
    %125 = vector.extract_strided_slice %83 {offsets = [16, 0], sizes = [16, 64], strides = [1, 1]} : vector<32x128xf32> to vector<16x64xf32>
    "tpu.trace_start"() <{level = 10 : i32, message = "qd,kd->qk"}> : () -> ()
    %cst_101 = arith.constant dense<0.000000e+00> : vector<16x16xf32>
    %126 = tpu.matmul %123, %124, %cst_101 {dimension_numbers = #tpu.dot_dimension_numbers<[1], [1], [0], [0], [0, 0, 1, 0], [], []>} : vector<16x64xf32>, vector<16x64xf32>, vector<16x16xf32> -> vector<16x16xf32>
    "tpu.trace_stop"() : () -> ()
    %cst_102 = arith.constant 1.250000e-01 : f32
    %127 = vector.broadcast %cst_102 : f32 to vector<16x16xf32>
    %128 = arith.mulf %126, %127 : vector<16x16xf32>
    %129 = vector.broadcast %122 : vector<1x16xf32> to vector<16x16xf32>
    %130 = arith.addf %128, %129 : vector<16x16xf32>
    %cst_103 = arith.constant dense<0xFF800000> : vector<16xf32>
    %131 = vector.multi_reduction <maximumf>, %130, %cst_103 [1] : vector<16x16xf32> to vector<16xf32>
    %132 = vector.shape_cast %131 : vector<16xf32> to vector<16x1xf32>
    %133 = vector.broadcast %132 : vector<16x1xf32> to vector<16x16xf32>
    %134 = arith.subf %130, %133 : vector<16x16xf32>
    %135 = math.exp %134 : vector<16x16xf32>
    %cst_104 = arith.constant dense<0.000000e+00> : vector<16xf32>
    %136 = vector.multi_reduction <add>, %135, %cst_104 [1] : vector<16x16xf32> to vector<16xf32>
    %137 = vector.shape_cast %136 : vector<16xf32> to vector<16x1xf32>
    %138 = vector.broadcast %137 : vector<16x1xf32> to vector<16x16xf32>
    %139 = arith.divf %135, %138 : vector<16x16xf32>
    %cst_105 = arith.constant dense<0.000000e+00> : vector<16x64xf32>
    %140 = tpu.matmul %139, %125, %cst_105 {dimension_numbers = #tpu.dot_dimension_numbers<[1], [0], [0], [1], [0, 0, 1, 1], [], []>} : vector<16x16xf32>, vector<16x64xf32>, vector<16x64xf32> -> vector<16x64xf32>
    %141 = vector.extract_strided_slice %81 {offsets = [16, 64], sizes = [16, 64], strides = [1, 1]} : vector<32x128xf32> to vector<16x64xf32>
    %142 = vector.extract_strided_slice %82 {offsets = [16, 64], sizes = [16, 64], strides = [1, 1]} : vector<32x128xf32> to vector<16x64xf32>
    %143 = vector.extract_strided_slice %83 {offsets = [16, 64], sizes = [16, 64], strides = [1, 1]} : vector<32x128xf32> to vector<16x64xf32>
    "tpu.trace_start"() <{level = 10 : i32, message = "qd,kd->qk"}> : () -> ()
    %cst_106 = arith.constant dense<0.000000e+00> : vector<16x16xf32>
    %144 = tpu.matmul %141, %142, %cst_106 {dimension_numbers = #tpu.dot_dimension_numbers<[1], [1], [0], [0], [0, 0, 1, 0], [], []>} : vector<16x64xf32>, vector<16x64xf32>, vector<16x16xf32> -> vector<16x16xf32>
    "tpu.trace_stop"() : () -> ()
    %cst_107 = arith.constant 1.250000e-01 : f32
    %145 = vector.broadcast %cst_107 : f32 to vector<16x16xf32>
    %146 = arith.mulf %144, %145 : vector<16x16xf32>
    %147 = vector.broadcast %122 : vector<1x16xf32> to vector<16x16xf32>
    %148 = arith.addf %146, %147 : vector<16x16xf32>
    %cst_108 = arith.constant dense<0xFF800000> : vector<16xf32>
    %149 = vector.multi_reduction <maximumf>, %148, %cst_108 [1] : vector<16x16xf32> to vector<16xf32>
    %150 = vector.shape_cast %149 : vector<16xf32> to vector<16x1xf32>
    %151 = vector.broadcast %150 : vector<16x1xf32> to vector<16x16xf32>
    %152 = arith.subf %148, %151 : vector<16x16xf32>
    %153 = math.exp %152 : vector<16x16xf32>
    %cst_109 = arith.constant dense<0.000000e+00> : vector<16xf32>
    %154 = vector.multi_reduction <add>, %153, %cst_109 [1] : vector<16x16xf32> to vector<16xf32>
    %155 = vector.shape_cast %154 : vector<16xf32> to vector<16x1xf32>
    %156 = vector.broadcast %155 : vector<16x1xf32> to vector<16x16xf32>
    %157 = arith.divf %153, %156 : vector<16x16xf32>
    %cst_110 = arith.constant dense<0.000000e+00> : vector<16x64xf32>
    %158 = tpu.matmul %157, %143, %cst_110 {dimension_numbers = #tpu.dot_dimension_numbers<[1], [0], [0], [1], [0, 0, 1, 1], [], []>} : vector<16x16xf32>, vector<16x64xf32>, vector<16x64xf32> -> vector<16x64xf32>
    %159 = tpu.concatenate %140, %158 in 1 : vector<16x64xf32>, vector<16x64xf32> -> vector<16x128xf32>
    %160 = tpu.concatenate %121, %159 in 0 : vector<16x128xf32>, vector<16x128xf32> -> vector<32x128xf32>
    %cst_111 = arith.constant dense<0.000000e+00> : vector<32x128xf32>
    %161 = tpu.matmul %160, %5, %cst_111 {dimension_numbers = #tpu.dot_dimension_numbers<[1], [0], [0], [1], [0, 0, 1, 1], [], []>} : vector<32x128xf32>, vector<128x128xf32>, vector<32x128xf32> -> vector<32x128xf32>
    %162 = vector.broadcast %7 : vector<1x128xf32> to vector<32x128xf32>
    %163 = arith.addf %161, %162 : vector<32x128xf32>
    %164 = arith.addf %77, %163 : vector<32x128xf32>
    %cst_112 = arith.constant dense<0.000000e+00> : vector<32xf32>
    %165 = vector.multi_reduction <add>, %164, %cst_112 [1] : vector<32x128xf32> to vector<32xf32>
    %166 = vector.shape_cast %165 : vector<32xf32> to vector<32x1xf32>
    %cst_113 = arith.constant 1.280000e+02 : f32
    %167 = vector.broadcast %cst_113 : f32 to vector<32x1xf32>
    %168 = arith.divf %166, %167 : vector<32x1xf32>
    %169 = vector.broadcast %168 : vector<32x1xf32> to vector<32x128xf32>
    %170 = arith.subf %164, %169 : vector<32x128xf32>
    %171 = arith.mulf %170, %170 : vector<32x128xf32>
    %cst_114 = arith.constant dense<0.000000e+00> : vector<32xf32>
    %172 = vector.multi_reduction <add>, %171, %cst_114 [1] : vector<32x128xf32> to vector<32xf32>
    %173 = vector.shape_cast %172 : vector<32xf32> to vector<32x1xf32>
    %cst_115 = arith.constant 1.280000e+02 : f32
    %174 = vector.broadcast %cst_115 : f32 to vector<32x1xf32>
    %175 = arith.divf %173, %174 : vector<32x1xf32>
    %176 = vector.broadcast %168 : vector<32x1xf32> to vector<32x128xf32>
    %177 = arith.subf %164, %176 : vector<32x128xf32>
    %cst_116 = arith.constant 9.99999996E-13 : f32
    %178 = vector.broadcast %cst_116 : f32 to vector<32x1xf32>
    %179 = arith.addf %175, %178 : vector<32x1xf32>
    %180 = math.rsqrt %179 : vector<32x1xf32>
    %181 = vector.broadcast %180 : vector<32x1xf32> to vector<32x128xf32>
    %182 = arith.mulf %177, %181 : vector<32x128xf32>
    %183 = vector.broadcast %9 : vector<1x128xf32> to vector<32x128xf32>
    %184 = arith.mulf %182, %183 : vector<32x128xf32>
    %185 = vector.broadcast %11 : vector<1x128xf32> to vector<32x128xf32>
    %186 = arith.addf %184, %185 : vector<32x128xf32>
    %cst_117 = arith.constant dense<0.000000e+00> : vector<32x512xf32>
    %187 = tpu.matmul %186, %13, %cst_117 {dimension_numbers = #tpu.dot_dimension_numbers<[1], [0], [0], [1], [0, 0, 1, 1], [], []>} : vector<32x128xf32>, vector<128x512xf32>, vector<32x512xf32> -> vector<32x512xf32>
    %188 = vector.broadcast %15 : vector<1x512xf32> to vector<32x512xf32>
    %189 = arith.addf %187, %188 : vector<32x512xf32>
    %cst_118 = arith.constant 5.000000e-01 : f32
    %190 = vector.broadcast %cst_118 : f32 to vector<32x512xf32>
    %191 = arith.mulf %190, %189 : vector<32x512xf32>
    %cst_119 = arith.constant 4.471500e-02 : f32
    %192 = vector.broadcast %cst_119 : f32 to vector<32x512xf32>
    %193 = arith.mulf %192, %189 : vector<32x512xf32>
    %194 = arith.mulf %193, %189 : vector<32x512xf32>
    %195 = arith.mulf %194, %189 : vector<32x512xf32>
    %196 = arith.addf %189, %195 : vector<32x512xf32>
    %cst_120 = arith.constant 0.797884583 : f32
    %197 = vector.broadcast %cst_120 : f32 to vector<32x512xf32>
    %198 = arith.mulf %197, %196 : vector<32x512xf32>
    %199 = math.tanh %198 : vector<32x512xf32>
    %cst_121 = arith.constant 1.000000e+00 : f32
    %200 = vector.broadcast %cst_121 : f32 to vector<32x512xf32>
    %201 = arith.addf %200, %199 : vector<32x512xf32>
    %202 = arith.mulf %191, %201 : vector<32x512xf32>
    %cst_122 = arith.constant dense<0.000000e+00> : vector<32x128xf32>
    %203 = tpu.matmul %202, %17, %cst_122 {dimension_numbers = #tpu.dot_dimension_numbers<[1], [0], [0], [1], [0, 0, 1, 1], [], []>} : vector<32x512xf32>, vector<512x128xf32>, vector<32x128xf32> -> vector<32x128xf32>
    %204 = vector.broadcast %19 : vector<1x128xf32> to vector<32x128xf32>
    %205 = arith.addf %203, %204 : vector<32x128xf32>
    %206 = arith.addf %186, %205 : vector<32x128xf32>
    %cst_123 = arith.constant dense<0.000000e+00> : vector<32xf32>
    %207 = vector.multi_reduction <add>, %206, %cst_123 [1] : vector<32x128xf32> to vector<32xf32>
    %208 = vector.shape_cast %207 : vector<32xf32> to vector<32x1xf32>
    %cst_124 = arith.constant 1.280000e+02 : f32
    %209 = vector.broadcast %cst_124 : f32 to vector<32x1xf32>
    %210 = arith.divf %208, %209 : vector<32x1xf32>
    %211 = vector.broadcast %210 : vector<32x1xf32> to vector<32x128xf32>
    %212 = arith.subf %206, %211 : vector<32x128xf32>
    %213 = arith.mulf %212, %212 : vector<32x128xf32>
    %cst_125 = arith.constant dense<0.000000e+00> : vector<32xf32>
    %214 = vector.multi_reduction <add>, %213, %cst_125 [1] : vector<32x128xf32> to vector<32xf32>
    %215 = vector.shape_cast %214 : vector<32xf32> to vector<32x1xf32>
    %cst_126 = arith.constant 1.280000e+02 : f32
    %216 = vector.broadcast %cst_126 : f32 to vector<32x1xf32>
    %217 = arith.divf %215, %216 : vector<32x1xf32>
    %218 = vector.broadcast %210 : vector<32x1xf32> to vector<32x128xf32>
    %219 = arith.subf %206, %218 : vector<32x128xf32>
    %cst_127 = arith.constant 9.99999996E-13 : f32
    %220 = vector.broadcast %cst_127 : f32 to vector<32x1xf32>
    %221 = arith.addf %217, %220 : vector<32x1xf32>
    %222 = math.rsqrt %221 : vector<32x1xf32>
    %223 = vector.broadcast %222 : vector<32x1xf32> to vector<32x128xf32>
    %224 = arith.mulf %219, %223 : vector<32x128xf32>
    %225 = vector.broadcast %21 : vector<1x128xf32> to vector<32x128xf32>
    %226 = arith.mulf %224, %225 : vector<32x128xf32>
    %227 = vector.broadcast %23 : vector<1x128xf32> to vector<32x128xf32>
    %228 = arith.addf %226, %227 : vector<32x128xf32>
    %cst_128 = arith.constant dense<0.000000e+00> : vector<32x384xf32>
    %229 = tpu.matmul %228, %25, %cst_128 {dimension_numbers = #tpu.dot_dimension_numbers<[1], [0], [0], [1], [0, 0, 1, 1], [], []>} : vector<32x128xf32>, vector<128x384xf32>, vector<32x384xf32> -> vector<32x384xf32>
    %230 = vector.broadcast %27 : vector<1x384xf32> to vector<32x384xf32>
    %231 = arith.addf %229, %230 : vector<32x384xf32>
    %232 = vector.extract_strided_slice %231 {offsets = [0, 0], sizes = [32, 128], strides = [1, 1]} : vector<32x384xf32> to vector<32x128xf32>
    %233 = vector.extract_strided_slice %231 {offsets = [0, 128], sizes = [32, 128], strides = [1, 1]} : vector<32x384xf32> to vector<32x128xf32>
    %234 = vector.extract_strided_slice %231 {offsets = [0, 256], sizes = [32, 128], strides = [1, 1]} : vector<32x384xf32> to vector<32x128xf32>
    %235 = vector.extract_strided_slice %49 {offsets = [0, 0], sizes = [1, 16], strides = [1, 1]} : vector<2x16xf32> to vector<1x16xf32>
    %236 = vector.extract_strided_slice %232 {offsets = [0, 0], sizes = [16, 64], strides = [1, 1]} : vector<32x128xf32> to vector<16x64xf32>
    %237 = vector.extract_strided_slice %233 {offsets = [0, 0], sizes = [16, 64], strides = [1, 1]} : vector<32x128xf32> to vector<16x64xf32>
    %238 = vector.extract_strided_slice %234 {offsets = [0, 0], sizes = [16, 64], strides = [1, 1]} : vector<32x128xf32> to vector<16x64xf32>
    "tpu.trace_start"() <{level = 10 : i32, message = "qd,kd->qk"}> : () -> ()
    %cst_129 = arith.constant dense<0.000000e+00> : vector<16x16xf32>
    %239 = tpu.matmul %236, %237, %cst_129 {dimension_numbers = #tpu.dot_dimension_numbers<[1], [1], [0], [0], [0, 0, 1, 0], [], []>} : vector<16x64xf32>, vector<16x64xf32>, vector<16x16xf32> -> vector<16x16xf32>
    "tpu.trace_stop"() : () -> ()
    %cst_130 = arith.constant 1.250000e-01 : f32
    %240 = vector.broadcast %cst_130 : f32 to vector<16x16xf32>
    %241 = arith.mulf %239, %240 : vector<16x16xf32>
    %242 = vector.broadcast %235 : vector<1x16xf32> to vector<16x16xf32>
    %243 = arith.addf %241, %242 : vector<16x16xf32>
    %cst_131 = arith.constant dense<0xFF800000> : vector<16xf32>
    %244 = vector.multi_reduction <maximumf>, %243, %cst_131 [1] : vector<16x16xf32> to vector<16xf32>
    %245 = vector.shape_cast %244 : vector<16xf32> to vector<16x1xf32>
    %246 = vector.broadcast %245 : vector<16x1xf32> to vector<16x16xf32>
    %247 = arith.subf %243, %246 : vector<16x16xf32>
    %248 = math.exp %247 : vector<16x16xf32>
    %cst_132 = arith.constant dense<0.000000e+00> : vector<16xf32>
    %249 = vector.multi_reduction <add>, %248, %cst_132 [1] : vector<16x16xf32> to vector<16xf32>
    %250 = vector.shape_cast %249 : vector<16xf32> to vector<16x1xf32>
    %251 = vector.broadcast %250 : vector<16x1xf32> to vector<16x16xf32>
    %252 = arith.divf %248, %251 : vector<16x16xf32>
    %cst_133 = arith.constant dense<0.000000e+00> : vector<16x64xf32>
    %253 = tpu.matmul %252, %238, %cst_133 {dimension_numbers = #tpu.dot_dimension_numbers<[1], [0], [0], [1], [0, 0, 1, 1], [], []>} : vector<16x16xf32>, vector<16x64xf32>, vector<16x64xf32> -> vector<16x64xf32>
    %254 = vector.extract_strided_slice %232 {offsets = [0, 64], sizes = [16, 64], strides = [1, 1]} : vector<32x128xf32> to vector<16x64xf32>
    %255 = vector.extract_strided_slice %233 {offsets = [0, 64], sizes = [16, 64], strides = [1, 1]} : vector<32x128xf32> to vector<16x64xf32>
    %256 = vector.extract_strided_slice %234 {offsets = [0, 64], sizes = [16, 64], strides = [1, 1]} : vector<32x128xf32> to vector<16x64xf32>
    "tpu.trace_start"() <{level = 10 : i32, message = "qd,kd->qk"}> : () -> ()
    %cst_134 = arith.constant dense<0.000000e+00> : vector<16x16xf32>
    %257 = tpu.matmul %254, %255, %cst_134 {dimension_numbers = #tpu.dot_dimension_numbers<[1], [1], [0], [0], [0, 0, 1, 0], [], []>} : vector<16x64xf32>, vector<16x64xf32>, vector<16x16xf32> -> vector<16x16xf32>
    "tpu.trace_stop"() : () -> ()
    %cst_135 = arith.constant 1.250000e-01 : f32
    %258 = vector.broadcast %cst_135 : f32 to vector<16x16xf32>
    %259 = arith.mulf %257, %258 : vector<16x16xf32>
    %260 = vector.broadcast %235 : vector<1x16xf32> to vector<16x16xf32>
    %261 = arith.addf %259, %260 : vector<16x16xf32>
    %cst_136 = arith.constant dense<0xFF800000> : vector<16xf32>
    %262 = vector.multi_reduction <maximumf>, %261, %cst_136 [1] : vector<16x16xf32> to vector<16xf32>
    %263 = vector.shape_cast %262 : vector<16xf32> to vector<16x1xf32>
    %264 = vector.broadcast %263 : vector<16x1xf32> to vector<16x16xf32>
    %265 = arith.subf %261, %264 : vector<16x16xf32>
    %266 = math.exp %265 : vector<16x16xf32>
    %cst_137 = arith.constant dense<0.000000e+00> : vector<16xf32>
    %267 = vector.multi_reduction <add>, %266, %cst_137 [1] : vector<16x16xf32> to vector<16xf32>
    %268 = vector.shape_cast %267 : vector<16xf32> to vector<16x1xf32>
    %269 = vector.broadcast %268 : vector<16x1xf32> to vector<16x16xf32>
    %270 = arith.divf %266, %269 : vector<16x16xf32>
    %cst_138 = arith.constant dense<0.000000e+00> : vector<16x64xf32>
    %271 = tpu.matmul %270, %256, %cst_138 {dimension_numbers = #tpu.dot_dimension_numbers<[1], [0], [0], [1], [0, 0, 1, 1], [], []>} : vector<16x16xf32>, vector<16x64xf32>, vector<16x64xf32> -> vector<16x64xf32>
    %272 = tpu.concatenate %253, %271 in 1 : vector<16x64xf32>, vector<16x64xf32> -> vector<16x128xf32>
    %273 = vector.extract_strided_slice %49 {offsets = [1, 0], sizes = [1, 16], strides = [1, 1]} : vector<2x16xf32> to vector<1x16xf32>
    %274 = vector.extract_strided_slice %232 {offsets = [16, 0], sizes = [16, 64], strides = [1, 1]} : vector<32x128xf32> to vector<16x64xf32>
    %275 = vector.extract_strided_slice %233 {offsets = [16, 0], sizes = [16, 64], strides = [1, 1]} : vector<32x128xf32> to vector<16x64xf32>
    %276 = vector.extract_strided_slice %234 {offsets = [16, 0], sizes = [16, 64], strides = [1, 1]} : vector<32x128xf32> to vector<16x64xf32>
    "tpu.trace_start"() <{level = 10 : i32, message = "qd,kd->qk"}> : () -> ()
    %cst_139 = arith.constant dense<0.000000e+00> : vector<16x16xf32>
    %277 = tpu.matmul %274, %275, %cst_139 {dimension_numbers = #tpu.dot_dimension_numbers<[1], [1], [0], [0], [0, 0, 1, 0], [], []>} : vector<16x64xf32>, vector<16x64xf32>, vector<16x16xf32> -> vector<16x16xf32>
    "tpu.trace_stop"() : () -> ()
    %cst_140 = arith.constant 1.250000e-01 : f32
    %278 = vector.broadcast %cst_140 : f32 to vector<16x16xf32>
    %279 = arith.mulf %277, %278 : vector<16x16xf32>
    %280 = vector.broadcast %273 : vector<1x16xf32> to vector<16x16xf32>
    %281 = arith.addf %279, %280 : vector<16x16xf32>
    %cst_141 = arith.constant dense<0xFF800000> : vector<16xf32>
    %282 = vector.multi_reduction <maximumf>, %281, %cst_141 [1] : vector<16x16xf32> to vector<16xf32>
    %283 = vector.shape_cast %282 : vector<16xf32> to vector<16x1xf32>
    %284 = vector.broadcast %283 : vector<16x1xf32> to vector<16x16xf32>
    %285 = arith.subf %281, %284 : vector<16x16xf32>
    %286 = math.exp %285 : vector<16x16xf32>
    %cst_142 = arith.constant dense<0.000000e+00> : vector<16xf32>
    %287 = vector.multi_reduction <add>, %286, %cst_142 [1] : vector<16x16xf32> to vector<16xf32>
    %288 = vector.shape_cast %287 : vector<16xf32> to vector<16x1xf32>
    %289 = vector.broadcast %288 : vector<16x1xf32> to vector<16x16xf32>
    %290 = arith.divf %286, %289 : vector<16x16xf32>
    %cst_143 = arith.constant dense<0.000000e+00> : vector<16x64xf32>
    %291 = tpu.matmul %290, %276, %cst_143 {dimension_numbers = #tpu.dot_dimension_numbers<[1], [0], [0], [1], [0, 0, 1, 1], [], []>} : vector<16x16xf32>, vector<16x64xf32>, vector<16x64xf32> -> vector<16x64xf32>
    %292 = vector.extract_strided_slice %232 {offsets = [16, 64], sizes = [16, 64], strides = [1, 1]} : vector<32x128xf32> to vector<16x64xf32>
    %293 = vector.extract_strided_slice %233 {offsets = [16, 64], sizes = [16, 64], strides = [1, 1]} : vector<32x128xf32> to vector<16x64xf32>
    %294 = vector.extract_strided_slice %234 {offsets = [16, 64], sizes = [16, 64], strides = [1, 1]} : vector<32x128xf32> to vector<16x64xf32>
    "tpu.trace_start"() <{level = 10 : i32, message = "qd,kd->qk"}> : () -> ()
    %cst_144 = arith.constant dense<0.000000e+00> : vector<16x16xf32>
    %295 = tpu.matmul %292, %293, %cst_144 {dimension_numbers = #tpu.dot_dimension_numbers<[1], [1], [0], [0], [0, 0, 1, 0], [], []>} : vector<16x64xf32>, vector<16x64xf32>, vector<16x16xf32> -> vector<16x16xf32>
    "tpu.trace_stop"() : () -> ()
    %cst_145 = arith.constant 1.250000e-01 : f32
    %296 = vector.broadcast %cst_145 : f32 to vector<16x16xf32>
    %297 = arith.mulf %295, %296 : vector<16x16xf32>
    %298 = vector.broadcast %273 : vector<1x16xf32> to vector<16x16xf32>
    %299 = arith.addf %297, %298 : vector<16x16xf32>
    %cst_146 = arith.constant dense<0xFF800000> : vector<16xf32>
    %300 = vector.multi_reduction <maximumf>, %299, %cst_146 [1] : vector<16x16xf32> to vector<16xf32>
    %301 = vector.shape_cast %300 : vector<16xf32> to vector<16x1xf32>
    %302 = vector.broadcast %301 : vector<16x1xf32> to vector<16x16xf32>
    %303 = arith.subf %299, %302 : vector<16x16xf32>
    %304 = math.exp %303 : vector<16x16xf32>
    %cst_147 = arith.constant dense<0.000000e+00> : vector<16xf32>
    %305 = vector.multi_reduction <add>, %304, %cst_147 [1] : vector<16x16xf32> to vector<16xf32>
    %306 = vector.shape_cast %305 : vector<16xf32> to vector<16x1xf32>
    %307 = vector.broadcast %306 : vector<16x1xf32> to vector<16x16xf32>
    %308 = arith.divf %304, %307 : vector<16x16xf32>
    %cst_148 = arith.constant dense<0.000000e+00> : vector<16x64xf32>
    %309 = tpu.matmul %308, %294, %cst_148 {dimension_numbers = #tpu.dot_dimension_numbers<[1], [0], [0], [1], [0, 0, 1, 1], [], []>} : vector<16x16xf32>, vector<16x64xf32>, vector<16x64xf32> -> vector<16x64xf32>
    %310 = tpu.concatenate %291, %309 in 1 : vector<16x64xf32>, vector<16x64xf32> -> vector<16x128xf32>
    %311 = tpu.concatenate %272, %310 in 0 : vector<16x128xf32>, vector<16x128xf32> -> vector<32x128xf32>
    %cst_149 = arith.constant dense<0.000000e+00> : vector<32x128xf32>
    %312 = tpu.matmul %311, %29, %cst_149 {dimension_numbers = #tpu.dot_dimension_numbers<[1], [0], [0], [1], [0, 0, 1, 1], [], []>} : vector<32x128xf32>, vector<128x128xf32>, vector<32x128xf32> -> vector<32x128xf32>
    %313 = vector.broadcast %31 : vector<1x128xf32> to vector<32x128xf32>
    %314 = arith.addf %312, %313 : vector<32x128xf32>
    %315 = arith.addf %228, %314 : vector<32x128xf32>
    %cst_150 = arith.constant dense<0.000000e+00> : vector<32xf32>
    %316 = vector.multi_reduction <add>, %315, %cst_150 [1] : vector<32x128xf32> to vector<32xf32>
    %317 = vector.shape_cast %316 : vector<32xf32> to vector<32x1xf32>
    %cst_151 = arith.constant 1.280000e+02 : f32
    %318 = vector.broadcast %cst_151 : f32 to vector<32x1xf32>
    %319 = arith.divf %317, %318 : vector<32x1xf32>
    %320 = vector.broadcast %319 : vector<32x1xf32> to vector<32x128xf32>
    %321 = arith.subf %315, %320 : vector<32x128xf32>
    %322 = arith.mulf %321, %321 : vector<32x128xf32>
    %cst_152 = arith.constant dense<0.000000e+00> : vector<32xf32>
    %323 = vector.multi_reduction <add>, %322, %cst_152 [1] : vector<32x128xf32> to vector<32xf32>
    %324 = vector.shape_cast %323 : vector<32xf32> to vector<32x1xf32>
    %cst_153 = arith.constant 1.280000e+02 : f32
    %325 = vector.broadcast %cst_153 : f32 to vector<32x1xf32>
    %326 = arith.divf %324, %325 : vector<32x1xf32>
    %327 = vector.broadcast %319 : vector<32x1xf32> to vector<32x128xf32>
    %328 = arith.subf %315, %327 : vector<32x128xf32>
    %cst_154 = arith.constant 9.99999996E-13 : f32
    %329 = vector.broadcast %cst_154 : f32 to vector<32x1xf32>
    %330 = arith.addf %326, %329 : vector<32x1xf32>
    %331 = math.rsqrt %330 : vector<32x1xf32>
    %332 = vector.broadcast %331 : vector<32x1xf32> to vector<32x128xf32>
    %333 = arith.mulf %328, %332 : vector<32x128xf32>
    %334 = vector.broadcast %33 : vector<1x128xf32> to vector<32x128xf32>
    %335 = arith.mulf %333, %334 : vector<32x128xf32>
    %336 = vector.broadcast %35 : vector<1x128xf32> to vector<32x128xf32>
    %337 = arith.addf %335, %336 : vector<32x128xf32>
    %cst_155 = arith.constant dense<0.000000e+00> : vector<32x512xf32>
    %338 = tpu.matmul %337, %37, %cst_155 {dimension_numbers = #tpu.dot_dimension_numbers<[1], [0], [0], [1], [0, 0, 1, 1], [], []>} : vector<32x128xf32>, vector<128x512xf32>, vector<32x512xf32> -> vector<32x512xf32>
    %339 = vector.broadcast %39 : vector<1x512xf32> to vector<32x512xf32>
    %340 = arith.addf %338, %339 : vector<32x512xf32>
    %cst_156 = arith.constant 5.000000e-01 : f32
    %341 = vector.broadcast %cst_156 : f32 to vector<32x512xf32>
    %342 = arith.mulf %341, %340 : vector<32x512xf32>
    %cst_157 = arith.constant 4.471500e-02 : f32
    %343 = vector.broadcast %cst_157 : f32 to vector<32x512xf32>
    %344 = arith.mulf %343, %340 : vector<32x512xf32>
    %345 = arith.mulf %344, %340 : vector<32x512xf32>
    %346 = arith.mulf %345, %340 : vector<32x512xf32>
    %347 = arith.addf %340, %346 : vector<32x512xf32>
    %cst_158 = arith.constant 0.797884583 : f32
    %348 = vector.broadcast %cst_158 : f32 to vector<32x512xf32>
    %349 = arith.mulf %348, %347 : vector<32x512xf32>
    %350 = math.tanh %349 : vector<32x512xf32>
    %cst_159 = arith.constant 1.000000e+00 : f32
    %351 = vector.broadcast %cst_159 : f32 to vector<32x512xf32>
    %352 = arith.addf %351, %350 : vector<32x512xf32>
    %353 = arith.mulf %342, %352 : vector<32x512xf32>
    %cst_160 = arith.constant dense<0.000000e+00> : vector<32x128xf32>
    %354 = tpu.matmul %353, %41, %cst_160 {dimension_numbers = #tpu.dot_dimension_numbers<[1], [0], [0], [1], [0, 0, 1, 1], [], []>} : vector<32x512xf32>, vector<512x128xf32>, vector<32x128xf32> -> vector<32x128xf32>
    %355 = vector.broadcast %43 : vector<1x128xf32> to vector<32x128xf32>
    %356 = arith.addf %354, %355 : vector<32x128xf32>
    %357 = arith.addf %337, %356 : vector<32x128xf32>
    %cst_161 = arith.constant dense<0.000000e+00> : vector<32xf32>
    %358 = vector.multi_reduction <add>, %357, %cst_161 [1] : vector<32x128xf32> to vector<32xf32>
    %359 = vector.shape_cast %358 : vector<32xf32> to vector<32x1xf32>
    %cst_162 = arith.constant 1.280000e+02 : f32
    %360 = vector.broadcast %cst_162 : f32 to vector<32x1xf32>
    %361 = arith.divf %359, %360 : vector<32x1xf32>
    %362 = vector.broadcast %361 : vector<32x1xf32> to vector<32x128xf32>
    %363 = arith.subf %357, %362 : vector<32x128xf32>
    %364 = arith.mulf %363, %363 : vector<32x128xf32>
    %cst_163 = arith.constant dense<0.000000e+00> : vector<32xf32>
    %365 = vector.multi_reduction <add>, %364, %cst_163 [1] : vector<32x128xf32> to vector<32xf32>
    %366 = vector.shape_cast %365 : vector<32xf32> to vector<32x1xf32>
    %cst_164 = arith.constant 1.280000e+02 : f32
    %367 = vector.broadcast %cst_164 : f32 to vector<32x1xf32>
    %368 = arith.divf %366, %367 : vector<32x1xf32>
    %369 = vector.broadcast %361 : vector<32x1xf32> to vector<32x128xf32>
    %370 = arith.subf %357, %369 : vector<32x128xf32>
    %cst_165 = arith.constant 9.99999996E-13 : f32
    %371 = vector.broadcast %cst_165 : f32 to vector<32x1xf32>
    %372 = arith.addf %368, %371 : vector<32x1xf32>
    %373 = math.rsqrt %372 : vector<32x1xf32>
    %374 = vector.broadcast %373 : vector<32x1xf32> to vector<32x128xf32>
    %375 = arith.mulf %370, %374 : vector<32x128xf32>
    %376 = vector.broadcast %45 : vector<1x128xf32> to vector<32x128xf32>
    %377 = arith.mulf %375, %376 : vector<32x128xf32>
    %378 = vector.broadcast %47 : vector<1x128xf32> to vector<32x128xf32>
    %379 = arith.addf %377, %378 : vector<32x128xf32>
    %380 = vector.extract_strided_slice %379 {offsets = [0, 0], sizes = [1, 128], strides = [1, 1]} : vector<32x128xf32> to vector<1x128xf32>
    %381 = vector.extract_strided_slice %379 {offsets = [16, 0], sizes = [1, 128], strides = [1, 1]} : vector<32x128xf32> to vector<1x128xf32>
    %382 = tpu.concatenate %380, %381 in 0 : vector<1x128xf32>, vector<1x128xf32> -> vector<2x128xf32>
    %cst_166 = arith.constant dense<0.000000e+00> : vector<2x128xf32>
    %383 = tpu.matmul %382, %50, %cst_166 {dimension_numbers = #tpu.dot_dimension_numbers<[1], [0], [0], [1], [0, 0, 1, 1], [], []>} : vector<2x128xf32>, vector<128x128xf32>, vector<2x128xf32> -> vector<2x128xf32>
    %384 = vector.broadcast %51 : vector<1x128xf32> to vector<2x128xf32>
    %385 = arith.addf %383, %384 : vector<2x128xf32>
    %386 = math.tanh %385 : vector<2x128xf32>
    %cst_167 = arith.constant dense<0.000000e+00> : vector<2x4xf32>
    %387 = tpu.matmul %386, %52, %cst_167 {dimension_numbers = #tpu.dot_dimension_numbers<[1], [0], [0], [1], [0, 0, 1, 1], [], []>} : vector<2x128xf32>, vector<128x4xf32>, vector<2x4xf32> -> vector<2x4xf32>
    %388 = vector.broadcast %53 : vector<1x4xf32> to vector<2x4xf32>
    %389 = arith.addf %387, %388 : vector<2x4xf32>
    %c0_168 = arith.constant 0 : index
    %c0_169 = arith.constant 0 : index
    %390 = vector.load %arg20[%c0_168, %c0_169] : memref<2x4xf32, #tpu.memory_space<vmem>>, vector<2x4xf32>
    tpu.vector_store %arg20[%c0_168, %c0_169], %389 {strides = array<i32>} : memref<2x4xf32, #tpu.memory_space<vmem>>, vector<2x4xf32>,
    return
  }
}

</mosaic_0001>

<llo_original>
// kernel: tpu_custom_call.1
$region0: #{tpu_custom_call.1}
  #allocation0 [shape = 'u32[]', space=smem, size = 0x4, offset = 0x4, fixed_abs, tag = 'smem constant byte address 0x4 - core index']
  #allocation1 [shape = 'u32[144,128]{1,0:T(1,128)}', space=vmem, size = 0x12000, scoped, tag = 'internal scratch']
  %s0 = inlined_call_operand.vmem [shape: f32[32,128], index: 0, kind: input, shape index: {}]
  %s1 = inlined_call_operand.hbm [shape: f32[2,16], index: 1, kind: input, shape index: {}]
  %s2 = inlined_call_operand.hbm [shape: f32[2,128,384], index: 2, kind: input, shape index: {}]
  %s3 = inlined_call_operand.hbm [shape: f32[2,1,384], index: 3, kind: input, shape index: {}]
  %s4 = inlined_call_operand.hbm [shape: f32[2,128,128], index: 4, kind: input, shape index: {}]
  %s5 = inlined_call_operand.hbm [shape: f32[2,1,128], index: 5, kind: input, shape index: {}]
  %s6 = inlined_call_operand.hbm [shape: f32[2,1,128], index: 6, kind: input, shape index: {}]
  %s7 = inlined_call_operand.hbm [shape: f32[2,1,128], index: 7, kind: input, shape index: {}]
  %s8 = inlined_call_operand.hbm [shape: f32[2,128,512], index: 8, kind: input, shape index: {}]
  %s9 = inlined_call_operand.hbm [shape: f32[2,1,512], index: 9, kind: input, shape index: {}]
  %s10 = inlined_call_operand.hbm [shape: f32[2,512,128], index: 10, kind: input, shape index: {}]
  %s11 = inlined_call_operand.hbm [shape: f32[2,1,128], index: 11, kind: input, shape index: {}]
  %s12 = inlined_call_operand.hbm [shape: f32[2,1,128], index: 12, kind: input, shape index: {}]
  %s13 = inlined_call_operand.hbm [shape: f32[2,1,128], index: 13, kind: input, shape index: {}]
  %s14 = inlined_call_operand.hbm [shape: f32[1,128], index: 14, kind: input, shape index: {}]
  %s15 = inlined_call_operand.hbm [shape: f32[1,128], index: 15, kind: input, shape index: {}]
  %s16 = inlined_call_operand.vmem [shape: f32[128,128], index: 16, kind: input, shape index: {}]
  %s17 = inlined_call_operand.hbm [shape: f32[1,128], index: 17, kind: input, shape index: {}]
  %s18 = inlined_call_operand.vmem [shape: f32[128,4], index: 18, kind: input, shape index: {}]
  %s19 = inlined_call_operand.vmem [shape: f32[1,4], index: 19, kind: input, shape index: {}]
  %s20 = inlined_call_operand.hbm [shape: f32[2,4], index: 20, kind: output, shape index: {}]
  %s21 = sld [smem:[#allocation0]]
  $region154: #{tpu_custom_call.1} parent=0
    _
  %s23 = ssub.s32 1, %s21
  %s24 = scalar_select 0, %s23, %s21
  $region1: #{tpu_custom_call.1} parent=0
    #allocation2 [shape = 'u8[1024]{0}', space=vmem, size = 0x400, scoped, tag = 'input window, operand 1, single buffered']
    #allocation3 [shape = 's32[1]{0}', space=sflag, size = 0x4, scoped, tag = 'scoped memory for tpu_custom_call.1']
    #allocation4 [shape = 's32[1]{0}', space=sflag, size = 0x4, scoped, tag = 'scoped memory for tpu_custom_call.1']
    #allocation5 [shape = 'u8[393216]{0}', space=vmem, size = 0x60000, scoped, tag = 'input window, operand 2, single buffered']
    #allocation6 [shape = 's32[1]{0}', space=sflag, size = 0x4, scoped, tag = 'scoped memory for tpu_custom_call.1']
    #allocation7 [shape = 'u8[3072]{0}', space=vmem, size = 0xc00, scoped, tag = 'input window, operand 3, single buffered']
    #allocation8 [shape = 'u8[131072]{0}', space=vmem, size = 0x20000, scoped, tag = 'input window, operand 4, single buffered']
    #allocation9 [shape = 's32[1]{0}', space=sflag, size = 0x4, scoped, tag = 'scoped memory for tpu_custom_call.1']
    #allocation10 [shape = 'u8[1024]{0}', space=vmem, size = 0x400, scoped, tag = 'input window, operand 5, single buffered']
    #allocation11 [shape = 'u8[1024]{0}', space=vmem, size = 0x400, scoped, tag = 'input window, operand 6, single buffered']
    #allocation12 [shape = 's32[1]{0}', space=sflag, size = 0x4, scoped, tag = 'scoped memory for tpu_custom_call.1']
    #allocation13 [shape = 'u8[1024]{0}', space=vmem, size = 0x400, scoped, tag = 'input window, operand 7, single buffered']
    #allocation14 [shape = 'u8[524288]{0}', space=vmem, size = 0x80000, scoped, tag = 'input window, operand 8, single buffered']
    #allocation15 [shape = 's32[1]{0}', space=sflag, size = 0x4, scoped, tag = 'scoped memory for tpu_custom_call.1']
    #allocation16 [shape = 'u8[4096]{0}', space=vmem, size = 0x1000, scoped, tag = 'input window, operand 9, single buffered']
    #allocation17 [shape = 'u8[524288]{0}', space=vmem, size = 0x80000, scoped, tag = 'input window, operand 10, single buffered']
    #allocation18 [shape = 's32[1]{0}', space=sflag, size = 0x4, scoped, tag = 'scoped memory for tpu_custom_call.1']
    #allocation19 [shape = 'u8[1024]{0}', space=vmem, size = 0x400, scoped, tag = 'input window, operand 11, single buffered']
    #allocation20 [shape = 'u8[1024]{0}', space=vmem, size = 0x400, scoped, tag = 'input window, operand 12, single buffered']
    #allocation21 [shape = 's32[1]{0}', space=sflag, size = 0x4, scoped, tag = 'scoped memory for tpu_custom_call.1']
    #allocation22 [shape = 'u8[1024]{0}', space=vmem, size = 0x400, scoped, tag = 'input window, operand 13, single buffered']
    #allocation23 [shape = 'u8[512]{0}', space=vmem, size = 0x400, scoped, tag = 'input window, operand 14, single buffered']
    #allocation24 [shape = 's32[1]{0}', space=sflag, size = 0x4, scoped, tag = 'scoped memory for tpu_custom_call.1']
    #allocation25 [shape = 'u8[512]{0}', space=vmem, size = 0x400, scoped, tag = 'input window, operand 15, single buffered']
    #allocation26 [shape = 'u8[512]{0}', space=vmem, size = 0x400, scoped, tag = 'input window, operand 17, single buffered']
    #allocation27 [shape = 's32[1]{0}', space=sflag, size = 0x4, scoped, tag = 'scoped memory for tpu_custom_call.1']
    #allocation28 [shape = 'u8[1024]{0}', space=vmem, size = 0x400, scoped, tag = 'output window, operand 0, single buffered']
    %25 = vsyncpa [#allocation3], 0
    %26 = vsyncpa [#allocation6], 0
    %27 = vsyncpa [#allocation9], 0
    %28 = vsyncpa [#allocation12], 0
    %29 = vsyncpa [#allocation15], 0
    %30 = vsyncpa [#allocation18], 0
    %31 = vsyncpa [#allocation21], 0
    %32 = vsyncpa [#allocation24], 0
    %33 = vsyncpa [#allocation27], 0
    %34 = vsyncpa [#allocation4], 0
    // Predicated region
    $region2: #{tpu_custom_call.1} parent=1 // pred_check
      _
    $region3: #{tpu_custom_call.1} parent=1 // pred_check_branch
      %36 = sbr.rel (0) target = $region5
    $region4: #{tpu_custom_call.1} parent=1 // pred_region
      _
    $region5: #{tpu_custom_call.1} parent=1 // pred_fallthru
      _
    // Predicated region
    $region6: #{tpu_custom_call.1} parent=1 // pred_check
      _
    $region7: #{tpu_custom_call.1} parent=1 // pred_check_branch
      %38 = sbr.rel (0) target = $region9
    $region8: #{tpu_custom_call.1} parent=1 // pred_region
      %s40 = ssub.s32 32, 32
      %41 = vsyncadd [#allocation3], %s40
      %s43 = sshll.u32 [#allocation2], 4
      %s44 = int_to_ptr.vmem [resolvable:$true] %s43
      %46 = dma.hbm_to_vmem [thread:$0]  %s1, 32, %s44, [#allocation3]
    $region9: #{tpu_custom_call.1} parent=1 // pred_fallthru
      _
    // Predicated region
    $region10: #{tpu_custom_call.1} parent=1 // pred_check
      _
    $region11: #{tpu_custom_call.1} parent=1 // pred_check_branch
      %48 = sbr.rel (0) target = $region13
    $region12: #{tpu_custom_call.1} parent=1 // pred_region
      %s50 = ssub.s32 12288, 12288
      %51 = vsyncadd [#allocation6], %s50
      %s52 = sshll.u32 [#allocation5], 4
      %s53 = int_to_ptr.vmem [resolvable:$true] %s52
      %58 = dma.hbm_to_vmem [thread:$0]  %s2, 12288, %s53, [#allocation6], 384, 384, 24
    $region13: #{tpu_custom_call.1} parent=1 // pred_fallthru
      _
    // Predicated region
    $region14: #{tpu_custom_call.1} parent=1 // pred_check
      _
    $region15: #{tpu_custom_call.1} parent=1 // pred_check_branch
      %60 = sbr.rel (0) target = $region17
    $region16: #{tpu_custom_call.1} parent=1 // pred_region
      %s62 = ssub.s32 96, 96
      %63 = vsyncadd [#allocation6], %s62
      %s64 = sshll.u32 [#allocation7], 4
      %s65 = int_to_ptr.vmem [resolvable:$true] %s64
      %70 = dma.hbm_to_vmem [thread:$0]  %s3, 96, %s65, [#allocation6], 48, 48, 3
    $region17: #{tpu_custom_call.1} parent=1 // pred_fallthru
      _
    // Predicated region
    $region18: #{tpu_custom_call.1} parent=1 // pred_check
      _
    $region19: #{tpu_custom_call.1} parent=1 // pred_check_branch
      %72 = sbr.rel (0) target = $region21
    $region20: #{tpu_custom_call.1} parent=1 // pred_region
      %s74 = ssub.s32 4096, 4096
      %75 = vsyncadd [#allocation9], %s74
      %s76 = sshll.u32 [#allocation8], 4
      %s77 = int_to_ptr.vmem [resolvable:$true] %s76
      %82 = dma.hbm_to_vmem [thread:$0]  %s4, 4096, %s77, [#allocation9], 128, 128, 8
    $region21: #{tpu_custom_call.1} parent=1 // pred_fallthru
      _
    // Predicated region
    $region22: #{tpu_custom_call.1} parent=1 // pred_check
      _
    $region23: #{tpu_custom_call.1} parent=1 // pred_check_branch
      %84 = sbr.rel (0) target = $region25
    $region24: #{tpu_custom_call.1} parent=1 // pred_region
      %s86 = ssub.s32 32, 32
      %87 = vsyncadd [#allocation9], %s86
      %s88 = sshll.u32 [#allocation10], 4
      %s89 = int_to_ptr.vmem [resolvable:$true] %s88
      %94 = dma.hbm_to_vmem [thread:$0]  %s5, 32, %s89, [#allocation9], 16, 16, 1
    $region25: #{tpu_custom_call.1} parent=1 // pred_fallthru
      _
    // Predicated region
    $region26: #{tpu_custom_call.1} parent=1 // pred_check
      _
    $region27: #{tpu_custom_call.1} parent=1 // pred_check_branch
      %96 = sbr.rel (0) target = $region29
    $region28: #{tpu_custom_call.1} parent=1 // pred_region
      %s98 = ssub.s32 32, 32
      %99 = vsyncadd [#allocation12], %s98
      %s100 = sshll.u32 [#allocation11], 4
      %s101 = int_to_ptr.vmem [resolvable:$true] %s100
      %106 = dma.hbm_to_vmem [thread:$0]  %s6, 32, %s101, [#allocation12], 16, 16, 1
    $region29: #{tpu_custom_call.1} parent=1 // pred_fallthru
      _
    // Predicated region
    $region30: #{tpu_custom_call.1} parent=1 // pred_check
      _
    $region31: #{tpu_custom_call.1} parent=1 // pred_check_branch
      %108 = sbr.rel (0) target = $region33
    $region32: #{tpu_custom_call.1} parent=1 // pred_region
      %s110 = ssub.s32 32, 32
      %111 = vsyncadd [#allocation12], %s110
      %s112 = sshll.u32 [#allocation13], 4
      %s113 = int_to_ptr.vmem [resolvable:$true] %s112
      %118 = dma.hbm_to_vmem [thread:$0]  %s7, 32, %s113, [#allocation12], 16, 16, 1
    $region33: #{tpu_custom_call.1} parent=1 // pred_fallthru
      _
    // Predicated region
    $region34: #{tpu_custom_call.1} parent=1 // pred_check
      _
    $region35: #{tpu_custom_call.1} parent=1 // pred_check_branch
      %120 = sbr.rel (0) target = $region37
    $region36: #{tpu_custom_call.1} parent=1 // pred_region
      %s122 = ssub.s32 16384, 16384
      %123 = vsyncadd [#allocation15], %s122
      %s124 = sshll.u32 [#allocation14], 4
      %s125 = int_to_ptr.vmem [resolvable:$true] %s124
      %130 = dma.hbm_to_vmem [thread:$0]  %s8, 16384, %s125, [#allocation15], 512, 512, 32
    $region37: #{tpu_custom_call.1} parent=1 // pred_fallthru
      _
    // Predicated region
    $region38: #{tpu_custom_call.1} parent=1 // pred_check
      _
    $region39: #{tpu_custom_call.1} parent=1 // pred_check_branch
      %132 = sbr.rel (0) target = $region41
    $region40: #{tpu_custom_call.1} parent=1 // pred_region
      %s134 = ssub.s32 128, 128
      %135 = vsyncadd [#allocation15], %s134
      %s136 = sshll.u32 [#allocation16], 4
      %s137 = int_to_ptr.vmem [resolvable:$true] %s136
      %142 = dma.hbm_to_vmem [thread:$0]  %s9, 128, %s137, [#allocation15], 64, 64, 4
    $region41: #{tpu_custom_call.1} parent=1 // pred_fallthru
      _
    // Predicated region
    $region42: #{tpu_custom_call.1} parent=1 // pred_check
      _
    $region43: #{tpu_custom_call.1} parent=1 // pred_check_branch
      %144 = sbr.rel (0) target = $region45
    $region44: #{tpu_custom_call.1} parent=1 // pred_region
      %s146 = ssub.s32 16384, 16384
      %147 = vsyncadd [#allocation18], %s146
      %s148 = sshll.u32 [#allocation17], 4
      %s149 = int_to_ptr.vmem [resolvable:$true] %s148
      %154 = dma.hbm_to_vmem [thread:$0]  %s10, 16384, %s149, [#allocation18], 128, 128, 8
    $region45: #{tpu_custom_call.1} parent=1 // pred_fallthru
      _
    // Predicated region
    $region46: #{tpu_custom_call.1} parent=1 // pred_check
      _
    $region47: #{tpu_custom_call.1} parent=1 // pred_check_branch
      %156 = sbr.rel (0) target = $region49
    $region48: #{tpu_custom_call.1} parent=1 // pred_region
      %s158 = ssub.s32 32, 32
      %159 = vsyncadd [#allocation18], %s158
      %s160 = sshll.u32 [#allocation19], 4
      %s161 = int_to_ptr.vmem [resolvable:$true] %s160
      %166 = dma.hbm_to_vmem [thread:$0]  %s11, 32, %s161, [#allocation18], 16, 16, 1
    $region49: #{tpu_custom_call.1} parent=1 // pred_fallthru
      _
    // Predicated region
    $region50: #{tpu_custom_call.1} parent=1 // pred_check
      _
    $region51: #{tpu_custom_call.1} parent=1 // pred_check_branch
      %168 = sbr.rel (0) target = $region53
    $region52: #{tpu_custom_call.1} parent=1 // pred_region
      %s170 = ssub.s32 32, 32
      %171 = vsyncadd [#allocation21], %s170
      %s172 = sshll.u32 [#allocation20], 4
      %s173 = int_to_ptr.vmem [resolvable:$true] %s172
      %178 = dma.hbm_to_vmem [thread:$0]  %s12, 32, %s173, [#allocation21], 16, 16, 1
    $region53: #{tpu_custom_call.1} parent=1 // pred_fallthru
      _
    // Predicated region
    $region54: #{tpu_custom_call.1} parent=1 // pred_check
      _
    $region55: #{tpu_custom_call.1} parent=1 // pred_check_branch
      %180 = sbr.rel (0) target = $region57
    $region56: #{tpu_custom_call.1} parent=1 // pred_region
      %s182 = ssub.s32 32, 32
      %183 = vsyncadd [#allocation21], %s182
      %s184 = sshll.u32 [#allocation22], 4
      %s185 = int_to_ptr.vmem [resolvable:$true] %s184
      %190 = dma.hbm_to_vmem [thread:$0]  %s13, 32, %s185, [#allocation21], 16, 16, 1
    $region57: #{tpu_custom_call.1} parent=1 // pred_fallthru
      _
    // Predicated region
    $region58: #{tpu_custom_call.1} parent=1 // pred_check
      _
    $region59: #{tpu_custom_call.1} parent=1 // pred_check_branch
      %192 = sbr.rel (0) target = $region61
    $region60: #{tpu_custom_call.1} parent=1 // pred_region
      %s194 = ssub.s32 16, 16
      %195 = vsyncadd [#allocation24], %s194
      %s197 = sshll.u32 [#allocation23], 4
      %s198 = int_to_ptr.vmem [resolvable:$true] %s197
      %200 = dma.hbm_to_vmem [thread:$0]  %s14, 16, %s198, [#allocation24]
    $region61: #{tpu_custom_call.1} parent=1 // pred_fallthru
      _
    // Predicated region
    $region62: #{tpu_custom_call.1} parent=1 // pred_check
      _
    $region63: #{tpu_custom_call.1} parent=1 // pred_check_branch
      %202 = sbr.rel (0) target = $region65
    $region64: #{tpu_custom_call.1} parent=1 // pred_region
      %s204 = ssub.s32 16, 16
      %205 = vsyncadd [#allocation24], %s204
      %s207 = sshll.u32 [#allocation25], 4
      %s208 = int_to_ptr.vmem [resolvable:$true] %s207
      %210 = dma.hbm_to_vmem [thread:$0]  %s15, 16, %s208, [#allocation24]
    $region65: #{tpu_custom_call.1} parent=1 // pred_fallthru
      _
    // Predicated region
    $region66: #{tpu_custom_call.1} parent=1 // pred_check
      _
    $region67: #{tpu_custom_call.1} parent=1 // pred_check_branch
      %212 = sbr.rel (0) target = $region69
    $region68: #{tpu_custom_call.1} parent=1 // pred_region
      _
    $region69: #{tpu_custom_call.1} parent=1 // pred_fallthru
      _
    // Predicated region
    $region70: #{tpu_custom_call.1} parent=1 // pred_check
      _
    $region71: #{tpu_custom_call.1} parent=1 // pred_check_branch
      %214 = sbr.rel (0) target = $region73
    $region72: #{tpu_custom_call.1} parent=1 // pred_region
      %s216 = ssub.s32 16, 16
      %217 = vsyncadd [#allocation27], %s216
      %s219 = sshll.u32 [#allocation26], 4
      %s220 = int_to_ptr.vmem [resolvable:$true] %s219
      %222 = dma.hbm_to_vmem [thread:$0]  %s17, 16, %s220, [#allocation27]
    $region73: #{tpu_custom_call.1} parent=1 // pred_fallthru
      _
    // Predicated region
    $region74: #{tpu_custom_call.1} parent=1 // pred_check
      _
    $region75: #{tpu_custom_call.1} parent=1 // pred_check_branch
      %224 = sbr.rel (0) target = $region77
    $region76: #{tpu_custom_call.1} parent=1 // pred_region
      _
    $region77: #{tpu_custom_call.1} parent=1 // pred_fallthru
      _
    // Predicated region
    $region78: #{tpu_custom_call.1} parent=1 // pred_check
      _
    $region79: #{tpu_custom_call.1} parent=1 // pred_check_branch
      %226 = sbr.rel (0) target = $region81
    $region80: #{tpu_custom_call.1} parent=1 // pred_region
      _
    $region81: #{tpu_custom_call.1} parent=1 // pred_fallthru
      _
    // Predicated region
    $region82: #{tpu_custom_call.1} parent=1 // pred_check
      _
    $region83: #{tpu_custom_call.1} parent=1 // pred_check_branch
      %228 = sbr.rel (0) target = $region85
    $region84: #{tpu_custom_call.1} parent=1 // pred_region
      %229 = dma.done [#allocation3], 32
    $region85: #{tpu_custom_call.1} parent=1 // pred_fallthru
      _
    // Predicated region
    $region86: #{tpu_custom_call.1} parent=1 // pred_check
      _
    $region87: #{tpu_custom_call.1} parent=1 // pred_check_branch
      %231 = sbr.rel (0) target = $region89
    $region88: #{tpu_custom_call.1} parent=1 // pred_region
      %232 = dma.done [#allocation6], 12288
    $region89: #{tpu_custom_call.1} parent=1 // pred_fallthru
      _
    // Predicated region
    $region90: #{tpu_custom_call.1} parent=1 // pred_check
      _
    $region91: #{tpu_custom_call.1} parent=1 // pred_check_branch
      %234 = sbr.rel (0) target = $region93
    $region92: #{tpu_custom_call.1} parent=1 // pred_region
      %235 = dma.done [#allocation6], 96
    $region93: #{tpu_custom_call.1} parent=1 // pred_fallthru
      _
    // Predicated region
    $region94: #{tpu_custom_call.1} parent=1 // pred_check
      _
    $region95: #{tpu_custom_call.1} parent=1 // pred_check_branch
      %237 = sbr.rel (0) target = $region97
    $region96: #{tpu_custom_call.1} parent=1 // pred_region
      %238 = dma.done [#allocation9], 4096
    $region97: #{tpu_custom_call.1} parent=1 // pred_fallthru
      _
    // Predicated region
    $region98: #{tpu_custom_call.1} parent=1 // pred_check
      _
    $region99: #{tpu_custom_call.1} parent=1 // pred_check_branch
      %240 = sbr.rel (0) target = $region101
    $region100: #{tpu_custom_call.1} parent=1 // pred_region
      %241 = dma.done [#allocation9], 32
    $region101: #{tpu_custom_call.1} parent=1 // pred_fallthru
      _
    // Predicated region
    $region102: #{tpu_custom_call.1} parent=1 // pred_check
      _
    $region103: #{tpu_custom_call.1} parent=1 // pred_check_branch
      %243 = sbr.rel (0) target = $region105
    $region104: #{tpu_custom_call.1} parent=1 // pred_region
      %244 = dma.done [#allocation12], 32
    $region105: #{tpu_custom_call.1} parent=1 // pred_fallthru
      _
    // Predicated region
    $region106: #{tpu_custom_call.1} parent=1 // pred_check
      _
    $region107: #{tpu_custom_call.1} parent=1 // pred_check_branch
      %246 = sbr.rel (0) target = $region109
    $region108: #{tpu_custom_call.1} parent=1 // pred_region
      %247 = dma.done [#allocation12], 32
    $region109: #{tpu_custom_call.1} parent=1 // pred_fallthru
      _
    // Predicated region
    $region110: #{tpu_custom_call.1} parent=1 // pred_check
      _
    $region111: #{tpu_custom_call.1} parent=1 // pred_check_branch
      %249 = sbr.rel (0) target = $region113
    $region112: #{tpu_custom_call.1} parent=1 // pred_region
      %250 = dma.done [#allocation15], 16384
    $region113: #{tpu_custom_call.1} parent=1 // pred_fallthru
      _
    // Predicated region
    $region114: #{tpu_custom_call.1} parent=1 // pred_check
      _
    $region115: #{tpu_custom_call.1} parent=1 // pred_check_branch
      %252 = sbr.rel (0) target = $region117
    $region116: #{tpu_custom_call.1} parent=1 // pred_region
      %253 = dma.done [#allocation15], 128
    $region117: #{tpu_custom_call.1} parent=1 // pred_fallthru
      _
    // Predicated region
    $region118: #{tpu_custom_call.1} parent=1 // pred_check
      _
    $region119: #{tpu_custom_call.1} parent=1 // pred_check_branch
      %255 = sbr.rel (0) target = $region121
    $region120: #{tpu_custom_call.1} parent=1 // pred_region
      %256 = dma.done [#allocation18], 16384
    $region121: #{tpu_custom_call.1} parent=1 // pred_fallthru
      _
    // Predicated region
    $region122: #{tpu_custom_call.1} parent=1 // pred_check
      _
    $region123: #{tpu_custom_call.1} parent=1 // pred_check_branch
      %258 = sbr.rel (0) target = $region125
    $region124: #{tpu_custom_call.1} parent=1 // pred_region
      %259 = dma.done [#allocation18], 32
    $region125: #{tpu_custom_call.1} parent=1 // pred_fallthru
      _
    // Predicated region
    $region126: #{tpu_custom_call.1} parent=1 // pred_check
      _
    $region127: #{tpu_custom_call.1} parent=1 // pred_check_branch
      %261 = sbr.rel (0) target = $region129
    $region128: #{tpu_custom_call.1} parent=1 // pred_region
      %262 = dma.done [#allocation21], 32
    $region129: #{tpu_custom_call.1} parent=1 // pred_fallthru
      _
    // Predicated region
    $region130: #{tpu_custom_call.1} parent=1 // pred_check
      _
    $region131: #{tpu_custom_call.1} parent=1 // pred_check_branch
      %264 = sbr.rel (0) target = $region133
    $region132: #{tpu_custom_call.1} parent=1 // pred_region
      %265 = dma.done [#allocation21], 32
    $region133: #{tpu_custom_call.1} parent=1 // pred_fallthru
      _
    // Predicated region
    $region134: #{tpu_custom_call.1} parent=1 // pred_check
      _
    $region135: #{tpu_custom_call.1} parent=1 // pred_check_branch
      %267 = sbr.rel (0) target = $region137
    $region136: #{tpu_custom_call.1} parent=1 // pred_region
      %268 = dma.done [#allocation24], 16
    $region137: #{tpu_custom_call.1} parent=1 // pred_fallthru
      _
    // Predicated region
    $region138: #{tpu_custom_call.1} parent=1 // pred_check
      _
    $region139: #{tpu_custom_call.1} parent=1 // pred_check_branch
      %270 = sbr.rel (0) target = $region141
    $region140: #{tpu_custom_call.1} parent=1 // pred_region
      %271 = dma.done [#allocation24], 16
    $region141: #{tpu_custom_call.1} parent=1 // pred_fallthru
      _
    // Predicated region
    $region142: #{tpu_custom_call.1} parent=1 // pred_check
      _
    $region143: #{tpu_custom_call.1} parent=1 // pred_check_branch
      %273 = sbr.rel (0) target = $region145
    $region144: #{tpu_custom_call.1} parent=1 // pred_region
      %274 = dma.done [#allocation27], 16
    $region145: #{tpu_custom_call.1} parent=1 // pred_fallthru
      _
    %v275 = vld [vmem:[#allocation5] sm:$0xff]
    %v276 = vld [vmem:[#allocation5 + $0x8] sm:$0xff]
    %v277 = vld [vmem:[#allocation5 + $0x10] sm:$0xff]
    %v278 = vld [vmem:[#allocation5 + $0x18] sm:$0xff]
    %v279 = vld [vmem:[#allocation5 + $0x20] sm:$0xff]
    %v280 = vld [vmem:[#allocation5 + $0x28] sm:$0xff]
    %v281 = vld [vmem:[#allocation5 + $0x30] sm:$0xff]
    %v282 = vld [vmem:[#allocation5 + $0x38] sm:$0xff]
    %v283 = vld [vmem:[#allocation5 + $0x40] sm:$0xff]
    %v284 = vld [vmem:[#allocation5 + $0x48] sm:$0xff]
    %v285 = vld [vmem:[#allocation5 + $0x50] sm:$0xff]
    %v286 = vld [vmem:[#allocation5 + $0x58] sm:$0xff]
    %v287 = vld [vmem:[#allocation5 + $0x60] sm:$0xff]
    %v288 = vld [vmem:[#allocation5 + $0x68] sm:$0xff]
    %v289 = vld [vmem:[#allocation5 + $0x70] sm:$0xff]
    %v290 = vld [vmem:[#allocation5 + $0x78] sm:$0xff]
    %v291 = vld [vmem:[#allocation5 + $0x80] sm:$0xff]
    %v292 = vld [vmem:[#allocation5 + $0x88] sm:$0xff]
    %v293 = vld [vmem:[#allocation5 + $0x90] sm:$0xff]
    %v294 = vld [vmem:[#allocation5 + $0x98] sm:$0xff]
    %v295 = vld [vmem:[#allocation5 + $0xa0] sm:$0xff]
    %v296 = vld [vmem:[#allocation5 + $0xa8] sm:$0xff]
    %v297 = vld [vmem:[#allocation5 + $0xb0] sm:$0xff]
    %v298 = vld [vmem:[#allocation5 + $0xb8] sm:$0xff]
    %v299 = vld [vmem:[#allocation5 + $0xc0] sm:$0xff]
    %v300 = vld [vmem:[#allocation5 + $0xc8] sm:$0xff]
    %v301 = vld [vmem:[#allocation5 + $0xd0] sm:$0xff]
    %v302 = vld [vmem:[#allocation5 + $0xd8] sm:$0xff]
    %v303 = vld [vmem:[#allocation5 + $0xe0] sm:$0xff]
    %v304 = vld [vmem:[#allocation5 + $0xe8] sm:$0xff]
    %v305 = vld [vmem:[#allocation5 + $0xf0] sm:$0xff]
    %v306 = vld [vmem:[#allocation5 + $0xf8] sm:$0xff]
    %v307 = vld [vmem:[#allocation5 + $0x100] sm:$0xff]
    %v308 = vld [vmem:[#allocation5 + $0x108] sm:$0xff]
    %v309 = vld [vmem:[#allocation5 + $0x110] sm:$0xff]
    %v310 = vld [vmem:[#allocation5 + $0x118] sm:$0xff]
    %v311 = vld [vmem:[#allocation5 + $0x120] sm:$0xff]
    %v312 = vld [vmem:[#allocation5 + $0x128] sm:$0xff]
    %v313 = vld [vmem:[#allocation5 + $0x130] sm:$0xff]
    %v314 = vld [vmem:[#allocation5 + $0x138] sm:$0xff]
    %v315 = vld [vmem:[#allocation5 + $0x140] sm:$0xff]
    %v316 = vld [vmem:[#allocation5 + $0x148] sm:$0xff]
    %v317 = vld [vmem:[#allocation5 + $0x150] sm:$0xff]
    %v318 = vld [vmem:[#allocation5 + $0x158] sm:$0xff]
    %v319 = vld [vmem:[#allocation5 + $0x160] sm:$0xff]
    %v320 = vld [vmem:[#allocation5 + $0x168] sm:$0xff]
    %v321 = vld [vmem:[#allocation5 + $0x170] sm:$0xff]
    %v322 = vld [vmem:[#allocation5 + $0x178] sm:$0xff]
    %v323 = vld [vmem:[#allocation7] sm:$0x7]
    %v324 = vld [vmem:[#allocation8] sm:$0xff]
    %v325 = vld [vmem:[#allocation8 + $0x8] sm:$0xff]
    %v326 = vld [vmem:[#allocation8 + $0x10] sm:$0xff]
    %v327 = vld [vmem:[#allocation8 + $0x18] sm:$0xff]
    %v328 = vld [vmem:[#allocation8 + $0x20] sm:$0xff]
    %v329 = vld [vmem:[#allocation8 + $0x28] sm:$0xff]
    %v330 = vld [vmem:[#allocation8 + $0x30] sm:$0xff]
    %v331 = vld [vmem:[#allocation8 + $0x38] sm:$0xff]
    %v332 = vld [vmem:[#allocation8 + $0x40] sm:$0xff]
    %v333 = vld [vmem:[#allocation8 + $0x48] sm:$0xff]
    %v334 = vld [vmem:[#allocation8 + $0x50] sm:$0xff]
    %v335 = vld [vmem:[#allocation8 + $0x58] sm:$0xff]
    %v336 = vld [vmem:[#allocation8 + $0x60] sm:$0xff]
    %v337 = vld [vmem:[#allocation8 + $0x68] sm:$0xff]
    %v338 = vld [vmem:[#allocation8 + $0x70] sm:$0xff]
    %v339 = vld [vmem:[#allocation8 + $0x78] sm:$0xff]
    %v340 = vld [vmem:[#allocation10] sm:$0x1]
    %v341 = vld [vmem:[#allocation11] sm:$0x1]
    %v342 = vld [vmem:[#allocation13] sm:$0x1]
    %v343 = vld [vmem:[#allocation14] sm:$0xff]
    %v344 = vld [vmem:[#allocation14 + $0x8] sm:$0xff]
    %v345 = vld [vmem:[#allocation14 + $0x10] sm:$0xff]
    %v346 = vld [vmem:[#allocation14 + $0x18] sm:$0xff]
    %v347 = vld [vmem:[#allocation14 + $0x20] sm:$0xff]
    %v348 = vld [vmem:[#allocation14 + $0x28] sm:$0xff]
    %v349 = vld [vmem:[#allocation14 + $0x30] sm:$0xff]
    %v350 = vld [vmem:[#allocation14 + $0x38] sm:$0xff]
    %v351 = vld [vmem:[#allocation14 + $0x40] sm:$0xff]
    %v352 = vld [vmem:[#allocation14 + $0x48] sm:$0xff]
    %v353 = vld [vmem:[#allocation14 + $0x50] sm:$0xff]
    %v354 = vld [vmem:[#allocation14 + $0x58] sm:$0xff]
    %v355 = vld [vmem:[#allocation14 + $0x60] sm:$0xff]
    %v356 = vld [vmem:[#allocation14 + $0x68] sm:$0xff]
    %v357 = vld [vmem:[#allocation14 + $0x70] sm:$0xff]
    %v358 = vld [vmem:[#allocation14 + $0x78] sm:$0xff]
    %v359 = vld [vmem:[#allocation14 + $0x80] sm:$0xff]
    %v360 = vld [vmem:[#allocation14 + $0x88] sm:$0xff]
    %v361 = vld [vmem:[#allocation14 + $0x90] sm:$0xff]
    %v362 = vld [vmem:[#allocation14 + $0x98] sm:$0xff]
    %v363 = vld [vmem:[#allocation14 + $0xa0] sm:$0xff]
    %v364 = vld [vmem:[#allocation14 + $0xa8] sm:$0xff]
    %v365 = vld [vmem:[#allocation14 + $0xb0] sm:$0xff]
    %v366 = vld [vmem:[#allocation14 + $0xb8] sm:$0xff]
    %v367 = vld [vmem:[#allocation14 + $0xc0] sm:$0xff]
    %v368 = vld [vmem:[#allocation14 + $0xc8] sm:$0xff]
    %v369 = vld [vmem:[#allocation14 + $0xd0] sm:$0xff]
    %v370 = vld [vmem:[#allocation14 + $0xd8] sm:$0xff]
    %v371 = vld [vmem:[#allocation14 + $0xe0] sm:$0xff]
    %v372 = vld [vmem:[#allocation14 + $0xe8] sm:$0xff]
    %v373 = vld [vmem:[#allocation14 + $0xf0] sm:$0xff]
    %v374 = vld [vmem:[#allocation14 + $0xf8] sm:$0xff]
    %v375 = vld [vmem:[#allocation14 + $0x100] sm:$0xff]
    %v376 = vld [vmem:[#allocation14 + $0x108] sm:$0xff]
    %v377 = vld [vmem:[#allocation14 + $0x110] sm:$0xff]
    %v378 = vld [vmem:[#allocation14 + $0x118] sm:$0xff]
    %v379 = vld [vmem:[#allocation14 + $0x120] sm:$0xff]
    %v380 = vld [vmem:[#allocation14 + $0x128] sm:$0xff]
    %v381 = vld [vmem:[#allocation14 + $0x130] sm:$0xff]
    %v382 = vld [vmem:[#allocation14 + $0x138] sm:$0xff]
    %v383 = vld [vmem:[#allocation14 + $0x140] sm:$0xff]
    %v384 = vld [vmem:[#allocation14 + $0x148] sm:$0xff]
    %v385 = vld [vmem:[#allocation14 + $0x150] sm:$0xff]
    %v386 = vld [vmem:[#allocation14 + $0x158] sm:$0xff]
    %v387 = vld [vmem:[#allocation14 + $0x160] sm:$0xff]
    %v388 = vld [vmem:[#allocation14 + $0x168] sm:$0xff]
    %v389 = vld [vmem:[#allocation14 + $0x170] sm:$0xff]
    %v390 = vld [vmem:[#allocation14 + $0x178] sm:$0xff]
    %v391 = vld [vmem:[#allocation14 + $0x180] sm:$0xff]
    %v392 = vld [vmem:[#allocation14 + $0x188] sm:$0xff]
    %v393 = vld [vmem:[#allocation14 + $0x190] sm:$0xff]
    %v394 = vld [vmem:[#allocation14 + $0x198] sm:$0xff]
    %v395 = vld [vmem:[#allocation14 + $0x1a0] sm:$0xff]
    %v396 = vld [vmem:[#allocation14 + $0x1a8] sm:$0xff]
    %v397 = vld [vmem:[#allocation14 + $0x1b0] sm:$0xff]
    %v398 = vld [vmem:[#allocation14 + $0x1b8] sm:$0xff]
    %v399 = vld [vmem:[#allocation14 + $0x1c0] sm:$0xff]
    %v400 = vld [vmem:[#allocation14 + $0x1c8] sm:$0xff]
    %v401 = vld [vmem:[#allocation14 + $0x1d0] sm:$0xff]
    %v402 = vld [vmem:[#allocation14 + $0x1d8] sm:$0xff]
    %v403 = vld [vmem:[#allocation14 + $0x1e0] sm:$0xff]
    %v404 = vld [vmem:[#allocation14 + $0x1e8] sm:$0xff]
    %v405 = vld [vmem:[#allocation14 + $0x1f0] sm:$0xff]
    %v406 = vld [vmem:[#allocation14 + $0x1f8] sm:$0xff]
    %v407 = vld [vmem:[#allocation16] sm:$0xf]
    %v408 = vld [vmem:[#allocation17] sm:$0xff]
    %v409 = vld [vmem:[#allocation17 + $0x8] sm:$0xff]
    %v410 = vld [vmem:[#allocation17 + $0x10] sm:$0xff]
    %v411 = vld [vmem:[#allocation17 + $0x18] sm:$0xff]
    %v412 = vld [vmem:[#allocation17 + $0x20] sm:$0xff]
    %v413 = vld [vmem:[#allocation17 + $0x28] sm:$0xff]
    %v414 = vld [vmem:[#allocation17 + $0x30] sm:$0xff]
    %v415 = vld [vmem:[#allocation17 + $0x38] sm:$0xff]
    %v416 = vld [vmem:[#allocation17 + $0x40] sm:$0xff]
    %v417 = vld [vmem:[#allocation17 + $0x48] sm:$0xff]
    %v418 = vld [vmem:[#allocation17 + $0x50] sm:$0xff]
    %v419 = vld [vmem:[#allocation17 + $0x58] sm:$0xff]
    %v420 = vld [vmem:[#allocation17 + $0x60] sm:$0xff]
    %v421 = vld [vmem:[#allocation17 + $0x68] sm:$0xff]
    %v422 = vld [vmem:[#allocation17 + $0x70] sm:$0xff]
    %v423 = vld [vmem:[#allocation17 + $0x78] sm:$0xff]
    %v424 = vld [vmem:[#allocation17 + $0x80] sm:$0xff]
    %v425 = vld [vmem:[#allocation17 + $0x88] sm:$0xff]
    %v426 = vld [vmem:[#allocation17 + $0x90] sm:$0xff]
    %v427 = vld [vmem:[#allocation17 + $0x98] sm:$0xff]
    %v428 = vld [vmem:[#allocation17 + $0xa0] sm:$0xff]
    %v429 = vld [vmem:[#allocation17 + $0xa8] sm:$0xff]
    %v430 = vld [vmem:[#allocation17 + $0xb0] sm:$0xff]
    %v431 = vld [vmem:[#allocation17 + $0xb8] sm:$0xff]
    %v432 = vld [vmem:[#allocation17 + $0xc0] sm:$0xff]
    %v433 = vld [vmem:[#allocation17 + $0xc8] sm:$0xff]
    %v434 = vld [vmem:[#allocation17 + $0xd0] sm:$0xff]
    %v435 = vld [vmem:[#allocation17 + $0xd8] sm:$0xff]
    %v436 = vld [vmem:[#allocation17 + $0xe0] sm:$0xff]
    %v437 = vld [vmem:[#allocation17 + $0xe8] sm:$0xff]
    %v438 = vld [vmem:[#allocation17 + $0xf0] sm:$0xff]
    %v439 = vld [vmem:[#allocation17 + $0xf8] sm:$0xff]
    %v440 = vld [vmem:[#allocation17 + $0x100] sm:$0xff]
    %v441 = vld [vmem:[#allocation17 + $0x108] sm:$0xff]
    %v442 = vld [vmem:[#allocation17 + $0x110] sm:$0xff]
    %v443 = vld [vmem:[#allocation17 + $0x118] sm:$0xff]
    %v444 = vld [vmem:[#allocation17 + $0x120] sm:$0xff]
    %v445 = vld [vmem:[#allocation17 + $0x128] sm:$0xff]
    %v446 = vld [vmem:[#allocation17 + $0x130] sm:$0xff]
    %v447 = vld [vmem:[#allocation17 + $0x138] sm:$0xff]
    %v448 = vld [vmem:[#allocation17 + $0x140] sm:$0xff]
    %v449 = vld [vmem:[#allocation17 + $0x148] sm:$0xff]
    %v450 = vld [vmem:[#allocation17 + $0x150] sm:$0xff]
    %v451 = vld [vmem:[#allocation17 + $0x158] sm:$0xff]
    %v452 = vld [vmem:[#allocation17 + $0x160] sm:$0xff]
    %v453 = vld [vmem:[#allocation17 + $0x168] sm:$0xff]
    %v454 = vld [vmem:[#allocation17 + $0x170] sm:$0xff]
    %v455 = vld [vmem:[#allocation17 + $0x178] sm:$0xff]
    %v456 = vld [vmem:[#allocation17 + $0x180] sm:$0xff]
    %v457 = vld [vmem:[#allocation17 + $0x188] sm:$0xff]
    %v458 = vld [vmem:[#allocation17 + $0x190] sm:$0xff]
    %v459 = vld [vmem:[#allocation17 + $0x198] sm:$0xff]
    %v460 = vld [vmem:[#allocation17 + $0x1a0] sm:$0xff]
    %v461 = vld [vmem:[#allocation17 + $0x1a8] sm:$0xff]
    %v462 = vld [vmem:[#allocation17 + $0x1b0] sm:$0xff]
    %v463 = vld [vmem:[#allocation17 + $0x1b8] sm:$0xff]
    %v464 = vld [vmem:[#allocation17 + $0x1c0] sm:$0xff]
    %v465 = vld [vmem:[#allocation17 + $0x1c8] sm:$0xff]
    %v466 = vld [vmem:[#allocation17 + $0x1d0] sm:$0xff]
    %v467 = vld [vmem:[#allocation17 + $0x1d8] sm:$0xff]
    %v468 = vld [vmem:[#allocation17 + $0x1e0] sm:$0xff]
    %v469 = vld [vmem:[#allocation17 + $0x1e8] sm:$0xff]
    %v470 = vld [vmem:[#allocation17 + $0x1f0] sm:$0xff]
    %v471 = vld [vmem:[#allocation17 + $0x1f8] sm:$0xff]
    %v472 = vld [vmem:[#allocation19] sm:$0x1]
    %v473 = vld [vmem:[#allocation20] sm:$0x1]
    %v474 = vld [vmem:[#allocation22] sm:$0x1]
    %s475 = scalar_lea.vmem [#allocation5], 384
    %v476 = vld [vmem:[%s475] sm:$0xff]
    %v477 = vld [vmem:[%s475 + $0x8] sm:$0xff]
    %v478 = vld [vmem:[%s475 + $0x10] sm:$0xff]
    %v479 = vld [vmem:[%s475 + $0x18] sm:$0xff]
    %v480 = vld [vmem:[%s475 + $0x20] sm:$0xff]
    %v481 = vld [vmem:[%s475 + $0x28] sm:$0xff]
    %v482 = vld [vmem:[%s475 + $0x30] sm:$0xff]
    %v483 = vld [vmem:[%s475 + $0x38] sm:$0xff]
    %v484 = vld [vmem:[%s475 + $0x40] sm:$0xff]
    %v485 = vld [vmem:[%s475 + $0x48] sm:$0xff]
    %v486 = vld [vmem:[%s475 + $0x50] sm:$0xff]
    %v487 = vld [vmem:[%s475 + $0x58] sm:$0xff]
    %v488 = vld [vmem:[%s475 + $0x60] sm:$0xff]
    %v489 = vld [vmem:[%s475 + $0x68] sm:$0xff]
    %v490 = vld [vmem:[%s475 + $0x70] sm:$0xff]
    %v491 = vld [vmem:[%s475 + $0x78] sm:$0xff]
    %v492 = vld [vmem:[%s475 + $0x80] sm:$0xff]
    %v493 = vld [vmem:[%s475 + $0x88] sm:$0xff]
    %v494 = vld [vmem:[%s475 + $0x90] sm:$0xff]
    %v495 = vld [vmem:[%s475 + $0x98] sm:$0xff]
    %v496 = vld [vmem:[%s475 + $0xa0] sm:$0xff]
    %v497 = vld [vmem:[%s475 + $0xa8] sm:$0xff]
    %v498 = vld [vmem:[%s475 + $0xb0] sm:$0xff]
    %v499 = vld [vmem:[%s475 + $0xb8] sm:$0xff]
    %v500 = vld [vmem:[%s475 + $0xc0] sm:$0xff]
    %v501 = vld [vmem:[%s475 + $0xc8] sm:$0xff]
    %v502 = vld [vmem:[%s475 + $0xd0] sm:$0xff]
    %v503 = vld [vmem:[%s475 + $0xd8] sm:$0xff]
    %v504 = vld [vmem:[%s475 + $0xe0] sm:$0xff]
    %v505 = vld [vmem:[%s475 + $0xe8] sm:$0xff]
    %v506 = vld [vmem:[%s475 + $0xf0] sm:$0xff]
    %v507 = vld [vmem:[%s475 + $0xf8] sm:$0xff]
    %v508 = vld [vmem:[%s475 + $0x100] sm:$0xff]
    %v509 = vld [vmem:[%s475 + $0x108] sm:$0xff]
    %v510 = vld [vmem:[%s475 + $0x110] sm:$0xff]
    %v511 = vld [vmem:[%s475 + $0x118] sm:$0xff]
    %v512 = vld [vmem:[%s475 + $0x120] sm:$0xff]
    %v513 = vld [vmem:[%s475 + $0x128] sm:$0xff]
    %v514 = vld [vmem:[%s475 + $0x130] sm:$0xff]
    %v515 = vld [vmem:[%s475 + $0x138] sm:$0xff]
    %v516 = vld [vmem:[%s475 + $0x140] sm:$0xff]
    %v517 = vld [vmem:[%s475 + $0x148] sm:$0xff]
    %v518 = vld [vmem:[%s475 + $0x150] sm:$0xff]
    %v519 = vld [vmem:[%s475 + $0x158] sm:$0xff]
    %v520 = vld [vmem:[%s475 + $0x160] sm:$0xff]
    %v521 = vld [vmem:[%s475 + $0x168] sm:$0xff]
    %v522 = vld [vmem:[%s475 + $0x170] sm:$0xff]
    %v523 = vld [vmem:[%s475 + $0x178] sm:$0xff]
    %s524 = scalar_lea.vmem [#allocation7], 3
    %v525 = vld [vmem:[%s524] sm:$0x7]
    %s526 = scalar_lea.vmem [#allocation8], 128
    %v527 = vld [vmem:[%s526] sm:$0xff]
    %v528 = vld [vmem:[%s526 + $0x8] sm:$0xff]
    %v529 = vld [vmem:[%s526 + $0x10] sm:$0xff]
    %v530 = vld [vmem:[%s526 + $0x18] sm:$0xff]
    %v531 = vld [vmem:[%s526 + $0x20] sm:$0xff]
    %v532 = vld [vmem:[%s526 + $0x28] sm:$0xff]
    %v533 = vld [vmem:[%s526 + $0x30] sm:$0xff]
    %v534 = vld [vmem:[%s526 + $0x38] sm:$0xff]
    %v535 = vld [vmem:[%s526 + $0x40] sm:$0xff]
    %v536 = vld [vmem:[%s526 + $0x48] sm:$0xff]
    %v537 = vld [vmem:[%s526 + $0x50] sm:$0xff]
    %v538 = vld [vmem:[%s526 + $0x58] sm:$0xff]
    %v539 = vld [vmem:[%s526 + $0x60] sm:$0xff]
    %v540 = vld [vmem:[%s526 + $0x68] sm:$0xff]
    %v541 = vld [vmem:[%s526 + $0x70] sm:$0xff]
    %v542 = vld [vmem:[%s526 + $0x78] sm:$0xff]
    %s543 = scalar_lea.vmem [#allocation10], 1
    %v544 = vld [vmem:[%s543] sm:$0x1]
    %s545 = scalar_lea.vmem [#allocation11], 1
    %v546 = vld [vmem:[%s545] sm:$0x1]
    %s547 = scalar_lea.vmem [#allocation13], 1
    %v548 = vld [vmem:[%s547] sm:$0x1]
    %s549 = scalar_lea.vmem [#allocation14], 512
    %v550 = vld [vmem:[%s549] sm:$0xff]
    %v551 = vld [vmem:[%s549 + $0x8] sm:$0xff]
    %v552 = vld [vmem:[%s549 + $0x10] sm:$0xff]
    %v553 = vld [vmem:[%s549 + $0x18] sm:$0xff]
    %v554 = vld [vmem:[%s549 + $0x20] sm:$0xff]
    %v555 = vld [vmem:[%s549 + $0x28] sm:$0xff]
    %v556 = vld [vmem:[%s549 + $0x30] sm:$0xff]
    %v557 = vld [vmem:[%s549 + $0x38] sm:$0xff]
    %v558 = vld [vmem:[%s549 + $0x40] sm:$0xff]
    %v559 = vld [vmem:[%s549 + $0x48] sm:$0xff]
    %v560 = vld [vmem:[%s549 + $0x50] sm:$0xff]
    %v561 = vld [vmem:[%s549 + $0x58] sm:$0xff]
    %v562 = vld [vmem:[%s549 + $0x60] sm:$0xff]
    %v563 = vld [vmem:[%s549 + $0x68] sm:$0xff]
    %v564 = vld [vmem:[%s549 + $0x70] sm:$0xff]
    %v565 = vld [vmem:[%s549 + $0x78] sm:$0xff]
    %v566 = vld [vmem:[%s549 + $0x80] sm:$0xff]
    %v567 = vld [vmem:[%s549 + $0x88] sm:$0xff]
    %v568 = vld [vmem:[%s549 + $0x90] sm:$0xff]
    %v569 = vld [vmem:[%s549 + $0x98] sm:$0xff]
    %v570 = vld [vmem:[%s549 + $0xa0] sm:$0xff]
    %v571 = vld [vmem:[%s549 + $0xa8] sm:$0xff]
    %v572 = vld [vmem:[%s549 + $0xb0] sm:$0xff]
    %v573 = vld [vmem:[%s549 + $0xb8] sm:$0xff]
    %v574 = vld [vmem:[%s549 + $0xc0] sm:$0xff]
    %v575 = vld [vmem:[%s549 + $0xc8] sm:$0xff]
    %v576 = vld [vmem:[%s549 + $0xd0] sm:$0xff]
    %v577 = vld [vmem:[%s549 + $0xd8] sm:$0xff]
    %v578 = vld [vmem:[%s549 + $0xe0] sm:$0xff]
    %v579 = vld [vmem:[%s549 + $0xe8] sm:$0xff]
    %v580 = vld [vmem:[%s549 + $0xf0] sm:$0xff]
    %v581 = vld [vmem:[%s549 + $0xf8] sm:$0xff]
    %v582 = vld [vmem:[%s549 + $0x100] sm:$0xff]
    %v583 = vld [vmem:[%s549 + $0x108] sm:$0xff]
    %v584 = vld [vmem:[%s549 + $0x110] sm:$0xff]
    %v585 = vld [vmem:[%s549 + $0x118] sm:$0xff]
    %v586 = vld [vmem:[%s549 + $0x120] sm:$0xff]
    %v587 = vld [vmem:[%s549 + $0x128] sm:$0xff]
    %v588 = vld [vmem:[%s549 + $0x130] sm:$0xff]
    %v589 = vld [vmem:[%s549 + $0x138] sm:$0xff]
    %v590 = vld [vmem:[%s549 + $0x140] sm:$0xff]
    %v591 = vld [vmem:[%s549 + $0x148] sm:$0xff]
    %v592 = vld [vmem:[%s549 + $0x150] sm:$0xff]
    %v593 = vld [vmem:[%s549 + $0x158] sm:$0xff]
    %v594 = vld [vmem:[%s549 + $0x160] sm:$0xff]
    %v595 = vld [vmem:[%s549 + $0x168] sm:$0xff]
    %v596 = vld [vmem:[%s549 + $0x170] sm:$0xff]
    %v597 = vld [vmem:[%s549 + $0x178] sm:$0xff]
    %v598 = vld [vmem:[%s549 + $0x180] sm:$0xff]
    %v599 = vld [vmem:[%s549 + $0x188] sm:$0xff]
    %v600 = vld [vmem:[%s549 + $0x190] sm:$0xff]
    %v601 = vld [vmem:[%s549 + $0x198] sm:$0xff]
    %v602 = vld [vmem:[%s549 + $0x1a0] sm:$0xff]
    %v603 = vld [vmem:[%s549 + $0x1a8] sm:$0xff]
    %v604 = vld [vmem:[%s549 + $0x1b0] sm:$0xff]
    %v605 = vld [vmem:[%s549 + $0x1b8] sm:$0xff]
    %v606 = vld [vmem:[%s549 + $0x1c0] sm:$0xff]
    %v607 = vld [vmem:[%s549 + $0x1c8] sm:$0xff]
    %v608 = vld [vmem:[%s549 + $0x1d0] sm:$0xff]
    %v609 = vld [vmem:[%s549 + $0x1d8] sm:$0xff]
    %v610 = vld [vmem:[%s549 + $0x1e0] sm:$0xff]
    %v611 = vld [vmem:[%s549 + $0x1e8] sm:$0xff]
    %v612 = vld [vmem:[%s549 + $0x1f0] sm:$0xff]
    %v613 = vld [vmem:[%s549 + $0x1f8] sm:$0xff]
    %s614 = scalar_lea.vmem [#allocation16], 4
    %v615 = vld [vmem:[%s614] sm:$0xf]
    %s616 = scalar_lea.vmem [#allocation17], 512
    %v617 = vld [vmem:[%s616] sm:$0xff]
    %v618 = vld [vmem:[%s616 + $0x8] sm:$0xff]
    %v619 = vld [vmem:[%s616 + $0x10] sm:$0xff]
    %v620 = vld [vmem:[%s616 + $0x18] sm:$0xff]
    %v621 = vld [vmem:[%s616 + $0x20] sm:$0xff]
    %v622 = vld [vmem:[%s616 + $0x28] sm:$0xff]
    %v623 = vld [vmem:[%s616 + $0x30] sm:$0xff]
    %v624 = vld [vmem:[%s616 + $0x38] sm:$0xff]
    %v625 = vld [vmem:[%s616 + $0x40] sm:$0xff]
    %v626 = vld [vmem:[%s616 + $0x48] sm:$0xff]
    %v627 = vld [vmem:[%s616 + $0x50] sm:$0xff]
    %v628 = vld [vmem:[%s616 + $0x58] sm:$0xff]
    %v629 = vld [vmem:[%s616 + $0x60] sm:$0xff]
    %v630 = vld [vmem:[%s616 + $0x68] sm:$0xff]
    %v631 = vld [vmem:[%s616 + $0x70] sm:$0xff]
    %v632 = vld [vmem:[%s616 + $0x78] sm:$0xff]
    %v633 = vld [vmem:[%s616 + $0x80] sm:$0xff]
    %v634 = vld [vmem:[%s616 + $0x88] sm:$0xff]
    %v635 = vld [vmem:[%s616 + $0x90] sm:$0xff]
    %v636 = vld [vmem:[%s616 + $0x98] sm:$0xff]
    %v637 = vld [vmem:[%s616 + $0xa0] sm:$0xff]
    %v638 = vld [vmem:[%s616 + $0xa8] sm:$0xff]
    %v639 = vld [vmem:[%s616 + $0xb0] sm:$0xff]
    %v640 = vld [vmem:[%s616 + $0xb8] sm:$0xff]
    %v641 = vld [vmem:[%s616 + $0xc0] sm:$0xff]
    %v642 = vld [vmem:[%s616 + $0xc8] sm:$0xff]
    %v643 = vld [vmem:[%s616 + $0xd0] sm:$0xff]
    %v644 = vld [vmem:[%s616 + $0xd8] sm:$0xff]
    %v645 = vld [vmem:[%s616 + $0xe0] sm:$0xff]
    %v646 = vld [vmem:[%s616 + $0xe8] sm:$0xff]
    %v647 = vld [vmem:[%s616 + $0xf0] sm:$0xff]
    %v648 = vld [vmem:[%s616 + $0xf8] sm:$0xff]
    %v649 = vld [vmem:[%s616 + $0x100] sm:$0xff]
    %v650 = vld [vmem:[%s616 + $0x108] sm:$0xff]
    %v651 = vld [vmem:[%s616 + $0x110] sm:$0xff]
    %v652 = vld [vmem:[%s616 + $0x118] sm:$0xff]
    %v653 = vld [vmem:[%s616 + $0x120] sm:$0xff]
    %v654 = vld [vmem:[%s616 + $0x128] sm:$0xff]
    %v655 = vld [vmem:[%s616 + $0x130] sm:$0xff]
    %v656 = vld [vmem:[%s616 + $0x138] sm:$0xff]
    %v657 = vld [vmem:[%s616 + $0x140] sm:$0xff]
    %v658 = vld [vmem:[%s616 + $0x148] sm:$0xff]
    %v659 = vld [vmem:[%s616 + $0x150] sm:$0xff]
    %v660 = vld [vmem:[%s616 + $0x158] sm:$0xff]
    %v661 = vld [vmem:[%s616 + $0x160] sm:$0xff]
    %v662 = vld [vmem:[%s616 + $0x168] sm:$0xff]
    %v663 = vld [vmem:[%s616 + $0x170] sm:$0xff]
    %v664 = vld [vmem:[%s616 + $0x178] sm:$0xff]
    %v665 = vld [vmem:[%s616 + $0x180] sm:$0xff]
    %v666 = vld [vmem:[%s616 + $0x188] sm:$0xff]
    %v667 = vld [vmem:[%s616 + $0x190] sm:$0xff]
    %v668 = vld [vmem:[%s616 + $0x198] sm:$0xff]
    %v669 = vld [vmem:[%s616 + $0x1a0] sm:$0xff]
    %v670 = vld [vmem:[%s616 + $0x1a8] sm:$0xff]
    %v671 = vld [vmem:[%s616 + $0x1b0] sm:$0xff]
    %v672 = vld [vmem:[%s616 + $0x1b8] sm:$0xff]
    %v673 = vld [vmem:[%s616 + $0x1c0] sm:$0xff]
    %v674 = vld [vmem:[%s616 + $0x1c8] sm:$0xff]
    %v675 = vld [vmem:[%s616 + $0x1d0] sm:$0xff]
    %v676 = vld [vmem:[%s616 + $0x1d8] sm:$0xff]
    %v677 = vld [vmem:[%s616 + $0x1e0] sm:$0xff]
    %v678 = vld [vmem:[%s616 + $0x1e8] sm:$0xff]
    %v679 = vld [vmem:[%s616 + $0x1f0] sm:$0xff]
    %v680 = vld [vmem:[%s616 + $0x1f8] sm:$0xff]
    %s681 = scalar_lea.vmem [#allocation19], 1
    %v682 = vld [vmem:[%s681] sm:$0x1]
    %s683 = scalar_lea.vmem [#allocation20], 1
    %v684 = vld [vmem:[%s683] sm:$0x1]
    %s685 = scalar_lea.vmem [#allocation22], 1
    %v686 = vld [vmem:[%s685] sm:$0x1]
    %v687 = vld [vmem:[%s0] sm:$0xff]
    %v688 = vld [vmem:[%s0 + $0x8] sm:$0xff]
    %v689 = vld [vmem:[%s0 + $0x10] sm:$0xff]
    %v690 = vld [vmem:[%s0 + $0x18] sm:$0xff]
    %v691 = vld [vmem:[#allocation2] sm:$0x3]
    %v692 = vld [vmem:[%s16] sm:$0xff]
    %v693 = vld [vmem:[%s16 + $0x8] sm:$0xff]
    %v694 = vld [vmem:[%s16 + $0x10] sm:$0xff]
    %v695 = vld [vmem:[%s16 + $0x18] sm:$0xff]
    %v696 = vld [vmem:[%s16 + $0x20] sm:$0xff]
    %v697 = vld [vmem:[%s16 + $0x28] sm:$0xff]
    %v698 = vld [vmem:[%s16 + $0x30] sm:$0xff]
    %v699 = vld [vmem:[%s16 + $0x38] sm:$0xff]
    %v700 = vld [vmem:[%s16 + $0x40] sm:$0xff]
    %v701 = vld [vmem:[%s16 + $0x48] sm:$0xff]
    %v702 = vld [vmem:[%s16 + $0x50] sm:$0xff]
    %v703 = vld [vmem:[%s16 + $0x58] sm:$0xff]
    %v704 = vld [vmem:[%s16 + $0x60] sm:$0xff]
    %v705 = vld [vmem:[%s16 + $0x68] sm:$0xff]
    %v706 = vld [vmem:[%s16 + $0x70] sm:$0xff]
    %v707 = vld [vmem:[%s16 + $0x78] sm:$0xff]
    %v708 = vld [vmem:[#allocation26] sm:$0x1]
    %v709 = vld [vmem:[%s18] sm:$0xff]
    %v710 = vld [vmem:[%s18 + $0x8] sm:$0xff]
    %v711 = vld [vmem:[%s18 + $0x10] sm:$0xff]
    %v712 = vld [vmem:[%s18 + $0x18] sm:$0xff]
    %v713 = vld [vmem:[%s18 + $0x20] sm:$0xff]
    %v714 = vld [vmem:[%s18 + $0x28] sm:$0xff]
    %v715 = vld [vmem:[%s18 + $0x30] sm:$0xff]
    %v716 = vld [vmem:[%s18 + $0x38] sm:$0xff]
    %v717 = vld [vmem:[%s18 + $0x40] sm:$0xff]
    %v718 = vld [vmem:[%s18 + $0x48] sm:$0xff]
    %v719 = vld [vmem:[%s18 + $0x50] sm:$0xff]
    %v720 = vld [vmem:[%s18 + $0x58] sm:$0xff]
    %v721 = vld [vmem:[%s18 + $0x60] sm:$0xff]
    %v722 = vld [vmem:[%s18 + $0x68] sm:$0xff]
    %v723 = vld [vmem:[%s18 + $0x70] sm:$0xff]
    %v724 = vld [vmem:[%s18 + $0x78] sm:$0xff]
    %v725 = vld [vmem:[%s19] sm:$0x1]
    %v726 = vld [vmem:[#allocation23] sm:$0x1]
    %v727 = vld [vmem:[#allocation25] sm:$0x1]
    %728 = vadd.xlane.f32.xlu0 %v687
    %v729 = vpop.xlane.xlu0 %728
    %730 = vadd.xlane.f32.xlu0 %v688
    %v731 = vpop.xlane.xlu0 %730
    %732 = vadd.xlane.f32.xlu0 %v689
    %v733 = vpop.xlane.xlu0 %732
    %734 = vadd.xlane.f32.xlu0 %v690
    %v735 = vpop.xlane.xlu0 %734
    %v736 = vrcp.pop 128.0
    %v737 = vmul.f32 %v729, %v736
    %v738 = vmul.f32 %v731, %v736
    %v739 = vmul.f32 %v733, %v736
    %v740 = vmul.f32 %v735, %v736
    %v741 = vsub.f32 %v687, %v737
    %v742 = vsub.f32 %v688, %v738
    %v743 = vsub.f32 %v689, %v739
    %v744 = vsub.f32 %v690, %v740
    %v745 = vmul.f32 %v741, %v741
    %v746 = vmul.f32 %v742, %v742
    %v747 = vmul.f32 %v743, %v743
    %v748 = vmul.f32 %v744, %v744
    %749 = vadd.xlane.f32.xlu0 %v745
    %v750 = vpop.xlane.xlu0 %749
    %751 = vadd.xlane.f32.xlu0 %v746
    %v752 = vpop.xlane.xlu0 %751
    %753 = vadd.xlane.f32.xlu0 %v747
    %v754 = vpop.xlane.xlu0 %753
    %755 = vadd.xlane.f32.xlu0 %v748
    %v756 = vpop.xlane.xlu0 %755
    %v757 = vmul.f32 %v750, %v736
    %v758 = vmul.f32 %v752, %v736
    %v759 = vmul.f32 %v754, %v736
    %v760 = vmul.f32 %v756, %v736
    %v761 = vadd.f32 %v757, 1e-12
    %v762 = vadd.f32 %v758, 1e-12
    %v763 = vadd.f32 %v759, 1e-12
    %v764 = vadd.f32 %v760, 1e-12
    %v765 = vrsqrt.pop %v761
    %v766 = vrsqrt.pop %v762
    %v767 = vrsqrt.pop %v763
    %v768 = vrsqrt.pop %v764
    %v769 = vmul.f32 %v741, %v765
    %v770 = vmul.f32 %v742, %v766
    %v771 = vmul.f32 %v743, %v767
    %v772 = vmul.f32 %v744, %v768
    %v774 = vlaneseq
    %v775 = vshrl.u32 %v774, 7
    %v776 = vsub.s32 0, %v775
    %v777 = vrot.slane %v726, %v776
    %v779 = vmul.f32 %v769, %v777
    %v780 = vmul.f32 %v770, %v777
    %v781 = vmul.f32 %v771, %v777
    %v782 = vmul.f32 %v772, %v777
    %v784 = vlaneseq
    %v785 = vshrl.u32 %v784, 7
    %v786 = vsub.s32 0, %v785
    %v787 = vrot.slane %v727, %v786
    %v789 = vadd.f32 %v779, %v787
    %v790 = vadd.f32 %v780, %v787
    %v791 = vadd.f32 %v781, %v787
    %v792 = vadd.f32 %v782, %v787
    %v794 = vlaneseq
    %v795 = vshrl.u32 %v794, 7
    %v796 = vsub.s32 0, %v795
    %v797 = vrot.slane %v323, %v796
    %v798 = vlaneseq
    %v799 = vshrl.u32 %v798, 7
    %v800 = vsub.s32 1, %v799
    %v801 = vrot.slane %v323, %v800
    %v802 = vlaneseq
    %v803 = vshrl.u32 %v802, 7
    %v804 = vsub.s32 2, %v803
    %v805 = vrot.slane %v323, %v804
    %809 = vmatprep.subr.mxu0 %v321
    %810 = vmatpush1.msra.mxu0 %v320
    %811 = vmatprep.subr.mxu0 %v318
    %812 = vmatpush1.msra.mxu0 %v317
    %813 = vmatprep.subr.mxu0 %v315
    %814 = vmatpush1.msra.mxu0 %v314
    %815 = vmatprep.subr.mxu0 %v312
    %816 = vmatpush1.msra.mxu0 %v311
    %817 = vmatprep.subr.mxu0 %v309
    %818 = vmatpush1.msra.mxu0 %v308
    %819 = vmatprep.subr.mxu0 %v306
    %820 = vmatpush1.msra.mxu0 %v305
    %821 = vmatprep.subr.mxu0 %v303
    %822 = vmatpush1.msra.mxu0 %v302
    %823 = vmatprep.subr.mxu0 %v300
    %824 = vmatpush1.msra.mxu0 %v299
    %825 = vmatprep.subr.mxu0 %v297
    %826 = vmatpush1.msra.mxu0 %v296
    %827 = vmatprep.subr.mxu0 %v294
    %828 = vmatpush1.msra.mxu0 %v293
    %829 = vmatprep.subr.mxu0 %v291
    %830 = vmatpush1.msra.mxu0 %v290
    %831 = vmatprep.subr.mxu0 %v288
    %832 = vmatpush1.msra.mxu0 %v287
    %833 = vmatprep.subr.mxu0 %v285
    %834 = vmatpush1.msra.mxu0 %v284
    %835 = vmatprep.subr.mxu0 %v282
    %836 = vmatpush1.msra.mxu0 %v281
    %837 = vmatprep.subr.mxu0 %v279
    %838 = vmatpush1.msra.mxu0 %v278
    %839 = vmatprep.subr.mxu0 %v276
    %840 = vmatpush1.msra.mxu0 %v275
    %841 = vmatprep.subr.mxu0 0.0
    %842 = vmatpush2.msra.mxu0 0.0
    %843 = vmatprep.subr.mxu0 0.0
    %844 = vmatpush2.msra.mxu0 0.0
    %845 = vmatprep.subr.mxu0 0.0
    %846 = vmatpush2.msra.mxu0 0.0
    %847 = vmatprep.subr.mxu0 0.0
    %848 = vmatpush2.msra.mxu0 0.0
    %849 = vmatprep.subr.mxu0 0.0
    %850 = vmatpush2.msra.mxu0 0.0
    %851 = vmatprep.subr.mxu0 0.0
    %852 = vmatpush2.msra.mxu0 0.0
    %853 = vmatprep.subr.mxu0 0.0
    %854 = vmatpush2.msra.mxu0 0.0
    %855 = vmatprep.subr.mxu0 0.0
    %856 = vmatpush2.msra.mxu0 0.0
    %857 = vmatprep.subr.mxu0 0.0
    %858 = vmatpush2.msra.mxu0 0.0
    %859 = vmatprep.subr.mxu0 0.0
    %860 = vmatpush2.msra.mxu0 0.0
    %861 = vmatprep.subr.mxu0 0.0
    %862 = vmatpush2.msra.mxu0 0.0
    %863 = vmatprep.subr.mxu0 0.0
    %864 = vmatpush2.msra.mxu0 0.0
    %865 = vmatprep.subr.mxu0 0.0
    %866 = vmatpush2.msra.mxu0 0.0
    %867 = vmatprep.subr.mxu0 0.0
    %868 = vmatpush2.msra.mxu0 0.0
    %869 = vmatprep.subr.mxu0 0.0
    %870 = vmatpush2.msra.mxu0 0.0
    %871 = vmatprep.subr.mxu0 0.0
    %872 = vmatpush2.msra.mxu0 0.0
    %873 = vmatprep.mubr.f32.mxu0 0.0
    %874 = vmatmul.mubr.f32.gmra.mxu0 %v789
    %v875 = vpop.f32.mrf.mxu0
    %v876 = vadd.f32 %v797, %v875
    %v877 = vpop.f32.mrf.mxu0
    %v878 = vadd.f32 %v801, %v877
    %879 = vmatprep.mubr.f32.mxu0 0.0
    %880 = vmatmul.mubr.f32.gmra.mxu0 %v790
    %v881 = vpop.f32.mrf.mxu0
    %v882 = vadd.f32 %v797, %v881
    %v883 = vpop.f32.mrf.mxu0
    %v884 = vadd.f32 %v801, %v883
    %885 = vmatprep.mubr.f32.mxu0 0.0
    %886 = vmatmul.mubr.f32.gmra.mxu0 %v791
    %v887 = vpop.f32.mrf.mxu0
    %v888 = vadd.f32 %v797, %v887
    %v889 = vpop.f32.mrf.mxu0
    %v890 = vadd.f32 %v801, %v889
    %891 = vmatprep.mubr.f32.mxu0 0.0
    %892 = vmatmul.mubr.f32.gmra.mxu0 %v792
    %v893 = vpop.f32.mrf.mxu0
    %v894 = vadd.f32 %v797, %v893
    %v895 = vpop.f32.mrf.mxu0
    %v896 = vadd.f32 %v801, %v895
    %897 = vdwg.mxu0
    %898 = vmatprep.subr.mxu0 0.0
    %899 = vmatpush1.msra.mxu0 %v322
    %900 = vmatprep.subr.mxu0 0.0
    %901 = vmatpush1.msra.mxu0 %v319
    %902 = vmatprep.subr.mxu0 0.0
    %903 = vmatpush1.msra.mxu0 %v316
    %904 = vmatprep.subr.mxu0 0.0
    %905 = vmatpush1.msra.mxu0 %v313
    %906 = vmatprep.subr.mxu0 0.0
    %907 = vmatpush1.msra.mxu0 %v310
    %908 = vmatprep.subr.mxu0 0.0
    %909 = vmatpush1.msra.mxu0 %v307
    %910 = vmatprep.subr.mxu0 0.0
    %911 = vmatpush1.msra.mxu0 %v304
    %912 = vmatprep.subr.mxu0 0.0
    %913 = vmatpush1.msra.mxu0 %v301
    %914 = vmatprep.subr.mxu0 0.0
    %915 = vmatpush1.msra.mxu0 %v298
    %916 = vmatprep.subr.mxu0 0.0
    %917 = vmatpush1.msra.mxu0 %v295
    %918 = vmatprep.subr.mxu0 0.0
    %919 = vmatpush1.msra.mxu0 %v292
    %920 = vmatprep.subr.mxu0 0.0
    %921 = vmatpush1.msra.mxu0 %v289
    %922 = vmatprep.subr.mxu0 0.0
    %923 = vmatpush1.msra.mxu0 %v286
    %924 = vmatprep.subr.mxu0 0.0
    %925 = vmatpush1.msra.mxu0 %v283
    %926 = vmatprep.subr.mxu0 0.0
    %927 = vmatpush1.msra.mxu0 %v280
    %928 = vmatprep.subr.mxu0 0.0
    %929 = vmatpush1.msra.mxu0 %v277
    %930 = vmatprep.subr.mxu0 0.0
    %931 = vmatpush2.msra.mxu0 0.0
    %932 = vmatprep.subr.mxu0 0.0
    %933 = vmatpush2.msra.mxu0 0.0
    %934 = vmatprep.subr.mxu0 0.0
    %935 = vmatpush2.msra.mxu0 0.0
    %936 = vmatprep.subr.mxu0 0.0
    %937 = vmatpush2.msra.mxu0 0.0
    %938 = vmatprep.subr.mxu0 0.0
    %939 = vmatpush2.msra.mxu0 0.0
    %940 = vmatprep.subr.mxu0 0.0
    %941 = vmatpush2.msra.mxu0 0.0
    %942 = vmatprep.subr.mxu0 0.0
    %943 = vmatpush2.msra.mxu0 0.0
    %944 = vmatprep.subr.mxu0 0.0
    %945 = vmatpush2.msra.mxu0 0.0
    %946 = vmatprep.subr.mxu0 0.0
    %947 = vmatpush2.msra.mxu0 0.0
    %948 = vmatprep.subr.mxu0 0.0
    %949 = vmatpush2.msra.mxu0 0.0
    %950 = vmatprep.subr.mxu0 0.0
    %951 = vmatpush2.msra.mxu0 0.0
    %952 = vmatprep.subr.mxu0 0.0
    %953 = vmatpush2.msra.mxu0 0.0
    %954 = vmatprep.subr.mxu0 0.0
    %955 = vmatpush2.msra.mxu0 0.0
    %956 = vmatprep.subr.mxu0 0.0
    %957 = vmatpush2.msra.mxu0 0.0
    %958 = vmatprep.subr.mxu0 0.0
    %959 = vmatpush2.msra.mxu0 0.0
    %960 = vmatprep.subr.mxu0 0.0
    %961 = vmatpush2.msra.mxu0 0.0
    %962 = vmatprep.mubr.f32.mxu0 0.0
    %963 = vmatmul.mubr.f32.gmra.mxu0 %v789
    %v964 = vpop.f32.mrf.mxu0
    %v965 = vadd.f32 %v805, %v964
    %v966 = vpop.f32.mrf.mxu0
    %967 = vmatprep.mubr.f32.mxu0 0.0
    %968 = vmatmul.mubr.f32.gmra.mxu0 %v790
    %v969 = vpop.f32.mrf.mxu0
    %v970 = vadd.f32 %v805, %v969
    %v971 = vpop.f32.mrf.mxu0
    %972 = vmatprep.mubr.f32.mxu0 0.0
    %973 = vmatmul.mubr.f32.gmra.mxu0 %v791
    %v974 = vpop.f32.mrf.mxu0
    %v975 = vadd.f32 %v805, %v974
    %v976 = vpop.f32.mrf.mxu0
    %977 = vmatprep.mubr.f32.mxu0 0.0
    %978 = vmatmul.mubr.f32.gmra.mxu0 %v792
    %v979 = vpop.f32.mrf.mxu0
    %v980 = vadd.f32 %v805, %v979
    %v981 = vpop.f32.mrf.mxu0
    %982 = vdwg.mxu0
    %vm983 = vcmask 523264
    %v985 = vsel %vm983, %v876, 0
    %v988 = vsel %vm983, %v882, 0
    %v991 = vsel %vm983, %v878, 0
    %v994 = vsel %vm983, %v884, 0
    %996 = vmatprep.subr.mxu0 0.0
    %997 = vmatpush1.xpose.msra.mxu0 0.0
    %998 = vmatprep.subr.mxu0 0.0
    %999 = vmatpush1.xpose.msra.mxu0 0.0
    %1000 = vmatprep.subr.mxu0 0.0
    %1001 = vmatpush1.xpose.msra.mxu0 0.0
    %1002 = vmatprep.subr.mxu0 0.0
    %1003 = vmatpush1.xpose.msra.mxu0 0.0
    %1004 = vmatprep.subr.mxu0 0.0
    %1005 = vmatpush1.xpose.msra.mxu0 0.0
    %1006 = vmatprep.subr.mxu0 0.0
    %1007 = vmatpush1.xpose.msra.mxu0 0.0
    %1008 = vmatprep.subr.mxu0 0.0
    %1009 = vmatpush1.xpose.msra.mxu0 0.0
    %1010 = vmatprep.subr.mxu0 0.0
    %1011 = vmatpush1.xpose.msra.mxu0 0.0
    %1012 = vmatprep.subr.mxu0 0.0
    %1013 = vmatpush1.xpose.msra.mxu0 0.0
    %1014 = vmatprep.subr.mxu0 0.0
    %1015 = vmatpush1.xpose.msra.mxu0 0.0
    %1016 = vmatprep.subr.mxu0 0.0
    %1017 = vmatpush1.xpose.msra.mxu0 0.0
    %1018 = vmatprep.subr.mxu0 0.0
    %1019 = vmatpush1.xpose.msra.mxu0 0.0
    %1020 = vmatprep.subr.mxu0 0.0
    %1021 = vmatpush1.xpose.msra.mxu0 0.0
    %1022 = vmatprep.subr.mxu0 0.0
    %1023 = vmatpush1.xpose.msra.mxu0 0.0
    %1024 = vmatprep.subr.mxu0 0.0
    %1025 = vmatpush1.xpose.msra.mxu0 %v994
    %1026 = vmatprep.subr.mxu0 0.0
    %1027 = vmatpush1.xpose.msra.mxu0 %v991
    %1028 = vmatprep.subr.mxu0 0.0
    %1029 = vmatpush2.xpose.msra.mxu0 0.0
    %1030 = vmatprep.subr.mxu0 0.0
    %1031 = vmatpush2.xpose.msra.mxu0 0.0
    %1032 = vmatprep.subr.mxu0 0.0
    %1033 = vmatpush2.xpose.msra.mxu0 0.0
    %1034 = vmatprep.subr.mxu0 0.0
    %1035 = vmatpush2.xpose.msra.mxu0 0.0
    %1036 = vmatprep.subr.mxu0 0.0
    %1037 = vmatpush2.xpose.msra.mxu0 0.0
    %1038 = vmatprep.subr.mxu0 0.0
    %1039 = vmatpush2.xpose.msra.mxu0 0.0
    %1040 = vmatprep.subr.mxu0 0.0
    %1041 = vmatpush2.xpose.msra.mxu0 0.0
    %1042 = vmatprep.subr.mxu0 0.0
    %1043 = vmatpush2.xpose.msra.mxu0 0.0
    %1044 = vmatprep.subr.mxu0 0.0
    %1045 = vmatpush2.xpose.msra.mxu0 0.0
    %1046 = vmatprep.subr.mxu0 0.0
    %1047 = vmatpush2.xpose.msra.mxu0 0.0
    %1048 = vmatprep.subr.mxu0 0.0
    %1049 = vmatpush2.xpose.msra.mxu0 0.0
    %1050 = vmatprep.subr.mxu0 0.0
    %1051 = vmatpush2.xpose.msra.mxu0 0.0
    %1052 = vmatprep.subr.mxu0 0.0
    %1053 = vmatpush2.xpose.msra.mxu0 0.0
    %1054 = vmatprep.subr.mxu0 0.0
    %1055 = vmatpush2.xpose.msra.mxu0 0.0
    %1056 = vmatprep.subr.mxu0 0.0
    %1057 = vmatpush2.xpose.msra.mxu0 0.0
    %1058 = vmatprep.subr.mxu0 0.0
    %1059 = vmatpush2.xpose.msra.mxu0 0.0
    %1060 = vmatprep.mubr.f32.mxu0 0.0
    %1061 = vmatmul.mubr.f32.gmra.mxu0 %v985
    %v1062 = vpop.f32.mrf.mxu0
    %v1063 = vadd.f32 0.0, %v1062
    %v1064 = vpop.f32.mrf.mxu0
    %1065 = vmatprep.mubr.f32.mxu0 0.0
    %1066 = vmatmul.mubr.f32.gmra.mxu0 %v988
    %v1067 = vpop.f32.mrf.mxu0
    %v1068 = vadd.f32 0.0, %v1067
    %v1069 = vpop.f32.mrf.mxu0
    %1070 = vdwg.mxu0
    %v1071 = vmul.f32 %v1063, 0.125
    %v1072 = vmul.f32 %v1068, 0.125
    %v1073 = vlaneseq
    %v1074 = vshrl.u32 %v1073, 7
    %v1075 = vsub.s32 0, %v1074
    %v1076 = vrot.slane %v691, %v1075
    %v1077 = vadd.f32 %v1071, %v1076
    %v1078 = vadd.f32 %v1072, %v1076
    %vm1079 = vcmask 130048
    %v1080 = vsel %vm1079, %v1077, -inf
    %1081 = vmax.xlane.f32.xlu0 %v1080
    %v1082 = vpop.xlane.xlu0 %1081
    %v1083 = vsel %vm1079, %v1078, -inf
    %1084 = vmax.xlane.f32.xlu0 %v1083
    %v1085 = vpop.xlane.xlu0 %1084
    %v1086 = vsub.f32 %v1077, %v1082
    %v1087 = vsub.f32 %v1078, %v1085
    %v1088 = vmul.f32 %v1086, 1.442695
    %v1089 = vpow.pop %v1088
    %v1090 = vmul.f32 %v1087, 1.442695
    %v1091 = vpow.pop %v1090
    %v1092 = vsel %vm1079, %v1089, 0.0
    %1093 = vadd.xlane.f32.xlu0 %v1092
    %v1094 = vpop.xlane.xlu0 %1093
    %v1095 = vsel %vm1079, %v1091, 0.0
    %1096 = vadd.xlane.f32.xlu0 %v1095
    %v1097 = vpop.xlane.xlu0 %1096
    %v1098 = vrcp.pop %v1094
    %v1099 = vmul.f32 %v1089, %v1098
    %v1100 = vrcp.pop %v1097
    %v1101 = vmul.f32 %v1091, %v1100
    %v1103 = vsel %vm1079, %v1099, 0
    %v1106 = vsel %vm1079, %v1101, 0
    %1108 = vmatprep.subr.mxu0 0.0
    %1109 = vmatpush1.msra.mxu0 0.0
    %1110 = vmatprep.subr.mxu0 0.0
    %1111 = vmatpush1.msra.mxu0 0.0
    %1112 = vmatprep.subr.mxu0 0.0
    %1113 = vmatpush1.msra.mxu0 0.0
    %1114 = vmatprep.subr.mxu0 0.0
    %1115 = vmatpush1.msra.mxu0 0.0
    %1116 = vmatprep.subr.mxu0 0.0
    %1117 = vmatpush1.msra.mxu0 0.0
    %1118 = vmatprep.subr.mxu0 0.0
    %1119 = vmatpush1.msra.mxu0 0.0
    %1120 = vmatprep.subr.mxu0 0.0
    %1121 = vmatpush1.msra.mxu0 0.0
    %1122 = vmatprep.subr.mxu0 0.0
    %1123 = vmatpush1.msra.mxu0 0.0
    %1124 = vmatprep.subr.mxu0 0.0
    %1125 = vmatpush1.msra.mxu0 0.0
    %1126 = vmatprep.subr.mxu0 0.0
    %1127 = vmatpush1.msra.mxu0 0.0
    %1128 = vmatprep.subr.mxu0 0.0
    %1129 = vmatpush1.msra.mxu0 0.0
    %1130 = vmatprep.subr.mxu0 0.0
    %1131 = vmatpush1.msra.mxu0 0.0
    %1132 = vmatprep.subr.mxu0 0.0
    %1133 = vmatpush1.msra.mxu0 0.0
    %1134 = vmatprep.subr.mxu0 0.0
    %1135 = vmatpush1.msra.mxu0 0.0
    %1136 = vmatprep.subr.mxu0 0.0
    %1137 = vmatpush1.msra.mxu0 %v970
    %1138 = vmatprep.subr.mxu0 0.0
    %1139 = vmatpush1.msra.mxu0 %v965
    %1140 = vmatprep.subr.mxu0 0.0
    %1141 = vmatpush2.msra.mxu0 0.0
    %1142 = vmatprep.subr.mxu0 0.0
    %1143 = vmatpush2.msra.mxu0 0.0
    %1144 = vmatprep.subr.mxu0 0.0
    %1145 = vmatpush2.msra.mxu0 0.0
    %1146 = vmatprep.subr.mxu0 0.0
    %1147 = vmatpush2.msra.mxu0 0.0
    %1148 = vmatprep.subr.mxu0 0.0
    %1149 = vmatpush2.msra.mxu0 0.0
    %1150 = vmatprep.subr.mxu0 0.0
    %1151 = vmatpush2.msra.mxu0 0.0
    %1152 = vmatprep.subr.mxu0 0.0
    %1153 = vmatpush2.msra.mxu0 0.0
    %1154 = vmatprep.subr.mxu0 0.0
    %1155 = vmatpush2.msra.mxu0 0.0
    %1156 = vmatprep.subr.mxu0 0.0
    %1157 = vmatpush2.msra.mxu0 0.0
    %1158 = vmatprep.subr.mxu0 0.0
    %1159 = vmatpush2.msra.mxu0 0.0
    %1160 = vmatprep.subr.mxu0 0.0
    %1161 = vmatpush2.msra.mxu0 0.0
    %1162 = vmatprep.subr.mxu0 0.0
    %1163 = vmatpush2.msra.mxu0 0.0
    %1164 = vmatprep.subr.mxu0 0.0
    %1165 = vmatpush2.msra.mxu0 0.0
    %1166 = vmatprep.subr.mxu0 0.0
    %1167 = vmatpush2.msra.mxu0 0.0
    %1168 = vmatprep.subr.mxu0 0.0
    %1169 = vmatpush2.msra.mxu0 0.0
    %1170 = vmatprep.subr.mxu0 0.0
    %1171 = vmatpush2.msra.mxu0 0.0
    %1172 = vmatprep.mubr.f32.mxu0 0.0
    %1173 = vmatmul.mubr.f32.gmra.mxu0 %v1103
    %v1174 = vpop.f32.mrf.mxu0
    %v1175 = vadd.f32 0.0, %v1174
    %v1176 = vpop.f32.mrf.mxu0
    %1177 = vmatprep.mubr.f32.mxu0 0.0
    %1178 = vmatmul.mubr.f32.gmra.mxu0 %v1106
    %v1179 = vpop.f32.mrf.mxu0
    %v1180 = vadd.f32 0.0, %v1179
    %v1181 = vpop.f32.mrf.mxu0
    %1182 = vdwg.mxu0
    %1183 = vrot.lane.b32.xlu0 %v876, 64
    %v1184 = vpop.permute.xlu0 %1183
    %1185 = vrot.lane.b32.xlu0 %v882, 64
    %v1186 = vpop.permute.xlu0 %1185
    %1187 = vrot.lane.b32.xlu0 %v878, 64
    %v1188 = vpop.permute.xlu0 %1187
    %1189 = vrot.lane.b32.xlu0 %v884, 64
    %v1190 = vpop.permute.xlu0 %1189
    %v1191 = vsel %vm983, %v1184, 0
    %v1193 = vsel %vm983, %v1186, 0
    %v1195 = vsel %vm983, %v1188, 0
    %v1197 = vsel %vm983, %v1190, 0
    %1199 = vmatprep.subr.mxu0 0.0
    %1200 = vmatpush1.xpose.msra.mxu0 0.0
    %1201 = vmatprep.subr.mxu0 0.0
    %1202 = vmatpush1.xpose.msra.mxu0 0.0
    %1203 = vmatprep.subr.mxu0 0.0
    %1204 = vmatpush1.xpose.msra.mxu0 0.0
    %1205 = vmatprep.subr.mxu0 0.0
    %1206 = vmatpush1.xpose.msra.mxu0 0.0
    %1207 = vmatprep.subr.mxu0 0.0
    %1208 = vmatpush1.xpose.msra.mxu0 0.0
    %1209 = vmatprep.subr.mxu0 0.0
    %1210 = vmatpush1.xpose.msra.mxu0 0.0
    %1211 = vmatprep.subr.mxu0 0.0
    %1212 = vmatpush1.xpose.msra.mxu0 0.0
    %1213 = vmatprep.subr.mxu0 0.0
    %1214 = vmatpush1.xpose.msra.mxu0 0.0
    %1215 = vmatprep.subr.mxu0 0.0
    %1216 = vmatpush1.xpose.msra.mxu0 0.0
    %1217 = vmatprep.subr.mxu0 0.0
    %1218 = vmatpush1.xpose.msra.mxu0 0.0
    %1219 = vmatprep.subr.mxu0 0.0
    %1220 = vmatpush1.xpose.msra.mxu0 0.0
    %1221 = vmatprep.subr.mxu0 0.0
    %1222 = vmatpush1.xpose.msra.mxu0 0.0
    %1223 = vmatprep.subr.mxu0 0.0
    %1224 = vmatpush1.xpose.msra.mxu0 0.0
    %1225 = vmatprep.subr.mxu0 0.0
    %1226 = vmatpush1.xpose.msra.mxu0 0.0
    %1227 = vmatprep.subr.mxu0 0.0
    %1228 = vmatpush1.xpose.msra.mxu0 %v1197
    %1229 = vmatprep.subr.mxu0 0.0
    %1230 = vmatpush1.xpose.msra.mxu0 %v1195
    %1231 = vmatprep.subr.mxu0 0.0
    %1232 = vmatpush2.xpose.msra.mxu0 0.0
    %1233 = vmatprep.subr.mxu0 0.0
    %1234 = vmatpush2.xpose.msra.mxu0 0.0
    %1235 = vmatprep.subr.mxu0 0.0
    %1236 = vmatpush2.xpose.msra.mxu0 0.0
    %1237 = vmatprep.subr.mxu0 0.0
    %1238 = vmatpush2.xpose.msra.mxu0 0.0
    %1239 = vmatprep.subr.mxu0 0.0
    %1240 = vmatpush2.xpose.msra.mxu0 0.0
    %1241 = vmatprep.subr.mxu0 0.0
    %1242 = vmatpush2.xpose.msra.mxu0 0.0
    %1243 = vmatprep.subr.mxu0 0.0
    %1244 = vmatpush2.xpose.msra.mxu0 0.0
    %1245 = vmatprep.subr.mxu0 0.0
    %1246 = vmatpush2.xpose.msra.mxu0 0.0
    %1247 = vmatprep.subr.mxu0 0.0
    %1248 = vmatpush2.xpose.msra.mxu0 0.0
    %1249 = vmatprep.subr.mxu0 0.0
    %1250 = vmatpush2.xpose.msra.mxu0 0.0
    %1251 = vmatprep.subr.mxu0 0.0
    %1252 = vmatpush2.xpose.msra.mxu0 0.0
    %1253 = vmatprep.subr.mxu0 0.0
    %1254 = vmatpush2.xpose.msra.mxu0 0.0
    %1255 = vmatprep.subr.mxu0 0.0
    %1256 = vmatpush2.xpose.msra.mxu0 0.0
    %1257 = vmatprep.subr.mxu0 0.0
    %1258 = vmatpush2.xpose.msra.mxu0 0.0
    %1259 = vmatprep.subr.mxu0 0.0
    %1260 = vmatpush2.xpose.msra.mxu0 0.0
    %1261 = vmatprep.subr.mxu0 0.0
    %1262 = vmatpush2.xpose.msra.mxu0 0.0
    %1263 = vmatprep.mubr.f32.mxu0 0.0
    %1264 = vmatmul.mubr.f32.gmra.mxu0 %v1191
    %v1265 = vpop.f32.mrf.mxu0
    %v1266 = vadd.f32 0.0, %v1265
    %v1267 = vpop.f32.mrf.mxu0
    %1268 = vmatprep.mubr.f32.mxu0 0.0
    %1269 = vmatmul.mubr.f32.gmra.mxu0 %v1193
    %v1270 = vpop.f32.mrf.mxu0
    %v1271 = vadd.f32 0.0, %v1270
    %v1272 = vpop.f32.mrf.mxu0
    %1273 = vdwg.mxu0
    %v1274 = vmul.f32 %v1266, 0.125
    %v1275 = vmul.f32 %v1271, 0.125
    %v1276 = vadd.f32 %v1274, %v1076
    %v1277 = vadd.f32 %v1275, %v1076
    %v1278 = vsel %vm1079, %v1276, -inf
    %1279 = vmax.xlane.f32.xlu0 %v1278
    %v1280 = vpop.xlane.xlu0 %1279
    %v1281 = vsel %vm1079, %v1277, -inf
    %1282 = vmax.xlane.f32.xlu0 %v1281
    %v1283 = vpop.xlane.xlu0 %1282
    %v1284 = vsub.f32 %v1276, %v1280
    %v1285 = vsub.f32 %v1277, %v1283
    %v1286 = vmul.f32 %v1284, 1.442695
    %v1287 = vpow.pop %v1286
    %v1288 = vmul.f32 %v1285, 1.442695
    %v1289 = vpow.pop %v1288
    %v1290 = vsel %vm1079, %v1287, 0.0
    %1291 = vadd.xlane.f32.xlu0 %v1290
    %v1292 = vpop.xlane.xlu0 %1291
    %v1293 = vsel %vm1079, %v1289, 0.0
    %1294 = vadd.xlane.f32.xlu0 %v1293
    %v1295 = vpop.xlane.xlu0 %1294
    %v1296 = vrcp.pop %v1292
    %v1297 = vmul.f32 %v1287, %v1296
    %v1298 = vrcp.pop %v1295
    %v1299 = vmul.f32 %v1289, %v1298
    %1302 = vrot.lane.b32.xlu0 %v965, 64
    %v1303 = vpop.permute.xlu0 %1302
    %1304 = vrot.lane.b32.xlu0 %v970, 64
    %v1305 = vpop.permute.xlu0 %1304
    %v1309 = vsel %vm1079, %v1297, 0
    %v1312 = vsel %vm1079, %v1299, 0
    %1314 = vmatprep.subr.mxu0 0.0
    %1315 = vmatpush1.msra.mxu0 0.0
    %1316 = vmatprep.subr.mxu0 0.0
    %1317 = vmatpush1.msra.mxu0 0.0
    %1318 = vmatprep.subr.mxu0 0.0
    %1319 = vmatpush1.msra.mxu0 0.0
    %1320 = vmatprep.subr.mxu0 0.0
    %1321 = vmatpush1.msra.mxu0 0.0
    %1322 = vmatprep.subr.mxu0 0.0
    %1323 = vmatpush1.msra.mxu0 0.0
    %1324 = vmatprep.subr.mxu0 0.0
    %1325 = vmatpush1.msra.mxu0 0.0
    %1326 = vmatprep.subr.mxu0 0.0
    %1327 = vmatpush1.msra.mxu0 0.0
    %1328 = vmatprep.subr.mxu0 0.0
    %1329 = vmatpush1.msra.mxu0 0.0
    %1330 = vmatprep.subr.mxu0 0.0
    %1331 = vmatpush1.msra.mxu0 0.0
    %1332 = vmatprep.subr.mxu0 0.0
    %1333 = vmatpush1.msra.mxu0 0.0
    %1334 = vmatprep.subr.mxu0 0.0
    %1335 = vmatpush1.msra.mxu0 0.0
    %1336 = vmatprep.subr.mxu0 0.0
    %1337 = vmatpush1.msra.mxu0 0.0
    %1338 = vmatprep.subr.mxu0 0.0
    %1339 = vmatpush1.msra.mxu0 0.0
    %1340 = vmatprep.subr.mxu0 0.0
    %1341 = vmatpush1.msra.mxu0 0.0
    %1342 = vmatprep.subr.mxu0 0.0
    %1343 = vmatpush1.msra.mxu0 %v1305
    %1344 = vmatprep.subr.mxu0 0.0
    %1345 = vmatpush1.msra.mxu0 %v1303
    %1346 = vmatprep.subr.mxu0 0.0
    %1347 = vmatpush2.msra.mxu0 0.0
    %1348 = vmatprep.subr.mxu0 0.0
    %1349 = vmatpush2.msra.mxu0 0.0
    %1350 = vmatprep.subr.mxu0 0.0
    %1351 = vmatpush2.msra.mxu0 0.0
    %1352 = vmatprep.subr.mxu0 0.0
    %1353 = vmatpush2.msra.mxu0 0.0
    %1354 = vmatprep.subr.mxu0 0.0
    %1355 = vmatpush2.msra.mxu0 0.0
    %1356 = vmatprep.subr.mxu0 0.0
    %1357 = vmatpush2.msra.mxu0 0.0
    %1358 = vmatprep.subr.mxu0 0.0
    %1359 = vmatpush2.msra.mxu0 0.0
    %1360 = vmatprep.subr.mxu0 0.0
    %1361 = vmatpush2.msra.mxu0 0.0
    %1362 = vmatprep.subr.mxu0 0.0
    %1363 = vmatpush2.msra.mxu0 0.0
    %1364 = vmatprep.subr.mxu0 0.0
    %1365 = vmatpush2.msra.mxu0 0.0
    %1366 = vmatprep.subr.mxu0 0.0
    %1367 = vmatpush2.msra.mxu0 0.0
    %1368 = vmatprep.subr.mxu0 0.0
    %1369 = vmatpush2.msra.mxu0 0.0
    %1370 = vmatprep.subr.mxu0 0.0
    %1371 = vmatpush2.msra.mxu0 0.0
    %1372 = vmatprep.subr.mxu0 0.0
    %1373 = vmatpush2.msra.mxu0 0.0
    %1374 = vmatprep.subr.mxu0 0.0
    %1375 = vmatpush2.msra.mxu0 0.0
    %1376 = vmatprep.subr.mxu0 0.0
    %1377 = vmatpush2.msra.mxu0 0.0
    %1378 = vmatprep.mubr.f32.mxu0 0.0
    %1379 = vmatmul.mubr.f32.gmra.mxu0 %v1309
    %v1380 = vpop.f32.mrf.mxu0
    %v1381 = vadd.f32 0.0, %v1380
    %v1382 = vpop.f32.mrf.mxu0
    %1383 = vmatprep.mubr.f32.mxu0 0.0
    %1384 = vmatmul.mubr.f32.gmra.mxu0 %v1312
    %v1385 = vpop.f32.mrf.mxu0
    %v1386 = vadd.f32 0.0, %v1385
    %v1387 = vpop.f32.mrf.mxu0
    %1388 = vdwg.mxu0
    %1391 = vrot.lane.b32.xlu0 %v1381, 64
    %v1392 = vpop.permute.xlu0 %1391
    %1393 = vrot.lane.b32.xlu0 %v1386, 64
    %v1394 = vpop.permute.xlu0 %1393
    %v1397 = vsel %vm983, %v1175, %v1392
    %v1398 = vsel %vm983, %v1180, %v1394
    %v1400 = vsel %vm983, %v888, 0
    %v1403 = vsel %vm983, %v894, 0
    %v1406 = vsel %vm983, %v890, 0
    %v1409 = vsel %vm983, %v896, 0
    %1411 = vmatprep.subr.mxu0 0.0
    %1412 = vmatpush1.xpose.msra.mxu0 0.0
    %1413 = vmatprep.subr.mxu0 0.0
    %1414 = vmatpush1.xpose.msra.mxu0 0.0
    %1415 = vmatprep.subr.mxu0 0.0
    %1416 = vmatpush1.xpose.msra.mxu0 0.0
    %1417 = vmatprep.subr.mxu0 0.0
    %1418 = vmatpush1.xpose.msra.mxu0 0.0
    %1419 = vmatprep.subr.mxu0 0.0
    %1420 = vmatpush1.xpose.msra.mxu0 0.0
    %1421 = vmatprep.subr.mxu0 0.0
    %1422 = vmatpush1.xpose.msra.mxu0 0.0
    %1423 = vmatprep.subr.mxu0 0.0
    %1424 = vmatpush1.xpose.msra.mxu0 0.0
    %1425 = vmatprep.subr.mxu0 0.0
    %1426 = vmatpush1.xpose.msra.mxu0 0.0
    %1427 = vmatprep.subr.mxu0 0.0
    %1428 = vmatpush1.xpose.msra.mxu0 0.0
    %1429 = vmatprep.subr.mxu0 0.0
    %1430 = vmatpush1.xpose.msra.mxu0 0.0
    %1431 = vmatprep.subr.mxu0 0.0
    %1432 = vmatpush1.xpose.msra.mxu0 0.0
    %1433 = vmatprep.subr.mxu0 0.0
    %1434 = vmatpush1.xpose.msra.mxu0 0.0
    %1435 = vmatprep.subr.mxu0 0.0
    %1436 = vmatpush1.xpose.msra.mxu0 0.0
    %1437 = vmatprep.subr.mxu0 0.0
    %1438 = vmatpush1.xpose.msra.mxu0 0.0
    %1439 = vmatprep.subr.mxu0 0.0
    %1440 = vmatpush1.xpose.msra.mxu0 %v1409
    %1441 = vmatprep.subr.mxu0 0.0
    %1442 = vmatpush1.xpose.msra.mxu0 %v1406
    %1443 = vmatprep.subr.mxu0 0.0
    %1444 = vmatpush2.xpose.msra.mxu0 0.0
    %1445 = vmatprep.subr.mxu0 0.0
    %1446 = vmatpush2.xpose.msra.mxu0 0.0
    %1447 = vmatprep.subr.mxu0 0.0
    %1448 = vmatpush2.xpose.msra.mxu0 0.0
    %1449 = vmatprep.subr.mxu0 0.0
    %1450 = vmatpush2.xpose.msra.mxu0 0.0
    %1451 = vmatprep.subr.mxu0 0.0
    %1452 = vmatpush2.xpose.msra.mxu0 0.0
    %1453 = vmatprep.subr.mxu0 0.0
    %1454 = vmatpush2.xpose.msra.mxu0 0.0
    %1455 = vmatprep.subr.mxu0 0.0
    %1456 = vmatpush2.xpose.msra.mxu0 0.0
    %1457 = vmatprep.subr.mxu0 0.0
    %1458 = vmatpush2.xpose.msra.mxu0 0.0
    %1459 = vmatprep.subr.mxu0 0.0
    %1460 = vmatpush2.xpose.msra.mxu0 0.0
    %1461 = vmatprep.subr.mxu0 0.0
    %1462 = vmatpush2.xpose.msra.mxu0 0.0
    %1463 = vmatprep.subr.mxu0 0.0
    %1464 = vmatpush2.xpose.msra.mxu0 0.0
    %1465 = vmatprep.subr.mxu0 0.0
    %1466 = vmatpush2.xpose.msra.mxu0 0.0
    %1467 = vmatprep.subr.mxu0 0.0
    %1468 = vmatpush2.xpose.msra.mxu0 0.0
    %1469 = vmatprep.subr.mxu0 0.0
    %1470 = vmatpush2.xpose.msra.mxu0 0.0
    %1471 = vmatprep.subr.mxu0 0.0
    %1472 = vmatpush2.xpose.msra.mxu0 0.0
    %1473 = vmatprep.subr.mxu0 0.0
    %1474 = vmatpush2.xpose.msra.mxu0 0.0
    %1475 = vmatprep.mubr.f32.mxu0 0.0
    %1476 = vmatmul.mubr.f32.gmra.mxu0 %v1400
    %v1477 = vpop.f32.mrf.mxu0
    %v1478 = vadd.f32 0.0, %v1477
    %v1479 = vpop.f32.mrf.mxu0
    %1480 = vmatprep.mubr.f32.mxu0 0.0
    %1481 = vmatmul.mubr.f32.gmra.mxu0 %v1403
    %v1482 = vpop.f32.mrf.mxu0
    %v1483 = vadd.f32 0.0, %v1482
    %v1484 = vpop.f32.mrf.mxu0
    %1485 = vdwg.mxu0
    %v1486 = vmul.f32 %v1478, 0.125
    %v1487 = vmul.f32 %v1483, 0.125
    %v1488 = vlaneseq
    %v1489 = vshrl.u32 %v1488, 7
    %v1490 = vsub.s32 1, %v1489
    %v1491 = vrot.slane %v691, %v1490
    %v1492 = vadd.f32 %v1486, %v1491
    %v1493 = vadd.f32 %v1487, %v1491
    %v1494 = vsel %vm1079, %v1492, -inf
    %1495 = vmax.xlane.f32.xlu0 %v1494
    %v1496 = vpop.xlane.xlu0 %1495
    %v1497 = vsel %vm1079, %v1493, -inf
    %1498 = vmax.xlane.f32.xlu0 %v1497
    %v1499 = vpop.xlane.xlu0 %1498
    %v1500 = vsub.f32 %v1492, %v1496
    %v1501 = vsub.f32 %v1493, %v1499
    %v1502 = vmul.f32 %v1500, 1.442695
    %v1503 = vpow.pop %v1502
    %v1504 = vmul.f32 %v1501, 1.442695
    %v1505 = vpow.pop %v1504
    %v1506 = vsel %vm1079, %v1503, 0.0
    %1507 = vadd.xlane.f32.xlu0 %v1506
    %v1508 = vpop.xlane.xlu0 %1507
    %v1509 = vsel %vm1079, %v1505, 0.0
    %1510 = vadd.xlane.f32.xlu0 %v1509
    %v1511 = vpop.xlane.xlu0 %1510
    %v1512 = vrcp.pop %v1508
    %v1513 = vmul.f32 %v1503, %v1512
    %v1514 = vrcp.pop %v1511
    %v1515 = vmul.f32 %v1505, %v1514
    %v1517 = vsel %vm1079, %v1513, 0
    %v1520 = vsel %vm1079, %v1515, 0
    %1522 = vmatprep.subr.mxu0 0.0
    %1523 = vmatpush1.msra.mxu0 0.0
    %1524 = vmatprep.subr.mxu0 0.0
    %1525 = vmatpush1.msra.mxu0 0.0
    %1526 = vmatprep.subr.mxu0 0.0
    %1527 = vmatpush1.msra.mxu0 0.0
    %1528 = vmatprep.subr.mxu0 0.0
    %1529 = vmatpush1.msra.mxu0 0.0
    %1530 = vmatprep.subr.mxu0 0.0
    %1531 = vmatpush1.msra.mxu0 0.0
    %1532 = vmatprep.subr.mxu0 0.0
    %1533 = vmatpush1.msra.mxu0 0.0
    %1534 = vmatprep.subr.mxu0 0.0
    %1535 = vmatpush1.msra.mxu0 0.0
    %1536 = vmatprep.subr.mxu0 0.0
    %1537 = vmatpush1.msra.mxu0 0.0
    %1538 = vmatprep.subr.mxu0 0.0
    %1539 = vmatpush1.msra.mxu0 0.0
    %1540 = vmatprep.subr.mxu0 0.0
    %1541 = vmatpush1.msra.mxu0 0.0
    %1542 = vmatprep.subr.mxu0 0.0
    %1543 = vmatpush1.msra.mxu0 0.0
    %1544 = vmatprep.subr.mxu0 0.0
    %1545 = vmatpush1.msra.mxu0 0.0
    %1546 = vmatprep.subr.mxu0 0.0
    %1547 = vmatpush1.msra.mxu0 0.0
    %1548 = vmatprep.subr.mxu0 0.0
    %1549 = vmatpush1.msra.mxu0 0.0
    %1550 = vmatprep.subr.mxu0 0.0
    %1551 = vmatpush1.msra.mxu0 %v980
    %1552 = vmatprep.subr.mxu0 0.0
    %1553 = vmatpush1.msra.mxu0 %v975
    %1554 = vmatprep.subr.mxu0 0.0
    %1555 = vmatpush2.msra.mxu0 0.0
    %1556 = vmatprep.subr.mxu0 0.0
    %1557 = vmatpush2.msra.mxu0 0.0
    %1558 = vmatprep.subr.mxu0 0.0
    %1559 = vmatpush2.msra.mxu0 0.0
    %1560 = vmatprep.subr.mxu0 0.0
    %1561 = vmatpush2.msra.mxu0 0.0
    %1562 = vmatprep.subr.mxu0 0.0
    %1563 = vmatpush2.msra.mxu0 0.0
    %1564 = vmatprep.subr.mxu0 0.0
    %1565 = vmatpush2.msra.mxu0 0.0
    %1566 = vmatprep.subr.mxu0 0.0
    %1567 = vmatpush2.msra.mxu0 0.0
    %1568 = vmatprep.subr.mxu0 0.0
    %1569 = vmatpush2.msra.mxu0 0.0
    %1570 = vmatprep.subr.mxu0 0.0
    %1571 = vmatpush2.msra.mxu0 0.0
    %1572 = vmatprep.subr.mxu0 0.0
    %1573 = vmatpush2.msra.mxu0 0.0
    %1574 = vmatprep.subr.mxu0 0.0
    %1575 = vmatpush2.msra.mxu0 0.0
    %1576 = vmatprep.subr.mxu0 0.0
    %1577 = vmatpush2.msra.mxu0 0.0
    %1578 = vmatprep.subr.mxu0 0.0
    %1579 = vmatpush2.msra.mxu0 0.0
    %1580 = vmatprep.subr.mxu0 0.0
    %1581 = vmatpush2.msra.mxu0 0.0
    %1582 = vmatprep.subr.mxu0 0.0
    %1583 = vmatpush2.msra.mxu0 0.0
    %1584 = vmatprep.subr.mxu0 0.0
    %1585 = vmatpush2.msra.mxu0 0.0
    %1586 = vmatprep.mubr.f32.mxu0 0.0
    %1587 = vmatmul.mubr.f32.gmra.mxu0 %v1517
    %v1588 = vpop.f32.mrf.mxu0
    %v1589 = vadd.f32 0.0, %v1588
    %v1590 = vpop.f32.mrf.mxu0
    %1591 = vmatprep.mubr.f32.mxu0 0.0
    %1592 = vmatmul.mubr.f32.gmra.mxu0 %v1520
    %v1593 = vpop.f32.mrf.mxu0
    %v1594 = vadd.f32 0.0, %v1593
    %v1595 = vpop.f32.mrf.mxu0
    %1596 = vdwg.mxu0
    %1597 = vrot.lane.b32.xlu0 %v888, 64
    %v1598 = vpop.permute.xlu0 %1597
    %1599 = vrot.lane.b32.xlu0 %v894, 64
    %v1600 = vpop.permute.xlu0 %1599
    %1601 = vrot.lane.b32.xlu0 %v890, 64
    %v1602 = vpop.permute.xlu0 %1601
    %1603 = vrot.lane.b32.xlu0 %v896, 64
    %v1604 = vpop.permute.xlu0 %1603
    %v1605 = vsel %vm983, %v1598, 0
    %v1607 = vsel %vm983, %v1600, 0
    %v1609 = vsel %vm983, %v1602, 0
    %v1611 = vsel %vm983, %v1604, 0
    %1613 = vmatprep.subr.mxu0 0.0
    %1614 = vmatpush1.xpose.msra.mxu0 0.0
    %1615 = vmatprep.subr.mxu0 0.0
    %1616 = vmatpush1.xpose.msra.mxu0 0.0
    %1617 = vmatprep.subr.mxu0 0.0
    %1618 = vmatpush1.xpose.msra.mxu0 0.0
    %1619 = vmatprep.subr.mxu0 0.0
    %1620 = vmatpush1.xpose.msra.mxu0 0.0
    %1621 = vmatprep.subr.mxu0 0.0
    %1622 = vmatpush1.xpose.msra.mxu0 0.0
    %1623 = vmatprep.subr.mxu0 0.0
    %1624 = vmatpush1.xpose.msra.mxu0 0.0
    %1625 = vmatprep.subr.mxu0 0.0
    %1626 = vmatpush1.xpose.msra.mxu0 0.0
    %1627 = vmatprep.subr.mxu0 0.0
    %1628 = vmatpush1.xpose.msra.mxu0 0.0
    %1629 = vmatprep.subr.mxu0 0.0
    %1630 = vmatpush1.xpose.msra.mxu0 0.0
    %1631 = vmatprep.subr.mxu0 0.0
    %1632 = vmatpush1.xpose.msra.mxu0 0.0
    %1633 = vmatprep.subr.mxu0 0.0
    %1634 = vmatpush1.xpose.msra.mxu0 0.0
    %1635 = vmatprep.subr.mxu0 0.0
    %1636 = vmatpush1.xpose.msra.mxu0 0.0
    %1637 = vmatprep.subr.mxu0 0.0
    %1638 = vmatpush1.xpose.msra.mxu0 0.0
    %1639 = vmatprep.subr.mxu0 0.0
    %1640 = vmatpush1.xpose.msra.mxu0 0.0
    %1641 = vmatprep.subr.mxu0 0.0
    %1642 = vmatpush1.xpose.msra.mxu0 %v1611
    %1643 = vmatprep.subr.mxu0 0.0
    %1644 = vmatpush1.xpose.msra.mxu0 %v1609
    %1645 = vmatprep.subr.mxu0 0.0
    %1646 = vmatpush2.xpose.msra.mxu0 0.0
    %1647 = vmatprep.subr.mxu0 0.0
    %1648 = vmatpush2.xpose.msra.mxu0 0.0
    %1649 = vmatprep.subr.mxu0 0.0
    %1650 = vmatpush2.xpose.msra.mxu0 0.0
    %1651 = vmatprep.subr.mxu0 0.0
    %1652 = vmatpush2.xpose.msra.mxu0 0.0
    %1653 = vmatprep.subr.mxu0 0.0
    %1654 = vmatpush2.xpose.msra.mxu0 0.0
    %1655 = vmatprep.subr.mxu0 0.0
    %1656 = vmatpush2.xpose.msra.mxu0 0.0
    %1657 = vmatprep.subr.mxu0 0.0
    %1658 = vmatpush2.xpose.msra.mxu0 0.0
    %1659 = vmatprep.subr.mxu0 0.0
    %1660 = vmatpush2.xpose.msra.mxu0 0.0
    %1661 = vmatprep.subr.mxu0 0.0
    %1662 = vmatpush2.xpose.msra.mxu0 0.0
    %1663 = vmatprep.subr.mxu0 0.0
    %1664 = vmatpush2.xpose.msra.mxu0 0.0
    %1665 = vmatprep.subr.mxu0 0.0
    %1666 = vmatpush2.xpose.msra.mxu0 0.0
    %1667 = vmatprep.subr.mxu0 0.0
    %1668 = vmatpush2.xpose.msra.mxu0 0.0
    %1669 = vmatprep.subr.mxu0 0.0
    %1670 = vmatpush2.xpose.msra.mxu0 0.0
    %1671 = vmatprep.subr.mxu0 0.0
    %1672 = vmatpush2.xpose.msra.mxu0 0.0
    %1673 = vmatprep.subr.mxu0 0.0
    %1674 = vmatpush2.xpose.msra.mxu0 0.0
    %1675 = vmatprep.subr.mxu0 0.0
    %1676 = vmatpush2.xpose.msra.mxu0 0.0
    %1677 = vmatprep.mubr.f32.mxu0 0.0
    %1678 = vmatmul.mubr.f32.gmra.mxu0 %v1605
    %v1679 = vpop.f32.mrf.mxu0
    %v1680 = vadd.f32 0.0, %v1679
    %v1681 = vpop.f32.mrf.mxu0
    %1682 = vmatprep.mubr.f32.mxu0 0.0
    %1683 = vmatmul.mubr.f32.gmra.mxu0 %v1607
    %v1684 = vpop.f32.mrf.mxu0
    %v1685 = vadd.f32 0.0, %v1684
    %v1686 = vpop.f32.mrf.mxu0
    %1687 = vdwg.mxu0
    %v1688 = vmul.f32 %v1680, 0.125
    %v1689 = vmul.f32 %v1685, 0.125
    %v1690 = vadd.f32 %v1688, %v1491
    %v1691 = vadd.f32 %v1689, %v1491
    %v1692 = vsel %vm1079, %v1690, -inf
    %1693 = vmax.xlane.f32.xlu0 %v1692
    %v1694 = vpop.xlane.xlu0 %1693
    %v1695 = vsel %vm1079, %v1691, -inf
    %1696 = vmax.xlane.f32.xlu0 %v1695
    %v1697 = vpop.xlane.xlu0 %1696
    %v1698 = vsub.f32 %v1690, %v1694
    %v1699 = vsub.f32 %v1691, %v1697
    %v1700 = vmul.f32 %v1698, 1.442695
    %v1701 = vpow.pop %v1700
    %v1702 = vmul.f32 %v1699, 1.442695
    %v1703 = vpow.pop %v1702
    %v1704 = vsel %vm1079, %v1701, 0.0
    %1705 = vadd.xlane.f32.xlu0 %v1704
    %v1706 = vpop.xlane.xlu0 %1705
    %v1707 = vsel %vm1079, %v1703, 0.0
    %1708 = vadd.xlane.f32.xlu0 %v1707
    %v1709 = vpop.xlane.xlu0 %1708
    %v1710 = vrcp.pop %v1706
    %v1711 = vmul.f32 %v1701, %v1710
    %v1712 = vrcp.pop %v1709
    %v1713 = vmul.f32 %v1703, %v1712
    %1716 = vrot.lane.b32.xlu0 %v975, 64
    %v1717 = vpop.permute.xlu0 %1716
    %1718 = vrot.lane.b32.xlu0 %v980, 64
    %v1719 = vpop.permute.xlu0 %1718
    %v1723 = vsel %vm1079, %v1711, 0
    %v1726 = vsel %vm1079, %v1713, 0
    %1728 = vmatprep.subr.mxu0 0.0
    %1729 = vmatpush1.msra.mxu0 0.0
    %1730 = vmatprep.subr.mxu0 0.0
    %1731 = vmatpush1.msra.mxu0 0.0
    %1732 = vmatprep.subr.mxu0 0.0
    %1733 = vmatpush1.msra.mxu0 0.0
    %1734 = vmatprep.subr.mxu0 0.0
    %1735 = vmatpush1.msra.mxu0 0.0
    %1736 = vmatprep.subr.mxu0 0.0
    %1737 = vmatpush1.msra.mxu0 0.0
    %1738 = vmatprep.subr.mxu0 0.0
    %1739 = vmatpush1.msra.mxu0 0.0
    %1740 = vmatprep.subr.mxu0 0.0
    %1741 = vmatpush1.msra.mxu0 0.0
    %1742 = vmatprep.subr.mxu0 0.0
    %1743 = vmatpush1.msra.mxu0 0.0
    %1744 = vmatprep.subr.mxu0 0.0
    %1745 = vmatpush1.msra.mxu0 0.0
    %1746 = vmatprep.subr.mxu0 0.0
    %1747 = vmatpush1.msra.mxu0 0.0
    %1748 = vmatprep.subr.mxu0 0.0
    %1749 = vmatpush1.msra.mxu0 0.0
    %1750 = vmatprep.subr.mxu0 0.0
    %1751 = vmatpush1.msra.mxu0 0.0
    %1752 = vmatprep.subr.mxu0 0.0
    %1753 = vmatpush1.msra.mxu0 0.0
    %1754 = vmatprep.subr.mxu0 0.0
    %1755 = vmatpush1.msra.mxu0 0.0
    %1756 = vmatprep.subr.mxu0 0.0
    %1757 = vmatpush1.msra.mxu0 %v1719
    %1758 = vmatprep.subr.mxu0 0.0
    %1759 = vmatpush1.msra.mxu0 %v1717
    %1760 = vmatprep.subr.mxu0 0.0
    %1761 = vmatpush2.msra.mxu0 0.0
    %1762 = vmatprep.subr.mxu0 0.0
    %1763 = vmatpush2.msra.mxu0 0.0
    %1764 = vmatprep.subr.mxu0 0.0
    %1765 = vmatpush2.msra.mxu0 0.0
    %1766 = vmatprep.subr.mxu0 0.0
    %1767 = vmatpush2.msra.mxu0 0.0
    %1768 = vmatprep.subr.mxu0 0.0
    %1769 = vmatpush2.msra.mxu0 0.0
    %1770 = vmatprep.subr.mxu0 0.0
    %1771 = vmatpush2.msra.mxu0 0.0
    %1772 = vmatprep.subr.mxu0 0.0
    %1773 = vmatpush2.msra.mxu0 0.0
    %1774 = vmatprep.subr.mxu0 0.0
    %1775 = vmatpush2.msra.mxu0 0.0
    %1776 = vmatprep.subr.mxu0 0.0
    %1777 = vmatpush2.msra.mxu0 0.0
    %1778 = vmatprep.subr.mxu0 0.0
    %1779 = vmatpush2.msra.mxu0 0.0
    %1780 = vmatprep.subr.mxu0 0.0
    %1781 = vmatpush2.msra.mxu0 0.0
    %1782 = vmatprep.subr.mxu0 0.0
    %1783 = vmatpush2.msra.mxu0 0.0
    %1784 = vmatprep.subr.mxu0 0.0
    %1785 = vmatpush2.msra.mxu0 0.0
    %1786 = vmatprep.subr.mxu0 0.0
    %1787 = vmatpush2.msra.mxu0 0.0
    %1788 = vmatprep.subr.mxu0 0.0
    %1789 = vmatpush2.msra.mxu0 0.0
    %1790 = vmatprep.subr.mxu0 0.0
    %1791 = vmatpush2.msra.mxu0 0.0
    %1792 = vmatprep.mubr.f32.mxu0 0.0
    %1793 = vmatmul.mubr.f32.gmra.mxu0 %v1723
    %v1794 = vpop.f32.mrf.mxu0
    %v1795 = vadd.f32 0.0, %v1794
    %v1796 = vpop.f32.mrf.mxu0
    %1797 = vmatprep.mubr.f32.mxu0 0.0
    %1798 = vmatmul.mubr.f32.gmra.mxu0 %v1726
    %v1799 = vpop.f32.mrf.mxu0
    %v1800 = vadd.f32 0.0, %v1799
    %v1801 = vpop.f32.mrf.mxu0
    %1802 = vdwg.mxu0
    %1805 = vrot.lane.b32.xlu0 %v1795, 64
    %v1806 = vpop.permute.xlu0 %1805
    %1807 = vrot.lane.b32.xlu0 %v1800, 64
    %v1808 = vpop.permute.xlu0 %1807
    %v1811 = vsel %vm983, %v1589, %v1806
    %v1812 = vsel %vm983, %v1594, %v1808
    %v1814 = vlaneseq
    %v1815 = vshrl.u32 %v1814, 7
    %v1816 = vsub.s32 0, %v1815
    %v1817 = vrot.slane %v340, %v1816
    %1819 = vmatprep.subr.mxu0 0.0
    %1820 = vmatpush1.msra.mxu0 %v339
    %1821 = vmatprep.subr.mxu0 0.0
    %1822 = vmatpush1.msra.mxu0 %v338
    %1823 = vmatprep.subr.mxu0 0.0
    %1824 = vmatpush1.msra.mxu0 %v337
    %1825 = vmatprep.subr.mxu0 0.0
    %1826 = vmatpush1.msra.mxu0 %v336
    %1827 = vmatprep.subr.mxu0 0.0
    %1828 = vmatpush1.msra.mxu0 %v335
    %1829 = vmatprep.subr.mxu0 0.0
    %1830 = vmatpush1.msra.mxu0 %v334
    %1831 = vmatprep.subr.mxu0 0.0
    %1832 = vmatpush1.msra.mxu0 %v333
    %1833 = vmatprep.subr.mxu0 0.0
    %1834 = vmatpush1.msra.mxu0 %v332
    %1835 = vmatprep.subr.mxu0 0.0
    %1836 = vmatpush1.msra.mxu0 %v331
    %1837 = vmatprep.subr.mxu0 0.0
    %1838 = vmatpush1.msra.mxu0 %v330
    %1839 = vmatprep.subr.mxu0 0.0
    %1840 = vmatpush1.msra.mxu0 %v329
    %1841 = vmatprep.subr.mxu0 0.0
    %1842 = vmatpush1.msra.mxu0 %v328
    %1843 = vmatprep.subr.mxu0 0.0
    %1844 = vmatpush1.msra.mxu0 %v327
    %1845 = vmatprep.subr.mxu0 0.0
    %1846 = vmatpush1.msra.mxu0 %v326
    %1847 = vmatprep.subr.mxu0 0.0
    %1848 = vmatpush1.msra.mxu0 %v325
    %1849 = vmatprep.subr.mxu0 0.0
    %1850 = vmatpush1.msra.mxu0 %v324
    %1851 = vmatprep.subr.mxu0 0.0
    %1852 = vmatpush2.msra.mxu0 0.0
    %1853 = vmatprep.subr.mxu0 0.0
    %1854 = vmatpush2.msra.mxu0 0.0
    %1855 = vmatprep.subr.mxu0 0.0
    %1856 = vmatpush2.msra.mxu0 0.0
    %1857 = vmatprep.subr.mxu0 0.0
    %1858 = vmatpush2.msra.mxu0 0.0
    %1859 = vmatprep.subr.mxu0 0.0
    %1860 = vmatpush2.msra.mxu0 0.0
    %1861 = vmatprep.subr.mxu0 0.0
    %1862 = vmatpush2.msra.mxu0 0.0
    %1863 = vmatprep.subr.mxu0 0.0
    %1864 = vmatpush2.msra.mxu0 0.0
    %1865 = vmatprep.subr.mxu0 0.0
    %1866 = vmatpush2.msra.mxu0 0.0
    %1867 = vmatprep.subr.mxu0 0.0
    %1868 = vmatpush2.msra.mxu0 0.0
    %1869 = vmatprep.subr.mxu0 0.0
    %1870 = vmatpush2.msra.mxu0 0.0
    %1871 = vmatprep.subr.mxu0 0.0
    %1872 = vmatpush2.msra.mxu0 0.0
    %1873 = vmatprep.subr.mxu0 0.0
    %1874 = vmatpush2.msra.mxu0 0.0
    %1875 = vmatprep.subr.mxu0 0.0
    %1876 = vmatpush2.msra.mxu0 0.0
    %1877 = vmatprep.subr.mxu0 0.0
    %1878 = vmatpush2.msra.mxu0 0.0
    %1879 = vmatprep.subr.mxu0 0.0
    %1880 = vmatpush2.msra.mxu0 0.0
    %1881 = vmatprep.subr.mxu0 0.0
    %1882 = vmatpush2.msra.mxu0 0.0
    %1883 = vmatprep.mubr.f32.mxu0 0.0
    %1884 = vmatmul.mubr.f32.gmra.mxu0 %v1397
    %v1885 = vpop.f32.mrf.mxu0
    %v1886 = vadd.f32 %v1817, %v1885
    %v1887 = vpop.f32.mrf.mxu0
    %1888 = vmatprep.mubr.f32.mxu0 0.0
    %1889 = vmatmul.mubr.f32.gmra.mxu0 %v1398
    %v1890 = vpop.f32.mrf.mxu0
    %v1891 = vadd.f32 %v1817, %v1890
    %v1892 = vpop.f32.mrf.mxu0
    %1893 = vmatprep.mubr.f32.mxu0 0.0
    %1894 = vmatmul.mubr.f32.gmra.mxu0 %v1811
    %v1895 = vpop.f32.mrf.mxu0
    %v1896 = vadd.f32 %v1817, %v1895
    %v1897 = vpop.f32.mrf.mxu0
    %1898 = vmatprep.mubr.f32.mxu0 0.0
    %1899 = vmatmul.mubr.f32.gmra.mxu0 %v1812
    %v1900 = vpop.f32.mrf.mxu0
    %v1901 = vadd.f32 %v1817, %v1900
    %v1902 = vpop.f32.mrf.mxu0
    %1903 = vdwg.mxu0
    %v1904 = vadd.f32 %v789, %v1886
    %v1905 = vadd.f32 %v790, %v1891
    %v1906 = vadd.f32 %v791, %v1896
    %v1907 = vadd.f32 %v792, %v1901
    %1908 = vadd.xlane.f32.xlu0 %v1904
    %v1909 = vpop.xlane.xlu0 %1908
    %1910 = vadd.xlane.f32.xlu0 %v1905
    %v1911 = vpop.xlane.xlu0 %1910
    %1912 = vadd.xlane.f32.xlu0 %v1906
    %v1913 = vpop.xlane.xlu0 %1912
    %1914 = vadd.xlane.f32.xlu0 %v1907
    %v1915 = vpop.xlane.xlu0 %1914
    %v1916 = vmul.f32 %v1909, %v736
    %v1917 = vmul.f32 %v1911, %v736
    %v1918 = vmul.f32 %v1913, %v736
    %v1919 = vmul.f32 %v1915, %v736
    %v1920 = vsub.f32 %v1904, %v1916
    %v1921 = vsub.f32 %v1905, %v1917
    %v1922 = vsub.f32 %v1906, %v1918
    %v1923 = vsub.f32 %v1907, %v1919
    %v1924 = vmul.f32 %v1920, %v1920
    %v1925 = vmul.f32 %v1921, %v1921
    %v1926 = vmul.f32 %v1922, %v1922
    %v1927 = vmul.f32 %v1923, %v1923
    %1928 = vadd.xlane.f32.xlu0 %v1924
    %v1929 = vpop.xlane.xlu0 %1928
    %1930 = vadd.xlane.f32.xlu0 %v1925
    %v1931 = vpop.xlane.xlu0 %1930
    %1932 = vadd.xlane.f32.xlu0 %v1926
    %v1933 = vpop.xlane.xlu0 %1932
    %1934 = vadd.xlane.f32.xlu0 %v1927
    %v1935 = vpop.xlane.xlu0 %1934
    %v1936 = vmul.f32 %v1929, %v736
    %v1937 = vmul.f32 %v1931, %v736
    %v1938 = vmul.f32 %v1933, %v736
    %v1939 = vmul.f32 %v1935, %v736
    %v1940 = vadd.f32 %v1936, 1e-12
    %v1941 = vadd.f32 %v1937, 1e-12
    %v1942 = vadd.f32 %v1938, 1e-12
    %v1943 = vadd.f32 %v1939, 1e-12
    %v1944 = vrsqrt.pop %v1940
    %v1945 = vrsqrt.pop %v1941
    %v1946 = vrsqrt.pop %v1942
    %v1947 = vrsqrt.pop %v1943
    %v1948 = vmul.f32 %v1920, %v1944
    %v1949 = vmul.f32 %v1921, %v1945
    %v1950 = vmul.f32 %v1922, %v1946
    %v1951 = vmul.f32 %v1923, %v1947
    %v1953 = vlaneseq
    %v1954 = vshrl.u32 %v1953, 7
    %v1955 = vsub.s32 0, %v1954
    %v1956 = vrot.slane %v341, %v1955
    %v1958 = vmul.f32 %v1948, %v1956
    %v1959 = vmul.f32 %v1949, %v1956
    %v1960 = vmul.f32 %v1950, %v1956
    %v1961 = vmul.f32 %v1951, %v1956
    %v1963 = vlaneseq
    %v1964 = vshrl.u32 %v1963, 7
    %v1965 = vsub.s32 0, %v1964
    %v1966 = vrot.slane %v342, %v1965
    %v1968 = vadd.f32 %v1958, %v1966
    %v1969 = vadd.f32 %v1959, %v1966
    %v1970 = vadd.f32 %v1960, %v1966
    %v1971 = vadd.f32 %v1961, %v1966
    %v1973 = vlaneseq
    %v1974 = vshrl.u32 %v1973, 7
    %v1975 = vsub.s32 0, %v1974
    %v1976 = vrot.slane %v407, %v1975
    %v1977 = vlaneseq
    %v1978 = vshrl.u32 %v1977, 7
    %v1979 = vsub.s32 1, %v1978
    %v1980 = vrot.slane %v407, %v1979
    %v1981 = vlaneseq
    %v1982 = vshrl.u32 %v1981, 7
    %v1983 = vsub.s32 2, %v1982
    %v1984 = vrot.slane %v407, %v1983
    %v1985 = vlaneseq
    %v1986 = vshrl.u32 %v1985, 7
    %v1987 = vsub.s32 3, %v1986
    %v1988 = vrot.slane %v407, %v1987
    %1993 = vmatprep.subr.mxu0 %v404
    %1994 = vmatpush1.msra.mxu0 %v403
    %1995 = vmatprep.subr.mxu0 %v400
    %1996 = vmatpush1.msra.mxu0 %v399
    %1997 = vmatprep.subr.mxu0 %v396
    %1998 = vmatpush1.msra.mxu0 %v395
    %1999 = vmatprep.subr.mxu0 %v392
    %2000 = vmatpush1.msra.mxu0 %v391
    %2001 = vmatprep.subr.mxu0 %v388
    %2002 = vmatpush1.msra.mxu0 %v387
    %2003 = vmatprep.subr.mxu0 %v384
    %2004 = vmatpush1.msra.mxu0 %v383
    %2005 = vmatprep.subr.mxu0 %v380
    %2006 = vmatpush1.msra.mxu0 %v379
    %2007 = vmatprep.subr.mxu0 %v376
    %2008 = vmatpush1.msra.mxu0 %v375
    %2009 = vmatprep.subr.mxu0 %v372
    %2010 = vmatpush1.msra.mxu0 %v371
    %2011 = vmatprep.subr.mxu0 %v368
    %2012 = vmatpush1.msra.mxu0 %v367
    %2013 = vmatprep.subr.mxu0 %v364
    %2014 = vmatpush1.msra.mxu0 %v363
    %2015 = vmatprep.subr.mxu0 %v360
    %2016 = vmatpush1.msra.mxu0 %v359
    %2017 = vmatprep.subr.mxu0 %v356
    %2018 = vmatpush1.msra.mxu0 %v355
    %2019 = vmatprep.subr.mxu0 %v352
    %2020 = vmatpush1.msra.mxu0 %v351
    %2021 = vmatprep.subr.mxu0 %v348
    %2022 = vmatpush1.msra.mxu0 %v347
    %2023 = vmatprep.subr.mxu0 %v344
    %2024 = vmatpush1.msra.mxu0 %v343
    %2025 = vmatprep.subr.mxu0 0.0
    %2026 = vmatpush2.msra.mxu0 0.0
    %2027 = vmatprep.subr.mxu0 0.0
    %2028 = vmatpush2.msra.mxu0 0.0
    %2029 = vmatprep.subr.mxu0 0.0
    %2030 = vmatpush2.msra.mxu0 0.0
    %2031 = vmatprep.subr.mxu0 0.0
    %2032 = vmatpush2.msra.mxu0 0.0
    %2033 = vmatprep.subr.mxu0 0.0
    %2034 = vmatpush2.msra.mxu0 0.0
    %2035 = vmatprep.subr.mxu0 0.0
    %2036 = vmatpush2.msra.mxu0 0.0
    %2037 = vmatprep.subr.mxu0 0.0
    %2038 = vmatpush2.msra.mxu0 0.0
    %2039 = vmatprep.subr.mxu0 0.0
    %2040 = vmatpush2.msra.mxu0 0.0
    %2041 = vmatprep.subr.mxu0 0.0
    %2042 = vmatpush2.msra.mxu0 0.0
    %2043 = vmatprep.subr.mxu0 0.0
    %2044 = vmatpush2.msra.mxu0 0.0
    %2045 = vmatprep.subr.mxu0 0.0
    %2046 = vmatpush2.msra.mxu0 0.0
    %2047 = vmatprep.subr.mxu0 0.0
    %2048 = vmatpush2.msra.mxu0 0.0
    %2049 = vmatprep.subr.mxu0 0.0
    %2050 = vmatpush2.msra.mxu0 0.0
    %2051 = vmatprep.subr.mxu0 0.0
    %2052 = vmatpush2.msra.mxu0 0.0
    %2053 = vmatprep.subr.mxu0 0.0
    %2054 = vmatpush2.msra.mxu0 0.0
    %2055 = vmatprep.subr.mxu0 0.0
    %2056 = vmatpush2.msra.mxu0 0.0
    %2057 = vmatprep.mubr.f32.mxu0 0.0
    %2058 = vmatmul.mubr.f32.gmra.mxu0 %v1968
    %v2059 = vpop.f32.mrf.mxu0
    %v2060 = vadd.f32 %v1976, %v2059
    %v2061 = vpop.f32.mrf.mxu0
    %v2062 = vadd.f32 %v1980, %v2061
    %2063 = vmatprep.mubr.f32.mxu0 0.0
    %2064 = vmatmul.mubr.f32.gmra.mxu0 %v1969
    %v2065 = vpop.f32.mrf.mxu0
    %v2066 = vadd.f32 %v1976, %v2065
    %v2067 = vpop.f32.mrf.mxu0
    %v2068 = vadd.f32 %v1980, %v2067
    %2069 = vmatprep.mubr.f32.mxu0 0.0
    %2070 = vmatmul.mubr.f32.gmra.mxu0 %v1970
    %v2071 = vpop.f32.mrf.mxu0
    %v2072 = vadd.f32 %v1976, %v2071
    %v2073 = vpop.f32.mrf.mxu0
    %v2074 = vadd.f32 %v1980, %v2073
    %2075 = vmatprep.mubr.f32.mxu0 0.0
    %2076 = vmatmul.mubr.f32.gmra.mxu0 %v1971
    %v2077 = vpop.f32.mrf.mxu0
    %v2078 = vadd.f32 %v1976, %v2077
    %v2079 = vpop.f32.mrf.mxu0
    %v2080 = vadd.f32 %v1980, %v2079
    %2081 = vdwg.mxu0
    %2082 = vmatprep.subr.mxu0 %v406
    %2083 = vmatpush1.msra.mxu0 %v405
    %2084 = vmatprep.subr.mxu0 %v402
    %2085 = vmatpush1.msra.mxu0 %v401
    %2086 = vmatprep.subr.mxu0 %v398
    %2087 = vmatpush1.msra.mxu0 %v397
    %2088 = vmatprep.subr.mxu0 %v394
    %2089 = vmatpush1.msra.mxu0 %v393
    %2090 = vmatprep.subr.mxu0 %v390
    %2091 = vmatpush1.msra.mxu0 %v389
    %2092 = vmatprep.subr.mxu0 %v386
    %2093 = vmatpush1.msra.mxu0 %v385
    %2094 = vmatprep.subr.mxu0 %v382
    %2095 = vmatpush1.msra.mxu0 %v381
    %2096 = vmatprep.subr.mxu0 %v378
    %2097 = vmatpush1.msra.mxu0 %v377
    %2098 = vmatprep.subr.mxu0 %v374
    %2099 = vmatpush1.msra.mxu0 %v373
    %2100 = vmatprep.subr.mxu0 %v370
    %2101 = vmatpush1.msra.mxu0 %v369
    %2102 = vmatprep.subr.mxu0 %v366
    %2103 = vmatpush1.msra.mxu0 %v365
    %2104 = vmatprep.subr.mxu0 %v362
    %2105 = vmatpush1.msra.mxu0 %v361
    %2106 = vmatprep.subr.mxu0 %v358
    %2107 = vmatpush1.msra.mxu0 %v357
    %2108 = vmatprep.subr.mxu0 %v354
    %2109 = vmatpush1.msra.mxu0 %v353
    %2110 = vmatprep.subr.mxu0 %v350
    %2111 = vmatpush1.msra.mxu0 %v349
    %2112 = vmatprep.subr.mxu0 %v346
    %2113 = vmatpush1.msra.mxu0 %v345
    %2114 = vmatprep.subr.mxu0 0.0
    %2115 = vmatpush2.msra.mxu0 0.0
    %2116 = vmatprep.subr.mxu0 0.0
    %2117 = vmatpush2.msra.mxu0 0.0
    %2118 = vmatprep.subr.mxu0 0.0
    %2119 = vmatpush2.msra.mxu0 0.0
    %2120 = vmatprep.subr.mxu0 0.0
    %2121 = vmatpush2.msra.mxu0 0.0
    %2122 = vmatprep.subr.mxu0 0.0
    %2123 = vmatpush2.msra.mxu0 0.0
    %2124 = vmatprep.subr.mxu0 0.0
    %2125 = vmatpush2.msra.mxu0 0.0
    %2126 = vmatprep.subr.mxu0 0.0
    %2127 = vmatpush2.msra.mxu0 0.0
    %2128 = vmatprep.subr.mxu0 0.0
    %2129 = vmatpush2.msra.mxu0 0.0
    %2130 = vmatprep.subr.mxu0 0.0
    %2131 = vmatpush2.msra.mxu0 0.0
    %2132 = vmatprep.subr.mxu0 0.0
    %2133 = vmatpush2.msra.mxu0 0.0
    %2134 = vmatprep.subr.mxu0 0.0
    %2135 = vmatpush2.msra.mxu0 0.0
    %2136 = vmatprep.subr.mxu0 0.0
    %2137 = vmatpush2.msra.mxu0 0.0
    %2138 = vmatprep.subr.mxu0 0.0
    %2139 = vmatpush2.msra.mxu0 0.0
    %2140 = vmatprep.subr.mxu0 0.0
    %2141 = vmatpush2.msra.mxu0 0.0
    %2142 = vmatprep.subr.mxu0 0.0
    %2143 = vmatpush2.msra.mxu0 0.0
    %2144 = vmatprep.subr.mxu0 0.0
    %2145 = vmatpush2.msra.mxu0 0.0
    %2146 = vmatprep.mubr.f32.mxu0 0.0
    %2147 = vmatmul.mubr.f32.gmra.mxu0 %v1968
    %v2148 = vpop.f32.mrf.mxu0
    %v2149 = vadd.f32 %v1984, %v2148
    %v2150 = vpop.f32.mrf.mxu0
    %v2151 = vadd.f32 %v1988, %v2150
    %2152 = vmatprep.mubr.f32.mxu0 0.0
    %2153 = vmatmul.mubr.f32.gmra.mxu0 %v1969
    %v2154 = vpop.f32.mrf.mxu0
    %v2155 = vadd.f32 %v1984, %v2154
    %v2156 = vpop.f32.mrf.mxu0
    %v2157 = vadd.f32 %v1988, %v2156
    %2158 = vmatprep.mubr.f32.mxu0 0.0
    %2159 = vmatmul.mubr.f32.gmra.mxu0 %v1970
    %v2160 = vpop.f32.mrf.mxu0
    %v2161 = vadd.f32 %v1984, %v2160
    %v2162 = vpop.f32.mrf.mxu0
    %v2163 = vadd.f32 %v1988, %v2162
    %2164 = vmatprep.mubr.f32.mxu0 0.0
    %2165 = vmatmul.mubr.f32.gmra.mxu0 %v1971
    %v2166 = vpop.f32.mrf.mxu0
    %v2167 = vadd.f32 %v1984, %v2166
    %v2168 = vpop.f32.mrf.mxu0
    %v2169 = vadd.f32 %v1988, %v2168
    %2170 = vdwg.mxu0
    %v2171 = vmul.f32 %v2060, 0.5
    %v2172 = vmul.f32 %v2062, 0.5
    %v2173 = vmul.f32 %v2149, 0.5
    %v2174 = vmul.f32 %v2151, 0.5
    %v2175 = vmul.f32 %v2066, 0.5
    %v2176 = vmul.f32 %v2068, 0.5
    %v2177 = vmul.f32 %v2155, 0.5
    %v2178 = vmul.f32 %v2157, 0.5
    %v2179 = vmul.f32 %v2072, 0.5
    %v2180 = vmul.f32 %v2074, 0.5
    %v2181 = vmul.f32 %v2161, 0.5
    %v2182 = vmul.f32 %v2163, 0.5
    %v2183 = vmul.f32 %v2078, 0.5
    %v2184 = vmul.f32 %v2080, 0.5
    %v2185 = vmul.f32 %v2167, 0.5
    %v2186 = vmul.f32 %v2169, 0.5
    %v2187 = vmul.f32 %v2060, 0.044715
    %v2188 = vmul.f32 %v2062, 0.044715
    %v2189 = vmul.f32 %v2149, 0.044715
    %v2190 = vmul.f32 %v2151, 0.044715
    %v2191 = vmul.f32 %v2066, 0.044715
    %v2192 = vmul.f32 %v2068, 0.044715
    %v2193 = vmul.f32 %v2155, 0.044715
    %v2194 = vmul.f32 %v2157, 0.044715
    %v2195 = vmul.f32 %v2072, 0.044715
    %v2196 = vmul.f32 %v2074, 0.044715
    %v2197 = vmul.f32 %v2161, 0.044715
    %v2198 = vmul.f32 %v2163, 0.044715
    %v2199 = vmul.f32 %v2078, 0.044715
    %v2200 = vmul.f32 %v2080, 0.044715
    %v2201 = vmul.f32 %v2167, 0.044715
    %v2202 = vmul.f32 %v2169, 0.044715
    %v2203 = vmul.f32 %v2187, %v2060
    %v2204 = vmul.f32 %v2188, %v2062
    %v2205 = vmul.f32 %v2189, %v2149
    %v2206 = vmul.f32 %v2190, %v2151
    %v2207 = vmul.f32 %v2191, %v2066
    %v2208 = vmul.f32 %v2192, %v2068
    %v2209 = vmul.f32 %v2193, %v2155
    %v2210 = vmul.f32 %v2194, %v2157
    %v2211 = vmul.f32 %v2195, %v2072
    %v2212 = vmul.f32 %v2196, %v2074
    %v2213 = vmul.f32 %v2197, %v2161
    %v2214 = vmul.f32 %v2198, %v2163
    %v2215 = vmul.f32 %v2199, %v2078
    %v2216 = vmul.f32 %v2200, %v2080
    %v2217 = vmul.f32 %v2201, %v2167
    %v2218 = vmul.f32 %v2202, %v2169
    %v2219 = vmul.f32 %v2203, %v2060
    %v2220 = vmul.f32 %v2204, %v2062
    %v2221 = vmul.f32 %v2205, %v2149
    %v2222 = vmul.f32 %v2206, %v2151
    %v2223 = vmul.f32 %v2207, %v2066
    %v2224 = vmul.f32 %v2208, %v2068
    %v2225 = vmul.f32 %v2209, %v2155
    %v2226 = vmul.f32 %v2210, %v2157
    %v2227 = vmul.f32 %v2211, %v2072
    %v2228 = vmul.f32 %v2212, %v2074
    %v2229 = vmul.f32 %v2213, %v2161
    %v2230 = vmul.f32 %v2214, %v2163
    %v2231 = vmul.f32 %v2215, %v2078
    %v2232 = vmul.f32 %v2216, %v2080
    %v2233 = vmul.f32 %v2217, %v2167
    %v2234 = vmul.f32 %v2218, %v2169
    %v2235 = vadd.f32 %v2060, %v2219
    %v2236 = vadd.f32 %v2062, %v2220
    %v2237 = vadd.f32 %v2149, %v2221
    %v2238 = vadd.f32 %v2151, %v2222
    %v2239 = vadd.f32 %v2066, %v2223
    %v2240 = vadd.f32 %v2068, %v2224
    %v2241 = vadd.f32 %v2155, %v2225
    %v2242 = vadd.f32 %v2157, %v2226
    %v2243 = vadd.f32 %v2072, %v2227
    %v2244 = vadd.f32 %v2074, %v2228
    %v2245 = vadd.f32 %v2161, %v2229
    %v2246 = vadd.f32 %v2163, %v2230
    %v2247 = vadd.f32 %v2078, %v2231
    %v2248 = vadd.f32 %v2080, %v2232
    %v2249 = vadd.f32 %v2167, %v2233
    %v2250 = vadd.f32 %v2169, %v2234
    %v2251 = vmul.f32 %v2235, 0.7978846
    %v2252 = vmul.f32 %v2236, 0.7978846
    %v2253 = vmul.f32 %v2237, 0.7978846
    %v2254 = vmul.f32 %v2238, 0.7978846
    %v2255 = vmul.f32 %v2239, 0.7978846
    %v2256 = vmul.f32 %v2240, 0.7978846
    %v2257 = vmul.f32 %v2241, 0.7978846
    %v2258 = vmul.f32 %v2242, 0.7978846
    %v2259 = vmul.f32 %v2243, 0.7978846
    %v2260 = vmul.f32 %v2244, 0.7978846
    %v2261 = vmul.f32 %v2245, 0.7978846
    %v2262 = vmul.f32 %v2246, 0.7978846
    %v2263 = vmul.f32 %v2247, 0.7978846
    %v2264 = vmul.f32 %v2248, 0.7978846
    %v2265 = vmul.f32 %v2249, 0.7978846
    %v2266 = vmul.f32 %v2250, 0.7978846
    %v2267 = vtanh.pop %v2251
    %v2268 = vtanh.pop %v2252
    %v2269 = vtanh.pop %v2253
    %v2270 = vtanh.pop %v2254
    %v2271 = vtanh.pop %v2255
    %v2272 = vtanh.pop %v2256
    %v2273 = vtanh.pop %v2257
    %v2274 = vtanh.pop %v2258
    %v2275 = vtanh.pop %v2259
    %v2276 = vtanh.pop %v2260
    %v2277 = vtanh.pop %v2261
    %v2278 = vtanh.pop %v2262
    %v2279 = vtanh.pop %v2263
    %v2280 = vtanh.pop %v2264
    %v2281 = vtanh.pop %v2265
    %v2282 = vtanh.pop %v2266
    %v2283 = vadd.f32 %v2267, 1.0
    %v2284 = vadd.f32 %v2268, 1.0
    %v2285 = vadd.f32 %v2269, 1.0
    %v2286 = vadd.f32 %v2270, 1.0
    %v2287 = vadd.f32 %v2271, 1.0
    %v2288 = vadd.f32 %v2272, 1.0
    %v2289 = vadd.f32 %v2273, 1.0
    %v2290 = vadd.f32 %v2274, 1.0
    %v2291 = vadd.f32 %v2275, 1.0
    %v2292 = vadd.f32 %v2276, 1.0
    %v2293 = vadd.f32 %v2277, 1.0
    %v2294 = vadd.f32 %v2278, 1.0
    %v2295 = vadd.f32 %v2279, 1.0
    %v2296 = vadd.f32 %v2280, 1.0
    %v2297 = vadd.f32 %v2281, 1.0
    %v2298 = vadd.f32 %v2282, 1.0
    %v2299 = vmul.f32 %v2171, %v2283
    %v2300 = vmul.f32 %v2172, %v2284
    %v2301 = vmul.f32 %v2173, %v2285
    %v2302 = vmul.f32 %v2174, %v2286
    %v2303 = vmul.f32 %v2175, %v2287
    %v2304 = vmul.f32 %v2176, %v2288
    %v2305 = vmul.f32 %v2177, %v2289
    %v2306 = vmul.f32 %v2178, %v2290
    %v2307 = vmul.f32 %v2179, %v2291
    %v2308 = vmul.f32 %v2180, %v2292
    %v2309 = vmul.f32 %v2181, %v2293
    %v2310 = vmul.f32 %v2182, %v2294
    %v2311 = vmul.f32 %v2183, %v2295
    %v2312 = vmul.f32 %v2184, %v2296
    %v2313 = vmul.f32 %v2185, %v2297
    %v2314 = vmul.f32 %v2186, %v2298
    %v2316 = vlaneseq
    %v2317 = vshrl.u32 %v2316, 7
    %v2318 = vsub.s32 0, %v2317
    %v2319 = vrot.slane %v472, %v2318
    %2321 = vmatprep.subr.mxu0 0.0
    %2322 = vmatpush1.msra.mxu0 %v423
    %2323 = vmatprep.subr.mxu0 0.0
    %2324 = vmatpush1.msra.mxu0 %v422
    %2325 = vmatprep.subr.mxu0 0.0
    %2326 = vmatpush1.msra.mxu0 %v421
    %2327 = vmatprep.subr.mxu0 0.0
    %2328 = vmatpush1.msra.mxu0 %v420
    %2329 = vmatprep.subr.mxu0 0.0
    %2330 = vmatpush1.msra.mxu0 %v419
    %2331 = vmatprep.subr.mxu0 0.0
    %2332 = vmatpush1.msra.mxu0 %v418
    %2333 = vmatprep.subr.mxu0 0.0
    %2334 = vmatpush1.msra.mxu0 %v417
    %2335 = vmatprep.subr.mxu0 0.0
    %2336 = vmatpush1.msra.mxu0 %v416
    %2337 = vmatprep.subr.mxu0 0.0
    %2338 = vmatpush1.msra.mxu0 %v415
    %2339 = vmatprep.subr.mxu0 0.0
    %2340 = vmatpush1.msra.mxu0 %v414
    %2341 = vmatprep.subr.mxu0 0.0
    %2342 = vmatpush1.msra.mxu0 %v413
    %2343 = vmatprep.subr.mxu0 0.0
    %2344 = vmatpush1.msra.mxu0 %v412
    %2345 = vmatprep.subr.mxu0 0.0
    %2346 = vmatpush1.msra.mxu0 %v411
    %2347 = vmatprep.subr.mxu0 0.0
    %2348 = vmatpush1.msra.mxu0 %v410
    %2349 = vmatprep.subr.mxu0 0.0
    %2350 = vmatpush1.msra.mxu0 %v409
    %2351 = vmatprep.subr.mxu0 0.0
    %2352 = vmatpush1.msra.mxu0 %v408
    %2353 = vmatprep.subr.mxu0 0.0
    %2354 = vmatpush2.msra.mxu0 %v439
    %2355 = vmatprep.subr.mxu0 0.0
    %2356 = vmatpush2.msra.mxu0 %v438
    %2357 = vmatprep.subr.mxu0 0.0
    %2358 = vmatpush2.msra.mxu0 %v437
    %2359 = vmatprep.subr.mxu0 0.0
    %2360 = vmatpush2.msra.mxu0 %v436
    %2361 = vmatprep.subr.mxu0 0.0
    %2362 = vmatpush2.msra.mxu0 %v435
    %2363 = vmatprep.subr.mxu0 0.0
    %2364 = vmatpush2.msra.mxu0 %v434
    %2365 = vmatprep.subr.mxu0 0.0
    %2366 = vmatpush2.msra.mxu0 %v433
    %2367 = vmatprep.subr.mxu0 0.0
    %2368 = vmatpush2.msra.mxu0 %v432
    %2369 = vmatprep.subr.mxu0 0.0
    %2370 = vmatpush2.msra.mxu0 %v431
    %2371 = vmatprep.subr.mxu0 0.0
    %2372 = vmatpush2.msra.mxu0 %v430
    %2373 = vmatprep.subr.mxu0 0.0
    %2374 = vmatpush2.msra.mxu0 %v429
    %2375 = vmatprep.subr.mxu0 0.0
    %2376 = vmatpush2.msra.mxu0 %v428
    %2377 = vmatprep.subr.mxu0 0.0
    %2378 = vmatpush2.msra.mxu0 %v427
    %2379 = vmatprep.subr.mxu0 0.0
    %2380 = vmatpush2.msra.mxu0 %v426
    %2381 = vmatprep.subr.mxu0 0.0
    %2382 = vmatpush2.msra.mxu0 %v425
    %2383 = vmatprep.subr.mxu0 0.0
    %2384 = vmatpush2.msra.mxu0 %v424
    %2385 = vmatprep.mubr.f32.mxu0 %v2300
    %2386 = vmatmul.mubr.f32.gmra.mxu0 %v2299
    %v2387 = vpop.f32.mrf.mxu0
    %v2388 = vadd.f32 %v2319, %v2387
    %v2389 = vpop.f32.mrf.mxu0
    %2390 = vmatprep.mubr.f32.mxu0 %v2304
    %2391 = vmatmul.mubr.f32.gmra.mxu0 %v2303
    %v2392 = vpop.f32.mrf.mxu0
    %v2393 = vadd.f32 %v2319, %v2392
    %v2394 = vpop.f32.mrf.mxu0
    %2395 = vmatprep.mubr.f32.mxu0 %v2308
    %2396 = vmatmul.mubr.f32.gmra.mxu0 %v2307
    %v2397 = vpop.f32.mrf.mxu0
    %v2398 = vadd.f32 %v2319, %v2397
    %v2399 = vpop.f32.mrf.mxu0
    %2400 = vmatprep.mubr.f32.mxu0 %v2312
    %2401 = vmatmul.mubr.f32.gmra.mxu0 %v2311
    %v2402 = vpop.f32.mrf.mxu0
    %v2403 = vadd.f32 %v2319, %v2402
    %v2404 = vpop.f32.mrf.mxu0
    %2405 = vdwg.mxu0
    %2406 = vmatprep.subr.mxu0 0.0
    %2407 = vmatpush1.msra.mxu0 %v455
    %2408 = vmatprep.subr.mxu0 0.0
    %2409 = vmatpush1.msra.mxu0 %v454
    %2410 = vmatprep.subr.mxu0 0.0
    %2411 = vmatpush1.msra.mxu0 %v453
    %2412 = vmatprep.subr.mxu0 0.0
    %2413 = vmatpush1.msra.mxu0 %v452
    %2414 = vmatprep.subr.mxu0 0.0
    %2415 = vmatpush1.msra.mxu0 %v451
    %2416 = vmatprep.subr.mxu0 0.0
    %2417 = vmatpush1.msra.mxu0 %v450
    %2418 = vmatprep.subr.mxu0 0.0
    %2419 = vmatpush1.msra.mxu0 %v449
    %2420 = vmatprep.subr.mxu0 0.0
    %2421 = vmatpush1.msra.mxu0 %v448
    %2422 = vmatprep.subr.mxu0 0.0
    %2423 = vmatpush1.msra.mxu0 %v447
    %2424 = vmatprep.subr.mxu0 0.0
    %2425 = vmatpush1.msra.mxu0 %v446
    %2426 = vmatprep.subr.mxu0 0.0
    %2427 = vmatpush1.msra.mxu0 %v445
    %2428 = vmatprep.subr.mxu0 0.0
    %2429 = vmatpush1.msra.mxu0 %v444
    %2430 = vmatprep.subr.mxu0 0.0
    %2431 = vmatpush1.msra.mxu0 %v443
    %2432 = vmatprep.subr.mxu0 0.0
    %2433 = vmatpush1.msra.mxu0 %v442
    %2434 = vmatprep.subr.mxu0 0.0
    %2435 = vmatpush1.msra.mxu0 %v441
    %2436 = vmatprep.subr.mxu0 0.0
    %2437 = vmatpush1.msra.mxu0 %v440
    %2438 = vmatprep.subr.mxu0 0.0
    %2439 = vmatpush2.msra.mxu0 %v471
    %2440 = vmatprep.subr.mxu0 0.0
    %2441 = vmatpush2.msra.mxu0 %v470
    %2442 = vmatprep.subr.mxu0 0.0
    %2443 = vmatpush2.msra.mxu0 %v469
    %2444 = vmatprep.subr.mxu0 0.0
    %2445 = vmatpush2.msra.mxu0 %v468
    %2446 = vmatprep.subr.mxu0 0.0
    %2447 = vmatpush2.msra.mxu0 %v467
    %2448 = vmatprep.subr.mxu0 0.0
    %2449 = vmatpush2.msra.mxu0 %v466
    %2450 = vmatprep.subr.mxu0 0.0
    %2451 = vmatpush2.msra.mxu0 %v465
    %2452 = vmatprep.subr.mxu0 0.0
    %2453 = vmatpush2.msra.mxu0 %v464
    %2454 = vmatprep.subr.mxu0 0.0
    %2455 = vmatpush2.msra.mxu0 %v463
    %2456 = vmatprep.subr.mxu0 0.0
    %2457 = vmatpush2.msra.mxu0 %v462
    %2458 = vmatprep.subr.mxu0 0.0
    %2459 = vmatpush2.msra.mxu0 %v461
    %2460 = vmatprep.subr.mxu0 0.0
    %2461 = vmatpush2.msra.mxu0 %v460
    %2462 = vmatprep.subr.mxu0 0.0
    %2463 = vmatpush2.msra.mxu0 %v459
    %2464 = vmatprep.subr.mxu0 0.0
    %2465 = vmatpush2.msra.mxu0 %v458
    %2466 = vmatprep.subr.mxu0 0.0
    %2467 = vmatpush2.msra.mxu0 %v457
    %2468 = vmatprep.subr.mxu0 0.0
    %2469 = vmatpush2.msra.mxu0 %v456
    %2470 = vmatprep.mubr.f32.mxu0 %v2302
    %2471 = vmatmul.mubr.f32.gmra.mxu0 %v2301
    %v2472 = vpop.f32.mrf.mxu0
    %v2473 = vadd.f32 %v2388, %v2472
    %v2474 = vpop.f32.mrf.mxu0
    %2475 = vmatprep.mubr.f32.mxu0 %v2306
    %2476 = vmatmul.mubr.f32.gmra.mxu0 %v2305
    %v2477 = vpop.f32.mrf.mxu0
    %v2478 = vadd.f32 %v2393, %v2477
    %v2479 = vpop.f32.mrf.mxu0
    %2480 = vmatprep.mubr.f32.mxu0 %v2310
    %2481 = vmatmul.mubr.f32.gmra.mxu0 %v2309
    %v2482 = vpop.f32.mrf.mxu0
    %v2483 = vadd.f32 %v2398, %v2482
    %v2484 = vpop.f32.mrf.mxu0
    %2485 = vmatprep.mubr.f32.mxu0 %v2314
    %2486 = vmatmul.mubr.f32.gmra.mxu0 %v2313
    %v2487 = vpop.f32.mrf.mxu0
    %v2488 = vadd.f32 %v2403, %v2487
    %v2489 = vpop.f32.mrf.mxu0
    %2490 = vdwg.mxu0
    %v2491 = vadd.f32 %v1968, %v2473
    %v2492 = vadd.f32 %v1969, %v2478
    %v2493 = vadd.f32 %v1970, %v2483
    %v2494 = vadd.f32 %v1971, %v2488
    %2495 = vadd.xlane.f32.xlu0 %v2491
    %v2496 = vpop.xlane.xlu0 %2495
    %2497 = vadd.xlane.f32.xlu0 %v2492
    %v2498 = vpop.xlane.xlu0 %2497
    %2499 = vadd.xlane.f32.xlu0 %v2493
    %v2500 = vpop.xlane.xlu0 %2499
    %2501 = vadd.xlane.f32.xlu0 %v2494
    %v2502 = vpop.xlane.xlu0 %2501
    %v2503 = vmul.f32 %v2496, %v736
    %v2504 = vmul.f32 %v2498, %v736
    %v2505 = vmul.f32 %v2500, %v736
    %v2506 = vmul.f32 %v2502, %v736
    %v2507 = vsub.f32 %v2491, %v2503
    %v2508 = vsub.f32 %v2492, %v2504
    %v2509 = vsub.f32 %v2493, %v2505
    %v2510 = vsub.f32 %v2494, %v2506
    %v2511 = vmul.f32 %v2507, %v2507
    %v2512 = vmul.f32 %v2508, %v2508
    %v2513 = vmul.f32 %v2509, %v2509
    %v2514 = vmul.f32 %v2510, %v2510
    %2515 = vadd.xlane.f32.xlu0 %v2511
    %v2516 = vpop.xlane.xlu0 %2515
    %2517 = vadd.xlane.f32.xlu0 %v2512
    %v2518 = vpop.xlane.xlu0 %2517
    %2519 = vadd.xlane.f32.xlu0 %v2513
    %v2520 = vpop.xlane.xlu0 %2519
    %2521 = vadd.xlane.f32.xlu0 %v2514
    %v2522 = vpop.xlane.xlu0 %2521
    %v2523 = vmul.f32 %v2516, %v736
    %v2524 = vmul.f32 %v2518, %v736
    %v2525 = vmul.f32 %v2520, %v736
    %v2526 = vmul.f32 %v2522, %v736
    %v2527 = vadd.f32 %v2523, 1e-12
    %v2528 = vadd.f32 %v2524, 1e-12
    %v2529 = vadd.f32 %v2525, 1e-12
    %v2530 = vadd.f32 %v2526, 1e-12
    %v2531 = vrsqrt.pop %v2527
    %v2532 = vrsqrt.pop %v2528
    %v2533 = vrsqrt.pop %v2529
    %v2534 = vrsqrt.pop %v2530
    %v2535 = vmul.f32 %v2507, %v2531
    %v2536 = vmul.f32 %v2508, %v2532
    %v2537 = vmul.f32 %v2509, %v2533
    %v2538 = vmul.f32 %v2510, %v2534
    %v2540 = vlaneseq
    %v2541 = vshrl.u32 %v2540, 7
    %v2542 = vsub.s32 0, %v2541
    %v2543 = vrot.slane %v473, %v2542
    %v2545 = vmul.f32 %v2535, %v2543
    %v2546 = vmul.f32 %v2536, %v2543
    %v2547 = vmul.f32 %v2537, %v2543
    %v2548 = vmul.f32 %v2538, %v2543
    %v2550 = vlaneseq
    %v2551 = vshrl.u32 %v2550, 7
    %v2552 = vsub.s32 0, %v2551
    %v2553 = vrot.slane %v474, %v2552
    %v2555 = vadd.f32 %v2545, %v2553
    %v2556 = vadd.f32 %v2546, %v2553
    %v2557 = vadd.f32 %v2547, %v2553
    %v2558 = vadd.f32 %v2548, %v2553
    %v2560 = vlaneseq
    %v2561 = vshrl.u32 %v2560, 7
    %v2562 = vsub.s32 0, %v2561
    %v2563 = vrot.slane %v525, %v2562
    %v2564 = vlaneseq
    %v2565 = vshrl.u32 %v2564, 7
    %v2566 = vsub.s32 1, %v2565
    %v2567 = vrot.slane %v525, %v2566
    %v2568 = vlaneseq
    %v2569 = vshrl.u32 %v2568, 7
    %v2570 = vsub.s32 2, %v2569
    %v2571 = vrot.slane %v525, %v2570
    %2575 = vmatprep.subr.mxu0 %v522
    %2576 = vmatpush1.msra.mxu0 %v521
    %2577 = vmatprep.subr.mxu0 %v519
    %2578 = vmatpush1.msra.mxu0 %v518
    %2579 = vmatprep.subr.mxu0 %v516
    %2580 = vmatpush1.msra.mxu0 %v515
    %2581 = vmatprep.subr.mxu0 %v513
    %2582 = vmatpush1.msra.mxu0 %v512
    %2583 = vmatprep.subr.mxu0 %v510
    %2584 = vmatpush1.msra.mxu0 %v509
    %2585 = vmatprep.subr.mxu0 %v507
    %2586 = vmatpush1.msra.mxu0 %v506
    %2587 = vmatprep.subr.mxu0 %v504
    %2588 = vmatpush1.msra.mxu0 %v503
    %2589 = vmatprep.subr.mxu0 %v501
    %2590 = vmatpush1.msra.mxu0 %v500
    %2591 = vmatprep.subr.mxu0 %v498
    %2592 = vmatpush1.msra.mxu0 %v497
    %2593 = vmatprep.subr.mxu0 %v495
    %2594 = vmatpush1.msra.mxu0 %v494
    %2595 = vmatprep.subr.mxu0 %v492
    %2596 = vmatpush1.msra.mxu0 %v491
    %2597 = vmatprep.subr.mxu0 %v489
    %2598 = vmatpush1.msra.mxu0 %v488
    %2599 = vmatprep.subr.mxu0 %v486
    %2600 = vmatpush1.msra.mxu0 %v485
    %2601 = vmatprep.subr.mxu0 %v483
    %2602 = vmatpush1.msra.mxu0 %v482
    %2603 = vmatprep.subr.mxu0 %v480
    %2604 = vmatpush1.msra.mxu0 %v479
    %2605 = vmatprep.subr.mxu0 %v477
    %2606 = vmatpush1.msra.mxu0 %v476
    %2607 = vmatprep.subr.mxu0 0.0
    %2608 = vmatpush2.msra.mxu0 0.0
    %2609 = vmatprep.subr.mxu0 0.0
    %2610 = vmatpush2.msra.mxu0 0.0
    %2611 = vmatprep.subr.mxu0 0.0
    %2612 = vmatpush2.msra.mxu0 0.0
    %2613 = vmatprep.subr.mxu0 0.0
    %2614 = vmatpush2.msra.mxu0 0.0
    %2615 = vmatprep.subr.mxu0 0.0
    %2616 = vmatpush2.msra.mxu0 0.0
    %2617 = vmatprep.subr.mxu0 0.0
    %2618 = vmatpush2.msra.mxu0 0.0
    %2619 = vmatprep.subr.mxu0 0.0
    %2620 = vmatpush2.msra.mxu0 0.0
    %2621 = vmatprep.subr.mxu0 0.0
    %2622 = vmatpush2.msra.mxu0 0.0
    %2623 = vmatprep.subr.mxu0 0.0
    %2624 = vmatpush2.msra.mxu0 0.0
    %2625 = vmatprep.subr.mxu0 0.0
    %2626 = vmatpush2.msra.mxu0 0.0
    %2627 = vmatprep.subr.mxu0 0.0
    %2628 = vmatpush2.msra.mxu0 0.0
    %2629 = vmatprep.subr.mxu0 0.0
    %2630 = vmatpush2.msra.mxu0 0.0
    %2631 = vmatprep.subr.mxu0 0.0
    %2632 = vmatpush2.msra.mxu0 0.0
    %2633 = vmatprep.subr.mxu0 0.0
    %2634 = vmatpush2.msra.mxu0 0.0
    %2635 = vmatprep.subr.mxu0 0.0
    %2636 = vmatpush2.msra.mxu0 0.0
    %2637 = vmatprep.subr.mxu0 0.0
    %2638 = vmatpush2.msra.mxu0 0.0
    %2639 = vmatprep.mubr.f32.mxu0 0.0
    %2640 = vmatmul.mubr.f32.gmra.mxu0 %v2555
    %v2641 = vpop.f32.mrf.mxu0
    %v2642 = vadd.f32 %v2563, %v2641
    %v2643 = vpop.f32.mrf.mxu0
    %v2644 = vadd.f32 %v2567, %v2643
    %2645 = vmatprep.mubr.f32.mxu0 0.0
    %2646 = vmatmul.mubr.f32.gmra.mxu0 %v2556
    %v2647 = vpop.f32.mrf.mxu0
    %v2648 = vadd.f32 %v2563, %v2647
    %v2649 = vpop.f32.mrf.mxu0
    %v2650 = vadd.f32 %v2567, %v2649
    %2651 = vmatprep.mubr.f32.mxu0 0.0
    %2652 = vmatmul.mubr.f32.gmra.mxu0 %v2557
    %v2653 = vpop.f32.mrf.mxu0
    %v2654 = vadd.f32 %v2563, %v2653
    %v2655 = vpop.f32.mrf.mxu0
    %v2656 = vadd.f32 %v2567, %v2655
    %2657 = vmatprep.mubr.f32.mxu0 0.0
    %2658 = vmatmul.mubr.f32.gmra.mxu0 %v2558
    %v2659 = vpop.f32.mrf.mxu0
    %v2660 = vadd.f32 %v2563, %v2659
    %v2661 = vpop.f32.mrf.mxu0
    %v2662 = vadd.f32 %v2567, %v2661
    %2663 = vdwg.mxu0
    %2664 = vmatprep.subr.mxu0 0.0
    %2665 = vmatpush1.msra.mxu0 %v523
    %2666 = vmatprep.subr.mxu0 0.0
    %2667 = vmatpush1.msra.mxu0 %v520
    %2668 = vmatprep.subr.mxu0 0.0
    %2669 = vmatpush1.msra.mxu0 %v517
    %2670 = vmatprep.subr.mxu0 0.0
    %2671 = vmatpush1.msra.mxu0 %v514
    %2672 = vmatprep.subr.mxu0 0.0
    %2673 = vmatpush1.msra.mxu0 %v511
    %2674 = vmatprep.subr.mxu0 0.0
    %2675 = vmatpush1.msra.mxu0 %v508
    %2676 = vmatprep.subr.mxu0 0.0
    %2677 = vmatpush1.msra.mxu0 %v505
    %2678 = vmatprep.subr.mxu0 0.0
    %2679 = vmatpush1.msra.mxu0 %v502
    %2680 = vmatprep.subr.mxu0 0.0
    %2681 = vmatpush1.msra.mxu0 %v499
    %2682 = vmatprep.subr.mxu0 0.0
    %2683 = vmatpush1.msra.mxu0 %v496
    %2684 = vmatprep.subr.mxu0 0.0
    %2685 = vmatpush1.msra.mxu0 %v493
    %2686 = vmatprep.subr.mxu0 0.0
    %2687 = vmatpush1.msra.mxu0 %v490
    %2688 = vmatprep.subr.mxu0 0.0
    %2689 = vmatpush1.msra.mxu0 %v487
    %2690 = vmatprep.subr.mxu0 0.0
    %2691 = vmatpush1.msra.mxu0 %v484
    %2692 = vmatprep.subr.mxu0 0.0
    %2693 = vmatpush1.msra.mxu0 %v481
    %2694 = vmatprep.subr.mxu0 0.0
    %2695 = vmatpush1.msra.mxu0 %v478
    %2696 = vmatprep.subr.mxu0 0.0
    %2697 = vmatpush2.msra.mxu0 0.0
    %2698 = vmatprep.subr.mxu0 0.0
    %2699 = vmatpush2.msra.mxu0 0.0
    %2700 = vmatprep.subr.mxu0 0.0
    %2701 = vmatpush2.msra.mxu0 0.0
    %2702 = vmatprep.subr.mxu0 0.0
    %2703 = vmatpush2.msra.mxu0 0.0
    %2704 = vmatprep.subr.mxu0 0.0
    %2705 = vmatpush2.msra.mxu0 0.0
    %2706 = vmatprep.subr.mxu0 0.0
    %2707 = vmatpush2.msra.mxu0 0.0
    %2708 = vmatprep.subr.mxu0 0.0
    %2709 = vmatpush2.msra.mxu0 0.0
    %2710 = vmatprep.subr.mxu0 0.0
    %2711 = vmatpush2.msra.mxu0 0.0
    %2712 = vmatprep.subr.mxu0 0.0
    %2713 = vmatpush2.msra.mxu0 0.0
    %2714 = vmatprep.subr.mxu0 0.0
    %2715 = vmatpush2.msra.mxu0 0.0
    %2716 = vmatprep.subr.mxu0 0.0
    %2717 = vmatpush2.msra.mxu0 0.0
    %2718 = vmatprep.subr.mxu0 0.0
    %2719 = vmatpush2.msra.mxu0 0.0
    %2720 = vmatprep.subr.mxu0 0.0
    %2721 = vmatpush2.msra.mxu0 0.0
    %2722 = vmatprep.subr.mxu0 0.0
    %2723 = vmatpush2.msra.mxu0 0.0
    %2724 = vmatprep.subr.mxu0 0.0
    %2725 = vmatpush2.msra.mxu0 0.0
    %2726 = vmatprep.subr.mxu0 0.0
    %2727 = vmatpush2.msra.mxu0 0.0
    %2728 = vmatprep.mubr.f32.mxu0 0.0
    %2729 = vmatmul.mubr.f32.gmra.mxu0 %v2555
    %v2730 = vpop.f32.mrf.mxu0
    %v2731 = vadd.f32 %v2571, %v2730
    %v2732 = vpop.f32.mrf.mxu0
    %2733 = vmatprep.mubr.f32.mxu0 0.0
    %2734 = vmatmul.mubr.f32.gmra.mxu0 %v2556
    %v2735 = vpop.f32.mrf.mxu0
    %v2736 = vadd.f32 %v2571, %v2735
    %v2737 = vpop.f32.mrf.mxu0
    %2738 = vmatprep.mubr.f32.mxu0 0.0
    %2739 = vmatmul.mubr.f32.gmra.mxu0 %v2557
    %v2740 = vpop.f32.mrf.mxu0
    %v2741 = vadd.f32 %v2571, %v2740
    %v2742 = vpop.f32.mrf.mxu0
    %2743 = vmatprep.mubr.f32.mxu0 0.0
    %2744 = vmatmul.mubr.f32.gmra.mxu0 %v2558
    %v2745 = vpop.f32.mrf.mxu0
    %v2746 = vadd.f32 %v2571, %v2745
    %v2747 = vpop.f32.mrf.mxu0
    %2748 = vdwg.mxu0
    %v2750 = vsel %vm983, %v2642, 0
    %v2753 = vsel %vm983, %v2648, 0
    %v2756 = vsel %vm983, %v2644, 0
    %v2759 = vsel %vm983, %v2650, 0
    %2761 = vmatprep.subr.mxu0 0.0
    %2762 = vmatpush1.xpose.msra.mxu0 0.0
    %2763 = vmatprep.subr.mxu0 0.0
    %2764 = vmatpush1.xpose.msra.mxu0 0.0
    %2765 = vmatprep.subr.mxu0 0.0
    %2766 = vmatpush1.xpose.msra.mxu0 0.0
    %2767 = vmatprep.subr.mxu0 0.0
    %2768 = vmatpush1.xpose.msra.mxu0 0.0
    %2769 = vmatprep.subr.mxu0 0.0
    %2770 = vmatpush1.xpose.msra.mxu0 0.0
    %2771 = vmatprep.subr.mxu0 0.0
    %2772 = vmatpush1.xpose.msra.mxu0 0.0
    %2773 = vmatprep.subr.mxu0 0.0
    %2774 = vmatpush1.xpose.msra.mxu0 0.0
    %2775 = vmatprep.subr.mxu0 0.0
    %2776 = vmatpush1.xpose.msra.mxu0 0.0
    %2777 = vmatprep.subr.mxu0 0.0
    %2778 = vmatpush1.xpose.msra.mxu0 0.0
    %2779 = vmatprep.subr.mxu0 0.0
    %2780 = vmatpush1.xpose.msra.mxu0 0.0
    %2781 = vmatprep.subr.mxu0 0.0
    %2782 = vmatpush1.xpose.msra.mxu0 0.0
    %2783 = vmatprep.subr.mxu0 0.0
    %2784 = vmatpush1.xpose.msra.mxu0 0.0
    %2785 = vmatprep.subr.mxu0 0.0
    %2786 = vmatpush1.xpose.msra.mxu0 0.0
    %2787 = vmatprep.subr.mxu0 0.0
    %2788 = vmatpush1.xpose.msra.mxu0 0.0
    %2789 = vmatprep.subr.mxu0 0.0
    %2790 = vmatpush1.xpose.msra.mxu0 %v2759
    %2791 = vmatprep.subr.mxu0 0.0
    %2792 = vmatpush1.xpose.msra.mxu0 %v2756
    %2793 = vmatprep.subr.mxu0 0.0
    %2794 = vmatpush2.xpose.msra.mxu0 0.0
    %2795 = vmatprep.subr.mxu0 0.0
    %2796 = vmatpush2.xpose.msra.mxu0 0.0
    %2797 = vmatprep.subr.mxu0 0.0
    %2798 = vmatpush2.xpose.msra.mxu0 0.0
    %2799 = vmatprep.subr.mxu0 0.0
    %2800 = vmatpush2.xpose.msra.mxu0 0.0
    %2801 = vmatprep.subr.mxu0 0.0
    %2802 = vmatpush2.xpose.msra.mxu0 0.0
    %2803 = vmatprep.subr.mxu0 0.0
    %2804 = vmatpush2.xpose.msra.mxu0 0.0
    %2805 = vmatprep.subr.mxu0 0.0
    %2806 = vmatpush2.xpose.msra.mxu0 0.0
    %2807 = vmatprep.subr.mxu0 0.0
    %2808 = vmatpush2.xpose.msra.mxu0 0.0
    %2809 = vmatprep.subr.mxu0 0.0
    %2810 = vmatpush2.xpose.msra.mxu0 0.0
    %2811 = vmatprep.subr.mxu0 0.0
    %2812 = vmatpush2.xpose.msra.mxu0 0.0
    %2813 = vmatprep.subr.mxu0 0.0
    %2814 = vmatpush2.xpose.msra.mxu0 0.0
    %2815 = vmatprep.subr.mxu0 0.0
    %2816 = vmatpush2.xpose.msra.mxu0 0.0
    %2817 = vmatprep.subr.mxu0 0.0
    %2818 = vmatpush2.xpose.msra.mxu0 0.0
    %2819 = vmatprep.subr.mxu0 0.0
    %2820 = vmatpush2.xpose.msra.mxu0 0.0
    %2821 = vmatprep.subr.mxu0 0.0
    %2822 = vmatpush2.xpose.msra.mxu0 0.0
    %2823 = vmatprep.subr.mxu0 0.0
    %2824 = vmatpush2.xpose.msra.mxu0 0.0
    %2825 = vmatprep.mubr.f32.mxu0 0.0
    %2826 = vmatmul.mubr.f32.gmra.mxu0 %v2750
    %v2827 = vpop.f32.mrf.mxu0
    %v2828 = vadd.f32 0.0, %v2827
    %v2829 = vpop.f32.mrf.mxu0
    %2830 = vmatprep.mubr.f32.mxu0 0.0
    %2831 = vmatmul.mubr.f32.gmra.mxu0 %v2753
    %v2832 = vpop.f32.mrf.mxu0
    %v2833 = vadd.f32 0.0, %v2832
    %v2834 = vpop.f32.mrf.mxu0
    %2835 = vdwg.mxu0
    %v2836 = vmul.f32 %v2828, 0.125
    %v2837 = vmul.f32 %v2833, 0.125
    %v2838 = vadd.f32 %v2836, %v1076
    %v2839 = vadd.f32 %v2837, %v1076
    %v2840 = vsel %vm1079, %v2838, -inf
    %2841 = vmax.xlane.f32.xlu0 %v2840
    %v2842 = vpop.xlane.xlu0 %2841
    %v2843 = vsel %vm1079, %v2839, -inf
    %2844 = vmax.xlane.f32.xlu0 %v2843
    %v2845 = vpop.xlane.xlu0 %2844
    %v2846 = vsub.f32 %v2838, %v2842
    %v2847 = vsub.f32 %v2839, %v2845
    %v2848 = vmul.f32 %v2846, 1.442695
    %v2849 = vpow.pop %v2848
    %v2850 = vmul.f32 %v2847, 1.442695
    %v2851 = vpow.pop %v2850
    %v2852 = vsel %vm1079, %v2849, 0.0
    %2853 = vadd.xlane.f32.xlu0 %v2852
    %v2854 = vpop.xlane.xlu0 %2853
    %v2855 = vsel %vm1079, %v2851, 0.0
    %2856 = vadd.xlane.f32.xlu0 %v2855
    %v2857 = vpop.xlane.xlu0 %2856
    %v2858 = vrcp.pop %v2854
    %v2859 = vmul.f32 %v2849, %v2858
    %v2860 = vrcp.pop %v2857
    %v2861 = vmul.f32 %v2851, %v2860
    %v2863 = vsel %vm1079, %v2859, 0
    %v2866 = vsel %vm1079, %v2861, 0
    %2868 = vmatprep.subr.mxu0 0.0
    %2869 = vmatpush1.msra.mxu0 0.0
    %2870 = vmatprep.subr.mxu0 0.0
    %2871 = vmatpush1.msra.mxu0 0.0
    %2872 = vmatprep.subr.mxu0 0.0
    %2873 = vmatpush1.msra.mxu0 0.0
    %2874 = vmatprep.subr.mxu0 0.0
    %2875 = vmatpush1.msra.mxu0 0.0
    %2876 = vmatprep.subr.mxu0 0.0
    %2877 = vmatpush1.msra.mxu0 0.0
    %2878 = vmatprep.subr.mxu0 0.0
    %2879 = vmatpush1.msra.mxu0 0.0
    %2880 = vmatprep.subr.mxu0 0.0
    %2881 = vmatpush1.msra.mxu0 0.0
    %2882 = vmatprep.subr.mxu0 0.0
    %2883 = vmatpush1.msra.mxu0 0.0
    %2884 = vmatprep.subr.mxu0 0.0
    %2885 = vmatpush1.msra.mxu0 0.0
    %2886 = vmatprep.subr.mxu0 0.0
    %2887 = vmatpush1.msra.mxu0 0.0
    %2888 = vmatprep.subr.mxu0 0.0
    %2889 = vmatpush1.msra.mxu0 0.0
    %2890 = vmatprep.subr.mxu0 0.0
    %2891 = vmatpush1.msra.mxu0 0.0
    %2892 = vmatprep.subr.mxu0 0.0
    %2893 = vmatpush1.msra.mxu0 0.0
    %2894 = vmatprep.subr.mxu0 0.0
    %2895 = vmatpush1.msra.mxu0 0.0
    %2896 = vmatprep.subr.mxu0 0.0
    %2897 = vmatpush1.msra.mxu0 %v2736
    %2898 = vmatprep.subr.mxu0 0.0
    %2899 = vmatpush1.msra.mxu0 %v2731
    %2900 = vmatprep.subr.mxu0 0.0
    %2901 = vmatpush2.msra.mxu0 0.0
    %2902 = vmatprep.subr.mxu0 0.0
    %2903 = vmatpush2.msra.mxu0 0.0
    %2904 = vmatprep.subr.mxu0 0.0
    %2905 = vmatpush2.msra.mxu0 0.0
    %2906 = vmatprep.subr.mxu0 0.0
    %2907 = vmatpush2.msra.mxu0 0.0
    %2908 = vmatprep.subr.mxu0 0.0
    %2909 = vmatpush2.msra.mxu0 0.0
    %2910 = vmatprep.subr.mxu0 0.0
    %2911 = vmatpush2.msra.mxu0 0.0
    %2912 = vmatprep.subr.mxu0 0.0
    %2913 = vmatpush2.msra.mxu0 0.0
    %2914 = vmatprep.subr.mxu0 0.0
    %2915 = vmatpush2.msra.mxu0 0.0
    %2916 = vmatprep.subr.mxu0 0.0
    %2917 = vmatpush2.msra.mxu0 0.0
    %2918 = vmatprep.subr.mxu0 0.0
    %2919 = vmatpush2.msra.mxu0 0.0
    %2920 = vmatprep.subr.mxu0 0.0
    %2921 = vmatpush2.msra.mxu0 0.0
    %2922 = vmatprep.subr.mxu0 0.0
    %2923 = vmatpush2.msra.mxu0 0.0
    %2924 = vmatprep.subr.mxu0 0.0
    %2925 = vmatpush2.msra.mxu0 0.0
    %2926 = vmatprep.subr.mxu0 0.0
    %2927 = vmatpush2.msra.mxu0 0.0
    %2928 = vmatprep.subr.mxu0 0.0
    %2929 = vmatpush2.msra.mxu0 0.0
    %2930 = vmatprep.subr.mxu0 0.0
    %2931 = vmatpush2.msra.mxu0 0.0
    %2932 = vmatprep.mubr.f32.mxu0 0.0
    %2933 = vmatmul.mubr.f32.gmra.mxu0 %v2863
    %v2934 = vpop.f32.mrf.mxu0
    %v2935 = vadd.f32 0.0, %v2934
    %v2936 = vpop.f32.mrf.mxu0
    %2937 = vmatprep.mubr.f32.mxu0 0.0
    %2938 = vmatmul.mubr.f32.gmra.mxu0 %v2866
    %v2939 = vpop.f32.mrf.mxu0
    %v2940 = vadd.f32 0.0, %v2939
    %v2941 = vpop.f32.mrf.mxu0
    %2942 = vdwg.mxu0
    %2943 = vrot.lane.b32.xlu0 %v2642, 64
    %v2944 = vpop.permute.xlu0 %2943
    %2945 = vrot.lane.b32.xlu0 %v2648, 64
    %v2946 = vpop.permute.xlu0 %2945
    %2947 = vrot.lane.b32.xlu0 %v2644, 64
    %v2948 = vpop.permute.xlu0 %2947
    %2949 = vrot.lane.b32.xlu0 %v2650, 64
    %v2950 = vpop.permute.xlu0 %2949
    %v2951 = vsel %vm983, %v2944, 0
    %v2953 = vsel %vm983, %v2946, 0
    %v2955 = vsel %vm983, %v2948, 0
    %v2957 = vsel %vm983, %v2950, 0
    %2959 = vmatprep.subr.mxu0 0.0
    %2960 = vmatpush1.xpose.msra.mxu0 0.0
    %2961 = vmatprep.subr.mxu0 0.0
    %2962 = vmatpush1.xpose.msra.mxu0 0.0
    %2963 = vmatprep.subr.mxu0 0.0
    %2964 = vmatpush1.xpose.msra.mxu0 0.0
    %2965 = vmatprep.subr.mxu0 0.0
    %2966 = vmatpush1.xpose.msra.mxu0 0.0
    %2967 = vmatprep.subr.mxu0 0.0
    %2968 = vmatpush1.xpose.msra.mxu0 0.0
    %2969 = vmatprep.subr.mxu0 0.0
    %2970 = vmatpush1.xpose.msra.mxu0 0.0
    %2971 = vmatprep.subr.mxu0 0.0
    %2972 = vmatpush1.xpose.msra.mxu0 0.0
    %2973 = vmatprep.subr.mxu0 0.0
    %2974 = vmatpush1.xpose.msra.mxu0 0.0
    %2975 = vmatprep.subr.mxu0 0.0
    %2976 = vmatpush1.xpose.msra.mxu0 0.0
    %2977 = vmatprep.subr.mxu0 0.0
    %2978 = vmatpush1.xpose.msra.mxu0 0.0
    %2979 = vmatprep.subr.mxu0 0.0
    %2980 = vmatpush1.xpose.msra.mxu0 0.0
    %2981 = vmatprep.subr.mxu0 0.0
    %2982 = vmatpush1.xpose.msra.mxu0 0.0
    %2983 = vmatprep.subr.mxu0 0.0
    %2984 = vmatpush1.xpose.msra.mxu0 0.0
    %2985 = vmatprep.subr.mxu0 0.0
    %2986 = vmatpush1.xpose.msra.mxu0 0.0
    %2987 = vmatprep.subr.mxu0 0.0
    %2988 = vmatpush1.xpose.msra.mxu0 %v2957
    %2989 = vmatprep.subr.mxu0 0.0
    %2990 = vmatpush1.xpose.msra.mxu0 %v2955
    %2991 = vmatprep.subr.mxu0 0.0
    %2992 = vmatpush2.xpose.msra.mxu0 0.0
    %2993 = vmatprep.subr.mxu0 0.0
    %2994 = vmatpush2.xpose.msra.mxu0 0.0
    %2995 = vmatprep.subr.mxu0 0.0
    %2996 = vmatpush2.xpose.msra.mxu0 0.0
    %2997 = vmatprep.subr.mxu0 0.0
    %2998 = vmatpush2.xpose.msra.mxu0 0.0
    %2999 = vmatprep.subr.mxu0 0.0
    %3000 = vmatpush2.xpose.msra.mxu0 0.0
    %3001 = vmatprep.subr.mxu0 0.0
    %3002 = vmatpush2.xpose.msra.mxu0 0.0
    %3003 = vmatprep.subr.mxu0 0.0
    %3004 = vmatpush2.xpose.msra.mxu0 0.0
    %3005 = vmatprep.subr.mxu0 0.0
    %3006 = vmatpush2.xpose.msra.mxu0 0.0
    %3007 = vmatprep.subr.mxu0 0.0
    %3008 = vmatpush2.xpose.msra.mxu0 0.0
    %3009 = vmatprep.subr.mxu0 0.0
    %3010 = vmatpush2.xpose.msra.mxu0 0.0
    %3011 = vmatprep.subr.mxu0 0.0
    %3012 = vmatpush2.xpose.msra.mxu0 0.0
    %3013 = vmatprep.subr.mxu0 0.0
    %3014 = vmatpush2.xpose.msra.mxu0 0.0
    %3015 = vmatprep.subr.mxu0 0.0
    %3016 = vmatpush2.xpose.msra.mxu0 0.0
    %3017 = vmatprep.subr.mxu0 0.0
    %3018 = vmatpush2.xpose.msra.mxu0 0.0
    %3019 = vmatprep.subr.mxu0 0.0
    %3020 = vmatpush2.xpose.msra.mxu0 0.0
    %3021 = vmatprep.subr.mxu0 0.0
    %3022 = vmatpush2.xpose.msra.mxu0 0.0
    %3023 = vmatprep.mubr.f32.mxu0 0.0
    %3024 = vmatmul.mubr.f32.gmra.mxu0 %v2951
    %v3025 = vpop.f32.mrf.mxu0
    %v3026 = vadd.f32 0.0, %v3025
    %v3027 = vpop.f32.mrf.mxu0
    %3028 = vmatprep.mubr.f32.mxu0 0.0
    %3029 = vmatmul.mubr.f32.gmra.mxu0 %v2953
    %v3030 = vpop.f32.mrf.mxu0
    %v3031 = vadd.f32 0.0, %v3030
    %v3032 = vpop.f32.mrf.mxu0
    %3033 = vdwg.mxu0
    %v3034 = vmul.f32 %v3026, 0.125
    %v3035 = vmul.f32 %v3031, 0.125
    %v3036 = vadd.f32 %v3034, %v1076
    %v3037 = vadd.f32 %v3035, %v1076
    %v3038 = vsel %vm1079, %v3036, -inf
    %3039 = vmax.xlane.f32.xlu0 %v3038
    %v3040 = vpop.xlane.xlu0 %3039
    %v3041 = vsel %vm1079, %v3037, -inf
    %3042 = vmax.xlane.f32.xlu0 %v3041
    %v3043 = vpop.xlane.xlu0 %3042
    %v3044 = vsub.f32 %v3036, %v3040
    %v3045 = vsub.f32 %v3037, %v3043
    %v3046 = vmul.f32 %v3044, 1.442695
    %v3047 = vpow.pop %v3046
    %v3048 = vmul.f32 %v3045, 1.442695
    %v3049 = vpow.pop %v3048
    %v3050 = vsel %vm1079, %v3047, 0.0
    %3051 = vadd.xlane.f32.xlu0 %v3050
    %v3052 = vpop.xlane.xlu0 %3051
    %v3053 = vsel %vm1079, %v3049, 0.0
    %3054 = vadd.xlane.f32.xlu0 %v3053
    %v3055 = vpop.xlane.xlu0 %3054
    %v3056 = vrcp.pop %v3052
    %v3057 = vmul.f32 %v3047, %v3056
    %v3058 = vrcp.pop %v3055
    %v3059 = vmul.f32 %v3049, %v3058
    %3062 = vrot.lane.b32.xlu0 %v2731, 64
    %v3063 = vpop.permute.xlu0 %3062
    %3064 = vrot.lane.b32.xlu0 %v2736, 64
    %v3065 = vpop.permute.xlu0 %3064
    %v3069 = vsel %vm1079, %v3057, 0
    %v3072 = vsel %vm1079, %v3059, 0
    %3074 = vmatprep.subr.mxu0 0.0
    %3075 = vmatpush1.msra.mxu0 0.0
    %3076 = vmatprep.subr.mxu0 0.0
    %3077 = vmatpush1.msra.mxu0 0.0
    %3078 = vmatprep.subr.mxu0 0.0
    %3079 = vmatpush1.msra.mxu0 0.0
    %3080 = vmatprep.subr.mxu0 0.0
    %3081 = vmatpush1.msra.mxu0 0.0
    %3082 = vmatprep.subr.mxu0 0.0
    %3083 = vmatpush1.msra.mxu0 0.0
    %3084 = vmatprep.subr.mxu0 0.0
    %3085 = vmatpush1.msra.mxu0 0.0
    %3086 = vmatprep.subr.mxu0 0.0
    %3087 = vmatpush1.msra.mxu0 0.0
    %3088 = vmatprep.subr.mxu0 0.0
    %3089 = vmatpush1.msra.mxu0 0.0
    %3090 = vmatprep.subr.mxu0 0.0
    %3091 = vmatpush1.msra.mxu0 0.0
    %3092 = vmatprep.subr.mxu0 0.0
    %3093 = vmatpush1.msra.mxu0 0.0
    %3094 = vmatprep.subr.mxu0 0.0
    %3095 = vmatpush1.msra.mxu0 0.0
    %3096 = vmatprep.subr.mxu0 0.0
    %3097 = vmatpush1.msra.mxu0 0.0
    %3098 = vmatprep.subr.mxu0 0.0
    %3099 = vmatpush1.msra.mxu0 0.0
    %3100 = vmatprep.subr.mxu0 0.0
    %3101 = vmatpush1.msra.mxu0 0.0
    %3102 = vmatprep.subr.mxu0 0.0
    %3103 = vmatpush1.msra.mxu0 %v3065
    %3104 = vmatprep.subr.mxu0 0.0
    %3105 = vmatpush1.msra.mxu0 %v3063
    %3106 = vmatprep.subr.mxu0 0.0
    %3107 = vmatpush2.msra.mxu0 0.0
    %3108 = vmatprep.subr.mxu0 0.0
    %3109 = vmatpush2.msra.mxu0 0.0
    %3110 = vmatprep.subr.mxu0 0.0
    %3111 = vmatpush2.msra.mxu0 0.0
    %3112 = vmatprep.subr.mxu0 0.0
    %3113 = vmatpush2.msra.mxu0 0.0
    %3114 = vmatprep.subr.mxu0 0.0
    %3115 = vmatpush2.msra.mxu0 0.0
    %3116 = vmatprep.subr.mxu0 0.0
    %3117 = vmatpush2.msra.mxu0 0.0
    %3118 = vmatprep.subr.mxu0 0.0
    %3119 = vmatpush2.msra.mxu0 0.0
    %3120 = vmatprep.subr.mxu0 0.0
    %3121 = vmatpush2.msra.mxu0 0.0
    %3122 = vmatprep.subr.mxu0 0.0
    %3123 = vmatpush2.msra.mxu0 0.0
    %3124 = vmatprep.subr.mxu0 0.0
    %3125 = vmatpush2.msra.mxu0 0.0
    %3126 = vmatprep.subr.mxu0 0.0
    %3127 = vmatpush2.msra.mxu0 0.0
    %3128 = vmatprep.subr.mxu0 0.0
    %3129 = vmatpush2.msra.mxu0 0.0
    %3130 = vmatprep.subr.mxu0 0.0
    %3131 = vmatpush2.msra.mxu0 0.0
    %3132 = vmatprep.subr.mxu0 0.0
    %3133 = vmatpush2.msra.mxu0 0.0
    %3134 = vmatprep.subr.mxu0 0.0
    %3135 = vmatpush2.msra.mxu0 0.0
    %3136 = vmatprep.subr.mxu0 0.0
    %3137 = vmatpush2.msra.mxu0 0.0
    %3138 = vmatprep.mubr.f32.mxu0 0.0
    %3139 = vmatmul.mubr.f32.gmra.mxu0 %v3069
    %v3140 = vpop.f32.mrf.mxu0
    %v3141 = vadd.f32 0.0, %v3140
    %v3142 = vpop.f32.mrf.mxu0
    %3143 = vmatprep.mubr.f32.mxu0 0.0
    %3144 = vmatmul.mubr.f32.gmra.mxu0 %v3072
    %v3145 = vpop.f32.mrf.mxu0
    %v3146 = vadd.f32 0.0, %v3145
    %v3147 = vpop.f32.mrf.mxu0
    %3148 = vdwg.mxu0
    %3151 = vrot.lane.b32.xlu0 %v3141, 64
    %v3152 = vpop.permute.xlu0 %3151
    %3153 = vrot.lane.b32.xlu0 %v3146, 64
    %v3154 = vpop.permute.xlu0 %3153
    %v3157 = vsel %vm983, %v2935, %v3152
    %v3158 = vsel %vm983, %v2940, %v3154
    %v3160 = vsel %vm983, %v2654, 0
    %v3163 = vsel %vm983, %v2660, 0
    %v3166 = vsel %vm983, %v2656, 0
    %v3169 = vsel %vm983, %v2662, 0
    %3171 = vmatprep.subr.mxu0 0.0
    %3172 = vmatpush1.xpose.msra.mxu0 0.0
    %3173 = vmatprep.subr.mxu0 0.0
    %3174 = vmatpush1.xpose.msra.mxu0 0.0
    %3175 = vmatprep.subr.mxu0 0.0
    %3176 = vmatpush1.xpose.msra.mxu0 0.0
    %3177 = vmatprep.subr.mxu0 0.0
    %3178 = vmatpush1.xpose.msra.mxu0 0.0
    %3179 = vmatprep.subr.mxu0 0.0
    %3180 = vmatpush1.xpose.msra.mxu0 0.0
    %3181 = vmatprep.subr.mxu0 0.0
    %3182 = vmatpush1.xpose.msra.mxu0 0.0
    %3183 = vmatprep.subr.mxu0 0.0
    %3184 = vmatpush1.xpose.msra.mxu0 0.0
    %3185 = vmatprep.subr.mxu0 0.0
    %3186 = vmatpush1.xpose.msra.mxu0 0.0
    %3187 = vmatprep.subr.mxu0 0.0
    %3188 = vmatpush1.xpose.msra.mxu0 0.0
    %3189 = vmatprep.subr.mxu0 0.0
    %3190 = vmatpush1.xpose.msra.mxu0 0.0
    %3191 = vmatprep.subr.mxu0 0.0
    %3192 = vmatpush1.xpose.msra.mxu0 0.0
    %3193 = vmatprep.subr.mxu0 0.0
    %3194 = vmatpush1.xpose.msra.mxu0 0.0
    %3195 = vmatprep.subr.mxu0 0.0
    %3196 = vmatpush1.xpose.msra.mxu0 0.0
    %3197 = vmatprep.subr.mxu0 0.0
    %3198 = vmatpush1.xpose.msra.mxu0 0.0
    %3199 = vmatprep.subr.mxu0 0.0
    %3200 = vmatpush1.xpose.msra.mxu0 %v3169
    %3201 = vmatprep.subr.mxu0 0.0
    %3202 = vmatpush1.xpose.msra.mxu0 %v3166
    %3203 = vmatprep.subr.mxu0 0.0
    %3204 = vmatpush2.xpose.msra.mxu0 0.0
    %3205 = vmatprep.subr.mxu0 0.0
    %3206 = vmatpush2.xpose.msra.mxu0 0.0
    %3207 = vmatprep.subr.mxu0 0.0
    %3208 = vmatpush2.xpose.msra.mxu0 0.0
    %3209 = vmatprep.subr.mxu0 0.0
    %3210 = vmatpush2.xpose.msra.mxu0 0.0
    %3211 = vmatprep.subr.mxu0 0.0
    %3212 = vmatpush2.xpose.msra.mxu0 0.0
    %3213 = vmatprep.subr.mxu0 0.0
    %3214 = vmatpush2.xpose.msra.mxu0 0.0
    %3215 = vmatprep.subr.mxu0 0.0
    %3216 = vmatpush2.xpose.msra.mxu0 0.0
    %3217 = vmatprep.subr.mxu0 0.0
    %3218 = vmatpush2.xpose.msra.mxu0 0.0
    %3219 = vmatprep.subr.mxu0 0.0
    %3220 = vmatpush2.xpose.msra.mxu0 0.0
    %3221 = vmatprep.subr.mxu0 0.0
    %3222 = vmatpush2.xpose.msra.mxu0 0.0
    %3223 = vmatprep.subr.mxu0 0.0
    %3224 = vmatpush2.xpose.msra.mxu0 0.0
    %3225 = vmatprep.subr.mxu0 0.0
    %3226 = vmatpush2.xpose.msra.mxu0 0.0
    %3227 = vmatprep.subr.mxu0 0.0
    %3228 = vmatpush2.xpose.msra.mxu0 0.0
    %3229 = vmatprep.subr.mxu0 0.0
    %3230 = vmatpush2.xpose.msra.mxu0 0.0
    %3231 = vmatprep.subr.mxu0 0.0
    %3232 = vmatpush2.xpose.msra.mxu0 0.0
    %3233 = vmatprep.subr.mxu0 0.0
    %3234 = vmatpush2.xpose.msra.mxu0 0.0
    %3235 = vmatprep.mubr.f32.mxu0 0.0
    %3236 = vmatmul.mubr.f32.gmra.mxu0 %v3160
    %v3237 = vpop.f32.mrf.mxu0
    %v3238 = vadd.f32 0.0, %v3237
    %v3239 = vpop.f32.mrf.mxu0
    %3240 = vmatprep.mubr.f32.mxu0 0.0
    %3241 = vmatmul.mubr.f32.gmra.mxu0 %v3163
    %v3242 = vpop.f32.mrf.mxu0
    %v3243 = vadd.f32 0.0, %v3242
    %v3244 = vpop.f32.mrf.mxu0
    %3245 = vdwg.mxu0
    %v3246 = vmul.f32 %v3238, 0.125
    %v3247 = vmul.f32 %v3243, 0.125
    %v3248 = vadd.f32 %v3246, %v1491
    %v3249 = vadd.f32 %v3247, %v1491
    %v3250 = vsel %vm1079, %v3248, -inf
    %3251 = vmax.xlane.f32.xlu0 %v3250
    %v3252 = vpop.xlane.xlu0 %3251
    %v3253 = vsel %vm1079, %v3249, -inf
    %3254 = vmax.xlane.f32.xlu0 %v3253
    %v3255 = vpop.xlane.xlu0 %3254
    %v3256 = vsub.f32 %v3248, %v3252
    %v3257 = vsub.f32 %v3249, %v3255
    %v3258 = vmul.f32 %v3256, 1.442695
    %v3259 = vpow.pop %v3258
    %v3260 = vmul.f32 %v3257, 1.442695
    %v3261 = vpow.pop %v3260
    %v3262 = vsel %vm1079, %v3259, 0.0
    %3263 = vadd.xlane.f32.xlu0 %v3262
    %v3264 = vpop.xlane.xlu0 %3263
    %v3265 = vsel %vm1079, %v3261, 0.0
    %3266 = vadd.xlane.f32.xlu0 %v3265
    %v3267 = vpop.xlane.xlu0 %3266
    %v3268 = vrcp.pop %v3264
    %v3269 = vmul.f32 %v3259, %v3268
    %v3270 = vrcp.pop %v3267
    %v3271 = vmul.f32 %v3261, %v3270
    %v3273 = vsel %vm1079, %v3269, 0
    %v3276 = vsel %vm1079, %v3271, 0
    %3278 = vmatprep.subr.mxu0 0.0
    %3279 = vmatpush1.msra.mxu0 0.0
    %3280 = vmatprep.subr.mxu0 0.0
    %3281 = vmatpush1.msra.mxu0 0.0
    %3282 = vmatprep.subr.mxu0 0.0
    %3283 = vmatpush1.msra.mxu0 0.0
    %3284 = vmatprep.subr.mxu0 0.0
    %3285 = vmatpush1.msra.mxu0 0.0
    %3286 = vmatprep.subr.mxu0 0.0
    %3287 = vmatpush1.msra.mxu0 0.0
    %3288 = vmatprep.subr.mxu0 0.0
    %3289 = vmatpush1.msra.mxu0 0.0
    %3290 = vmatprep.subr.mxu0 0.0
    %3291 = vmatpush1.msra.mxu0 0.0
    %3292 = vmatprep.subr.mxu0 0.0
    %3293 = vmatpush1.msra.mxu0 0.0
    %3294 = vmatprep.subr.mxu0 0.0
    %3295 = vmatpush1.msra.mxu0 0.0
    %3296 = vmatprep.subr.mxu0 0.0
    %3297 = vmatpush1.msra.mxu0 0.0
    %3298 = vmatprep.subr.mxu0 0.0
    %3299 = vmatpush1.msra.mxu0 0.0
    %3300 = vmatprep.subr.mxu0 0.0
    %3301 = vmatpush1.msra.mxu0 0.0
    %3302 = vmatprep.subr.mxu0 0.0
    %3303 = vmatpush1.msra.mxu0 0.0
    %3304 = vmatprep.subr.mxu0 0.0
    %3305 = vmatpush1.msra.mxu0 0.0
    %3306 = vmatprep.subr.mxu0 0.0
    %3307 = vmatpush1.msra.mxu0 %v2746
    %3308 = vmatprep.subr.mxu0 0.0
    %3309 = vmatpush1.msra.mxu0 %v2741
    %3310 = vmatprep.subr.mxu0 0.0
    %3311 = vmatpush2.msra.mxu0 0.0
    %3312 = vmatprep.subr.mxu0 0.0
    %3313 = vmatpush2.msra.mxu0 0.0
    %3314 = vmatprep.subr.mxu0 0.0
    %3315 = vmatpush2.msra.mxu0 0.0
    %3316 = vmatprep.subr.mxu0 0.0
    %3317 = vmatpush2.msra.mxu0 0.0
    %3318 = vmatprep.subr.mxu0 0.0
    %3319 = vmatpush2.msra.mxu0 0.0
    %3320 = vmatprep.subr.mxu0 0.0
    %3321 = vmatpush2.msra.mxu0 0.0
    %3322 = vmatprep.subr.mxu0 0.0
    %3323 = vmatpush2.msra.mxu0 0.0
    %3324 = vmatprep.subr.mxu0 0.0
    %3325 = vmatpush2.msra.mxu0 0.0
    %3326 = vmatprep.subr.mxu0 0.0
    %3327 = vmatpush2.msra.mxu0 0.0
    %3328 = vmatprep.subr.mxu0 0.0
    %3329 = vmatpush2.msra.mxu0 0.0
    %3330 = vmatprep.subr.mxu0 0.0
    %3331 = vmatpush2.msra.mxu0 0.0
    %3332 = vmatprep.subr.mxu0 0.0
    %3333 = vmatpush2.msra.mxu0 0.0
    %3334 = vmatprep.subr.mxu0 0.0
    %3335 = vmatpush2.msra.mxu0 0.0
    %3336 = vmatprep.subr.mxu0 0.0
    %3337 = vmatpush2.msra.mxu0 0.0
    %3338 = vmatprep.subr.mxu0 0.0
    %3339 = vmatpush2.msra.mxu0 0.0
    %3340 = vmatprep.subr.mxu0 0.0
    %3341 = vmatpush2.msra.mxu0 0.0
    %3342 = vmatprep.mubr.f32.mxu0 0.0
    %3343 = vmatmul.mubr.f32.gmra.mxu0 %v3273
    %v3344 = vpop.f32.mrf.mxu0
    %v3345 = vadd.f32 0.0, %v3344
    %v3346 = vpop.f32.mrf.mxu0
    %3347 = vmatprep.mubr.f32.mxu0 0.0
    %3348 = vmatmul.mubr.f32.gmra.mxu0 %v3276
    %v3349 = vpop.f32.mrf.mxu0
    %v3350 = vadd.f32 0.0, %v3349
    %v3351 = vpop.f32.mrf.mxu0
    %3352 = vdwg.mxu0
    %3353 = vrot.lane.b32.xlu0 %v2654, 64
    %v3354 = vpop.permute.xlu0 %3353
    %3355 = vrot.lane.b32.xlu0 %v2660, 64
    %v3356 = vpop.permute.xlu0 %3355
    %3357 = vrot.lane.b32.xlu0 %v2656, 64
    %v3358 = vpop.permute.xlu0 %3357
    %3359 = vrot.lane.b32.xlu0 %v2662, 64
    %v3360 = vpop.permute.xlu0 %3359
    %v3361 = vsel %vm983, %v3354, 0
    %v3363 = vsel %vm983, %v3356, 0
    %v3365 = vsel %vm983, %v3358, 0
    %v3367 = vsel %vm983, %v3360, 0
    %3369 = vmatprep.subr.mxu0 0.0
    %3370 = vmatpush1.xpose.msra.mxu0 0.0
    %3371 = vmatprep.subr.mxu0 0.0
    %3372 = vmatpush1.xpose.msra.mxu0 0.0
    %3373 = vmatprep.subr.mxu0 0.0
    %3374 = vmatpush1.xpose.msra.mxu0 0.0
    %3375 = vmatprep.subr.mxu0 0.0
    %3376 = vmatpush1.xpose.msra.mxu0 0.0
    %3377 = vmatprep.subr.mxu0 0.0
    %3378 = vmatpush1.xpose.msra.mxu0 0.0
    %3379 = vmatprep.subr.mxu0 0.0
    %3380 = vmatpush1.xpose.msra.mxu0 0.0
    %3381 = vmatprep.subr.mxu0 0.0
    %3382 = vmatpush1.xpose.msra.mxu0 0.0
    %3383 = vmatprep.subr.mxu0 0.0
    %3384 = vmatpush1.xpose.msra.mxu0 0.0
    %3385 = vmatprep.subr.mxu0 0.0
    %3386 = vmatpush1.xpose.msra.mxu0 0.0
    %3387 = vmatprep.subr.mxu0 0.0
    %3388 = vmatpush1.xpose.msra.mxu0 0.0
    %3389 = vmatprep.subr.mxu0 0.0
    %3390 = vmatpush1.xpose.msra.mxu0 0.0
    %3391 = vmatprep.subr.mxu0 0.0
    %3392 = vmatpush1.xpose.msra.mxu0 0.0
    %3393 = vmatprep.subr.mxu0 0.0
    %3394 = vmatpush1.xpose.msra.mxu0 0.0
    %3395 = vmatprep.subr.mxu0 0.0
    %3396 = vmatpush1.xpose.msra.mxu0 0.0
    %3397 = vmatprep.subr.mxu0 0.0
    %3398 = vmatpush1.xpose.msra.mxu0 %v3367
    %3399 = vmatprep.subr.mxu0 0.0
    %3400 = vmatpush1.xpose.msra.mxu0 %v3365
    %3401 = vmatprep.subr.mxu0 0.0
    %3402 = vmatpush2.xpose.msra.mxu0 0.0
    %3403 = vmatprep.subr.mxu0 0.0
    %3404 = vmatpush2.xpose.msra.mxu0 0.0
    %3405 = vmatprep.subr.mxu0 0.0
    %3406 = vmatpush2.xpose.msra.mxu0 0.0
    %3407 = vmatprep.subr.mxu0 0.0
    %3408 = vmatpush2.xpose.msra.mxu0 0.0
    %3409 = vmatprep.subr.mxu0 0.0
    %3410 = vmatpush2.xpose.msra.mxu0 0.0
    %3411 = vmatprep.subr.mxu0 0.0
    %3412 = vmatpush2.xpose.msra.mxu0 0.0
    %3413 = vmatprep.subr.mxu0 0.0
    %3414 = vmatpush2.xpose.msra.mxu0 0.0
    %3415 = vmatprep.subr.mxu0 0.0
    %3416 = vmatpush2.xpose.msra.mxu0 0.0
    %3417 = vmatprep.subr.mxu0 0.0
    %3418 = vmatpush2.xpose.msra.mxu0 0.0
    %3419 = vmatprep.subr.mxu0 0.0
    %3420 = vmatpush2.xpose.msra.mxu0 0.0
    %3421 = vmatprep.subr.mxu0 0.0
    %3422 = vmatpush2.xpose.msra.mxu0 0.0
    %3423 = vmatprep.subr.mxu0 0.0
    %3424 = vmatpush2.xpose.msra.mxu0 0.0
    %3425 = vmatprep.subr.mxu0 0.0
    %3426 = vmatpush2.xpose.msra.mxu0 0.0
    %3427 = vmatprep.subr.mxu0 0.0
    %3428 = vmatpush2.xpose.msra.mxu0 0.0
    %3429 = vmatprep.subr.mxu0 0.0
    %3430 = vmatpush2.xpose.msra.mxu0 0.0
    %3431 = vmatprep.subr.mxu0 0.0
    %3432 = vmatpush2.xpose.msra.mxu0 0.0
    %3433 = vmatprep.mubr.f32.mxu0 0.0
    %3434 = vmatmul.mubr.f32.gmra.mxu0 %v3361
    %v3435 = vpop.f32.mrf.mxu0
    %v3436 = vadd.f32 0.0, %v3435
    %v3437 = vpop.f32.mrf.mxu0
    %3438 = vmatprep.mubr.f32.mxu0 0.0
    %3439 = vmatmul.mubr.f32.gmra.mxu0 %v3363
    %v3440 = vpop.f32.mrf.mxu0
    %v3441 = vadd.f32 0.0, %v3440
    %v3442 = vpop.f32.mrf.mxu0
    %3443 = vdwg.mxu0
    %v3444 = vmul.f32 %v3436, 0.125
    %v3445 = vmul.f32 %v3441, 0.125
    %v3446 = vadd.f32 %v3444, %v1491
    %v3447 = vadd.f32 %v3445, %v1491
    %v3448 = vsel %vm1079, %v3446, -inf
    %3449 = vmax.xlane.f32.xlu0 %v3448
    %v3450 = vpop.xlane.xlu0 %3449
    %v3451 = vsel %vm1079, %v3447, -inf
    %3452 = vmax.xlane.f32.xlu0 %v3451
    %v3453 = vpop.xlane.xlu0 %3452
    %v3454 = vsub.f32 %v3446, %v3450
    %v3455 = vsub.f32 %v3447, %v3453
    %v3456 = vmul.f32 %v3454, 1.442695
    %v3457 = vpow.pop %v3456
    %v3458 = vmul.f32 %v3455, 1.442695
    %v3459 = vpow.pop %v3458
    %v3460 = vsel %vm1079, %v3457, 0.0
    %3461 = vadd.xlane.f32.xlu0 %v3460
    %v3462 = vpop.xlane.xlu0 %3461
    %v3463 = vsel %vm1079, %v3459, 0.0
    %3464 = vadd.xlane.f32.xlu0 %v3463
    %v3465 = vpop.xlane.xlu0 %3464
    %v3466 = vrcp.pop %v3462
    %v3467 = vmul.f32 %v3457, %v3466
    %v3468 = vrcp.pop %v3465
    %v3469 = vmul.f32 %v3459, %v3468
    %3472 = vrot.lane.b32.xlu0 %v2741, 64
    %v3473 = vpop.permute.xlu0 %3472
    %3474 = vrot.lane.b32.xlu0 %v2746, 64
    %v3475 = vpop.permute.xlu0 %3474
    %v3479 = vsel %vm1079, %v3467, 0
    %v3482 = vsel %vm1079, %v3469, 0
    %3484 = vmatprep.subr.mxu0 0.0
    %3485 = vmatpush1.msra.mxu0 0.0
    %3486 = vmatprep.subr.mxu0 0.0
    %3487 = vmatpush1.msra.mxu0 0.0
    %3488 = vmatprep.subr.mxu0 0.0
    %3489 = vmatpush1.msra.mxu0 0.0
    %3490 = vmatprep.subr.mxu0 0.0
    %3491 = vmatpush1.msra.mxu0 0.0
    %3492 = vmatprep.subr.mxu0 0.0
    %3493 = vmatpush1.msra.mxu0 0.0
    %3494 = vmatprep.subr.mxu0 0.0
    %3495 = vmatpush1.msra.mxu0 0.0
    %3496 = vmatprep.subr.mxu0 0.0
    %3497 = vmatpush1.msra.mxu0 0.0
    %3498 = vmatprep.subr.mxu0 0.0
    %3499 = vmatpush1.msra.mxu0 0.0
    %3500 = vmatprep.subr.mxu0 0.0
    %3501 = vmatpush1.msra.mxu0 0.0
    %3502 = vmatprep.subr.mxu0 0.0
    %3503 = vmatpush1.msra.mxu0 0.0
    %3504 = vmatprep.subr.mxu0 0.0
    %3505 = vmatpush1.msra.mxu0 0.0
    %3506 = vmatprep.subr.mxu0 0.0
    %3507 = vmatpush1.msra.mxu0 0.0
    %3508 = vmatprep.subr.mxu0 0.0
    %3509 = vmatpush1.msra.mxu0 0.0
    %3510 = vmatprep.subr.mxu0 0.0
    %3511 = vmatpush1.msra.mxu0 0.0
    %3512 = vmatprep.subr.mxu0 0.0
    %3513 = vmatpush1.msra.mxu0 %v3475
    %3514 = vmatprep.subr.mxu0 0.0
    %3515 = vmatpush1.msra.mxu0 %v3473
    %3516 = vmatprep.subr.mxu0 0.0
    %3517 = vmatpush2.msra.mxu0 0.0
    %3518 = vmatprep.subr.mxu0 0.0
    %3519 = vmatpush2.msra.mxu0 0.0
    %3520 = vmatprep.subr.mxu0 0.0
    %3521 = vmatpush2.msra.mxu0 0.0
    %3522 = vmatprep.subr.mxu0 0.0
    %3523 = vmatpush2.msra.mxu0 0.0
    %3524 = vmatprep.subr.mxu0 0.0
    %3525 = vmatpush2.msra.mxu0 0.0
    %3526 = vmatprep.subr.mxu0 0.0
    %3527 = vmatpush2.msra.mxu0 0.0
    %3528 = vmatprep.subr.mxu0 0.0
    %3529 = vmatpush2.msra.mxu0 0.0
    %3530 = vmatprep.subr.mxu0 0.0
    %3531 = vmatpush2.msra.mxu0 0.0
    %3532 = vmatprep.subr.mxu0 0.0
    %3533 = vmatpush2.msra.mxu0 0.0
    %3534 = vmatprep.subr.mxu0 0.0
    %3535 = vmatpush2.msra.mxu0 0.0
    %3536 = vmatprep.subr.mxu0 0.0
    %3537 = vmatpush2.msra.mxu0 0.0
    %3538 = vmatprep.subr.mxu0 0.0
    %3539 = vmatpush2.msra.mxu0 0.0
    %3540 = vmatprep.subr.mxu0 0.0
    %3541 = vmatpush2.msra.mxu0 0.0
    %3542 = vmatprep.subr.mxu0 0.0
    %3543 = vmatpush2.msra.mxu0 0.0
    %3544 = vmatprep.subr.mxu0 0.0
    %3545 = vmatpush2.msra.mxu0 0.0
    %3546 = vmatprep.subr.mxu0 0.0
    %3547 = vmatpush2.msra.mxu0 0.0
    %3548 = vmatprep.mubr.f32.mxu0 0.0
    %3549 = vmatmul.mubr.f32.gmra.mxu0 %v3479
    %v3550 = vpop.f32.mrf.mxu0
    %v3551 = vadd.f32 0.0, %v3550
    %v3552 = vpop.f32.mrf.mxu0
    %3553 = vmatprep.mubr.f32.mxu0 0.0
    %3554 = vmatmul.mubr.f32.gmra.mxu0 %v3482
    %v3555 = vpop.f32.mrf.mxu0
    %v3556 = vadd.f32 0.0, %v3555
    %v3557 = vpop.f32.mrf.mxu0
    %3558 = vdwg.mxu0
    %3561 = vrot.lane.b32.xlu0 %v3551, 64
    %v3562 = vpop.permute.xlu0 %3561
    %3563 = vrot.lane.b32.xlu0 %v3556, 64
    %v3564 = vpop.permute.xlu0 %3563
    %v3567 = vsel %vm983, %v3345, %v3562
    %v3568 = vsel %vm983, %v3350, %v3564
    %v3570 = vlaneseq
    %v3571 = vshrl.u32 %v3570, 7
    %v3572 = vsub.s32 0, %v3571
    %v3573 = vrot.slane %v544, %v3572
    %3575 = vmatprep.subr.mxu0 0.0
    %3576 = vmatpush1.msra.mxu0 %v542
    %3577 = vmatprep.subr.mxu0 0.0
    %3578 = vmatpush1.msra.mxu0 %v541
    %3579 = vmatprep.subr.mxu0 0.0
    %3580 = vmatpush1.msra.mxu0 %v540
    %3581 = vmatprep.subr.mxu0 0.0
    %3582 = vmatpush1.msra.mxu0 %v539
    %3583 = vmatprep.subr.mxu0 0.0
    %3584 = vmatpush1.msra.mxu0 %v538
    %3585 = vmatprep.subr.mxu0 0.0
    %3586 = vmatpush1.msra.mxu0 %v537
    %3587 = vmatprep.subr.mxu0 0.0
    %3588 = vmatpush1.msra.mxu0 %v536
    %3589 = vmatprep.subr.mxu0 0.0
    %3590 = vmatpush1.msra.mxu0 %v535
    %3591 = vmatprep.subr.mxu0 0.0
    %3592 = vmatpush1.msra.mxu0 %v534
    %3593 = vmatprep.subr.mxu0 0.0
    %3594 = vmatpush1.msra.mxu0 %v533
    %3595 = vmatprep.subr.mxu0 0.0
    %3596 = vmatpush1.msra.mxu0 %v532
    %3597 = vmatprep.subr.mxu0 0.0
    %3598 = vmatpush1.msra.mxu0 %v531
    %3599 = vmatprep.subr.mxu0 0.0
    %3600 = vmatpush1.msra.mxu0 %v530
    %3601 = vmatprep.subr.mxu0 0.0
    %3602 = vmatpush1.msra.mxu0 %v529
    %3603 = vmatprep.subr.mxu0 0.0
    %3604 = vmatpush1.msra.mxu0 %v528
    %3605 = vmatprep.subr.mxu0 0.0
    %3606 = vmatpush1.msra.mxu0 %v527
    %3607 = vmatprep.subr.mxu0 0.0
    %3608 = vmatpush2.msra.mxu0 0.0
    %3609 = vmatprep.subr.mxu0 0.0
    %3610 = vmatpush2.msra.mxu0 0.0
    %3611 = vmatprep.subr.mxu0 0.0
    %3612 = vmatpush2.msra.mxu0 0.0
    %3613 = vmatprep.subr.mxu0 0.0
    %3614 = vmatpush2.msra.mxu0 0.0
    %3615 = vmatprep.subr.mxu0 0.0
    %3616 = vmatpush2.msra.mxu0 0.0
    %3617 = vmatprep.subr.mxu0 0.0
    %3618 = vmatpush2.msra.mxu0 0.0
    %3619 = vmatprep.subr.mxu0 0.0
    %3620 = vmatpush2.msra.mxu0 0.0
    %3621 = vmatprep.subr.mxu0 0.0
    %3622 = vmatpush2.msra.mxu0 0.0
    %3623 = vmatprep.subr.mxu0 0.0
    %3624 = vmatpush2.msra.mxu0 0.0
    %3625 = vmatprep.subr.mxu0 0.0
    %3626 = vmatpush2.msra.mxu0 0.0
    %3627 = vmatprep.subr.mxu0 0.0
    %3628 = vmatpush2.msra.mxu0 0.0
    %3629 = vmatprep.subr.mxu0 0.0
    %3630 = vmatpush2.msra.mxu0 0.0
    %3631 = vmatprep.subr.mxu0 0.0
    %3632 = vmatpush2.msra.mxu0 0.0
    %3633 = vmatprep.subr.mxu0 0.0
    %3634 = vmatpush2.msra.mxu0 0.0
    %3635 = vmatprep.subr.mxu0 0.0
    %3636 = vmatpush2.msra.mxu0 0.0
    %3637 = vmatprep.subr.mxu0 0.0
    %3638 = vmatpush2.msra.mxu0 0.0
    %3639 = vmatprep.mubr.f32.mxu0 0.0
    %3640 = vmatmul.mubr.f32.gmra.mxu0 %v3157
    %v3641 = vpop.f32.mrf.mxu0
    %v3642 = vadd.f32 %v3573, %v3641
    %v3643 = vpop.f32.mrf.mxu0
    %3644 = vmatprep.mubr.f32.mxu0 0.0
    %3645 = vmatmul.mubr.f32.gmra.mxu0 %v3158
    %v3646 = vpop.f32.mrf.mxu0
    %v3647 = vadd.f32 %v3573, %v3646
    %v3648 = vpop.f32.mrf.mxu0
    %3649 = vmatprep.mubr.f32.mxu0 0.0
    %3650 = vmatmul.mubr.f32.gmra.mxu0 %v3567
    %v3651 = vpop.f32.mrf.mxu0
    %v3652 = vadd.f32 %v3573, %v3651
    %v3653 = vpop.f32.mrf.mxu0
    %3654 = vmatprep.mubr.f32.mxu0 0.0
    %3655 = vmatmul.mubr.f32.gmra.mxu0 %v3568
    %v3656 = vpop.f32.mrf.mxu0
    %v3657 = vadd.f32 %v3573, %v3656
    %v3658 = vpop.f32.mrf.mxu0
    %3659 = vdwg.mxu0
    %v3660 = vadd.f32 %v2555, %v3642
    %v3661 = vadd.f32 %v2556, %v3647
    %v3662 = vadd.f32 %v2557, %v3652
    %v3663 = vadd.f32 %v2558, %v3657
    %3664 = vadd.xlane.f32.xlu0 %v3660
    %v3665 = vpop.xlane.xlu0 %3664
    %3666 = vadd.xlane.f32.xlu0 %v3661
    %v3667 = vpop.xlane.xlu0 %3666
    %3668 = vadd.xlane.f32.xlu0 %v3662
    %v3669 = vpop.xlane.xlu0 %3668
    %3670 = vadd.xlane.f32.xlu0 %v3663
    %v3671 = vpop.xlane.xlu0 %3670
    %v3672 = vmul.f32 %v3665, %v736
    %v3673 = vmul.f32 %v3667, %v736
    %v3674 = vmul.f32 %v3669, %v736
    %v3675 = vmul.f32 %v3671, %v736
    %v3676 = vsub.f32 %v3660, %v3672
    %v3677 = vsub.f32 %v3661, %v3673
    %v3678 = vsub.f32 %v3662, %v3674
    %v3679 = vsub.f32 %v3663, %v3675
    %v3680 = vmul.f32 %v3676, %v3676
    %v3681 = vmul.f32 %v3677, %v3677
    %v3682 = vmul.f32 %v3678, %v3678
    %v3683 = vmul.f32 %v3679, %v3679
    %3684 = vadd.xlane.f32.xlu0 %v3680
    %v3685 = vpop.xlane.xlu0 %3684
    %3686 = vadd.xlane.f32.xlu0 %v3681
    %v3687 = vpop.xlane.xlu0 %3686
    %3688 = vadd.xlane.f32.xlu0 %v3682
    %v3689 = vpop.xlane.xlu0 %3688
    %3690 = vadd.xlane.f32.xlu0 %v3683
    %v3691 = vpop.xlane.xlu0 %3690
    %v3692 = vmul.f32 %v3685, %v736
    %v3693 = vmul.f32 %v3687, %v736
    %v3694 = vmul.f32 %v3689, %v736
    %v3695 = vmul.f32 %v3691, %v736
    %v3696 = vadd.f32 %v3692, 1e-12
    %v3697 = vadd.f32 %v3693, 1e-12
    %v3698 = vadd.f32 %v3694, 1e-12
    %v3699 = vadd.f32 %v3695, 1e-12
    %v3700 = vrsqrt.pop %v3696
    %v3701 = vrsqrt.pop %v3697
    %v3702 = vrsqrt.pop %v3698
    %v3703 = vrsqrt.pop %v3699
    %v3704 = vmul.f32 %v3676, %v3700
    %v3705 = vmul.f32 %v3677, %v3701
    %v3706 = vmul.f32 %v3678, %v3702
    %v3707 = vmul.f32 %v3679, %v3703
    %v3709 = vlaneseq
    %v3710 = vshrl.u32 %v3709, 7
    %v3711 = vsub.s32 0, %v3710
    %v3712 = vrot.slane %v546, %v3711
    %v3714 = vmul.f32 %v3704, %v3712
    %v3715 = vmul.f32 %v3705, %v3712
    %v3716 = vmul.f32 %v3706, %v3712
    %v3717 = vmul.f32 %v3707, %v3712
    %v3719 = vlaneseq
    %v3720 = vshrl.u32 %v3719, 7
    %v3721 = vsub.s32 0, %v3720
    %v3722 = vrot.slane %v548, %v3721
    %v3724 = vadd.f32 %v3714, %v3722
    %v3725 = vadd.f32 %v3715, %v3722
    %v3726 = vadd.f32 %v3716, %v3722
    %v3727 = vadd.f32 %v3717, %v3722
    %v3729 = vlaneseq
    %v3730 = vshrl.u32 %v3729, 7
    %v3731 = vsub.s32 0, %v3730
    %v3732 = vrot.slane %v615, %v3731
    %v3733 = vlaneseq
    %v3734 = vshrl.u32 %v3733, 7
    %v3735 = vsub.s32 1, %v3734
    %v3736 = vrot.slane %v615, %v3735
    %v3737 = vlaneseq
    %v3738 = vshrl.u32 %v3737, 7
    %v3739 = vsub.s32 2, %v3738
    %v3740 = vrot.slane %v615, %v3739
    %v3741 = vlaneseq
    %v3742 = vshrl.u32 %v3741, 7
    %v3743 = vsub.s32 3, %v3742
    %v3744 = vrot.slane %v615, %v3743
    %3749 = vmatprep.subr.mxu0 %v611
    %3750 = vmatpush1.msra.mxu0 %v610
    %3751 = vmatprep.subr.mxu0 %v607
    %3752 = vmatpush1.msra.mxu0 %v606
    %3753 = vmatprep.subr.mxu0 %v603
    %3754 = vmatpush1.msra.mxu0 %v602
    %3755 = vmatprep.subr.mxu0 %v599
    %3756 = vmatpush1.msra.mxu0 %v598
    %3757 = vmatprep.subr.mxu0 %v595
    %3758 = vmatpush1.msra.mxu0 %v594
    %3759 = vmatprep.subr.mxu0 %v591
    %3760 = vmatpush1.msra.mxu0 %v590
    %3761 = vmatprep.subr.mxu0 %v587
    %3762 = vmatpush1.msra.mxu0 %v586
    %3763 = vmatprep.subr.mxu0 %v583
    %3764 = vmatpush1.msra.mxu0 %v582
    %3765 = vmatprep.subr.mxu0 %v579
    %3766 = vmatpush1.msra.mxu0 %v578
    %3767 = vmatprep.subr.mxu0 %v575
    %3768 = vmatpush1.msra.mxu0 %v574
    %3769 = vmatprep.subr.mxu0 %v571
    %3770 = vmatpush1.msra.mxu0 %v570
    %3771 = vmatprep.subr.mxu0 %v567
    %3772 = vmatpush1.msra.mxu0 %v566
    %3773 = vmatprep.subr.mxu0 %v563
    %3774 = vmatpush1.msra.mxu0 %v562
    %3775 = vmatprep.subr.mxu0 %v559
    %3776 = vmatpush1.msra.mxu0 %v558
    %3777 = vmatprep.subr.mxu0 %v555
    %3778 = vmatpush1.msra.mxu0 %v554
    %3779 = vmatprep.subr.mxu0 %v551
    %3780 = vmatpush1.msra.mxu0 %v550
    %3781 = vmatprep.subr.mxu0 0.0
    %3782 = vmatpush2.msra.mxu0 0.0
    %3783 = vmatprep.subr.mxu0 0.0
    %3784 = vmatpush2.msra.mxu0 0.0
    %3785 = vmatprep.subr.mxu0 0.0
    %3786 = vmatpush2.msra.mxu0 0.0
    %3787 = vmatprep.subr.mxu0 0.0
    %3788 = vmatpush2.msra.mxu0 0.0
    %3789 = vmatprep.subr.mxu0 0.0
    %3790 = vmatpush2.msra.mxu0 0.0
    %3791 = vmatprep.subr.mxu0 0.0
    %3792 = vmatpush2.msra.mxu0 0.0
    %3793 = vmatprep.subr.mxu0 0.0
    %3794 = vmatpush2.msra.mxu0 0.0
    %3795 = vmatprep.subr.mxu0 0.0
    %3796 = vmatpush2.msra.mxu0 0.0
    %3797 = vmatprep.subr.mxu0 0.0
    %3798 = vmatpush2.msra.mxu0 0.0
    %3799 = vmatprep.subr.mxu0 0.0
    %3800 = vmatpush2.msra.mxu0 0.0
    %3801 = vmatprep.subr.mxu0 0.0
    %3802 = vmatpush2.msra.mxu0 0.0
    %3803 = vmatprep.subr.mxu0 0.0
    %3804 = vmatpush2.msra.mxu0 0.0
    %3805 = vmatprep.subr.mxu0 0.0
    %3806 = vmatpush2.msra.mxu0 0.0
    %3807 = vmatprep.subr.mxu0 0.0
    %3808 = vmatpush2.msra.mxu0 0.0
    %3809 = vmatprep.subr.mxu0 0.0
    %3810 = vmatpush2.msra.mxu0 0.0
    %3811 = vmatprep.subr.mxu0 0.0
    %3812 = vmatpush2.msra.mxu0 0.0
    %3813 = vmatprep.mubr.f32.mxu0 0.0
    %3814 = vmatmul.mubr.f32.gmra.mxu0 %v3724
    %v3815 = vpop.f32.mrf.mxu0
    %v3816 = vadd.f32 %v3732, %v3815
    %v3817 = vpop.f32.mrf.mxu0
    %v3818 = vadd.f32 %v3736, %v3817
    %3819 = vmatprep.mubr.f32.mxu0 0.0
    %3820 = vmatmul.mubr.f32.gmra.mxu0 %v3725
    %v3821 = vpop.f32.mrf.mxu0
    %v3822 = vadd.f32 %v3732, %v3821
    %v3823 = vpop.f32.mrf.mxu0
    %v3824 = vadd.f32 %v3736, %v3823
    %3825 = vmatprep.mubr.f32.mxu0 0.0
    %3826 = vmatmul.mubr.f32.gmra.mxu0 %v3726
    %v3827 = vpop.f32.mrf.mxu0
    %v3828 = vadd.f32 %v3732, %v3827
    %v3829 = vpop.f32.mrf.mxu0
    %v3830 = vadd.f32 %v3736, %v3829
    %3831 = vmatprep.mubr.f32.mxu0 0.0
    %3832 = vmatmul.mubr.f32.gmra.mxu0 %v3727
    %v3833 = vpop.f32.mrf.mxu0
    %v3834 = vadd.f32 %v3732, %v3833
    %v3835 = vpop.f32.mrf.mxu0
    %v3836 = vadd.f32 %v3736, %v3835
    %3837 = vdwg.mxu0
    %3838 = vmatprep.subr.mxu0 %v613
    %3839 = vmatpush1.msra.mxu0 %v612
    %3840 = vmatprep.subr.mxu0 %v609
    %3841 = vmatpush1.msra.mxu0 %v608
    %3842 = vmatprep.subr.mxu0 %v605
    %3843 = vmatpush1.msra.mxu0 %v604
    %3844 = vmatprep.subr.mxu0 %v601
    %3845 = vmatpush1.msra.mxu0 %v600
    %3846 = vmatprep.subr.mxu0 %v597
    %3847 = vmatpush1.msra.mxu0 %v596
    %3848 = vmatprep.subr.mxu0 %v593
    %3849 = vmatpush1.msra.mxu0 %v592
    %3850 = vmatprep.subr.mxu0 %v589
    %3851 = vmatpush1.msra.mxu0 %v588
    %3852 = vmatprep.subr.mxu0 %v585
    %3853 = vmatpush1.msra.mxu0 %v584
    %3854 = vmatprep.subr.mxu0 %v581
    %3855 = vmatpush1.msra.mxu0 %v580
    %3856 = vmatprep.subr.mxu0 %v577
    %3857 = vmatpush1.msra.mxu0 %v576
    %3858 = vmatprep.subr.mxu0 %v573
    %3859 = vmatpush1.msra.mxu0 %v572
    %3860 = vmatprep.subr.mxu0 %v569
    %3861 = vmatpush1.msra.mxu0 %v568
    %3862 = vmatprep.subr.mxu0 %v565
    %3863 = vmatpush1.msra.mxu0 %v564
    %3864 = vmatprep.subr.mxu0 %v561
    %3865 = vmatpush1.msra.mxu0 %v560
    %3866 = vmatprep.subr.mxu0 %v557
    %3867 = vmatpush1.msra.mxu0 %v556
    %3868 = vmatprep.subr.mxu0 %v553
    %3869 = vmatpush1.msra.mxu0 %v552
    %3870 = vmatprep.subr.mxu0 0.0
    %3871 = vmatpush2.msra.mxu0 0.0
    %3872 = vmatprep.subr.mxu0 0.0
    %3873 = vmatpush2.msra.mxu0 0.0
    %3874 = vmatprep.subr.mxu0 0.0
    %3875 = vmatpush2.msra.mxu0 0.0
    %3876 = vmatprep.subr.mxu0 0.0
    %3877 = vmatpush2.msra.mxu0 0.0
    %3878 = vmatprep.subr.mxu0 0.0
    %3879 = vmatpush2.msra.mxu0 0.0
    %3880 = vmatprep.subr.mxu0 0.0
    %3881 = vmatpush2.msra.mxu0 0.0
    %3882 = vmatprep.subr.mxu0 0.0
    %3883 = vmatpush2.msra.mxu0 0.0
    %3884 = vmatprep.subr.mxu0 0.0
    %3885 = vmatpush2.msra.mxu0 0.0
    %3886 = vmatprep.subr.mxu0 0.0
    %3887 = vmatpush2.msra.mxu0 0.0
    %3888 = vmatprep.subr.mxu0 0.0
    %3889 = vmatpush2.msra.mxu0 0.0
    %3890 = vmatprep.subr.mxu0 0.0
    %3891 = vmatpush2.msra.mxu0 0.0
    %3892 = vmatprep.subr.mxu0 0.0
    %3893 = vmatpush2.msra.mxu0 0.0
    %3894 = vmatprep.subr.mxu0 0.0
    %3895 = vmatpush2.msra.mxu0 0.0
    %3896 = vmatprep.subr.mxu0 0.0
    %3897 = vmatpush2.msra.mxu0 0.0
    %3898 = vmatprep.subr.mxu0 0.0
    %3899 = vmatpush2.msra.mxu0 0.0
    %3900 = vmatprep.subr.mxu0 0.0
    %3901 = vmatpush2.msra.mxu0 0.0
    %3902 = vmatprep.mubr.f32.mxu0 0.0
    %3903 = vmatmul.mubr.f32.gmra.mxu0 %v3724
    %v3904 = vpop.f32.mrf.mxu0
    %v3905 = vadd.f32 %v3740, %v3904
    %v3906 = vpop.f32.mrf.mxu0
    %v3907 = vadd.f32 %v3744, %v3906
    %3908 = vmatprep.mubr.f32.mxu0 0.0
    %3909 = vmatmul.mubr.f32.gmra.mxu0 %v3725
    %v3910 = vpop.f32.mrf.mxu0
    %v3911 = vadd.f32 %v3740, %v3910
    %v3912 = vpop.f32.mrf.mxu0
    %v3913 = vadd.f32 %v3744, %v3912
    %3914 = vmatprep.mubr.f32.mxu0 0.0
    %3915 = vmatmul.mubr.f32.gmra.mxu0 %v3726
    %v3916 = vpop.f32.mrf.mxu0
    %v3917 = vadd.f32 %v3740, %v3916
    %v3918 = vpop.f32.mrf.mxu0
    %v3919 = vadd.f32 %v3744, %v3918
    %3920 = vmatprep.mubr.f32.mxu0 0.0
    %3921 = vmatmul.mubr.f32.gmra.mxu0 %v3727
    %v3922 = vpop.f32.mrf.mxu0
    %v3923 = vadd.f32 %v3740, %v3922
    %v3924 = vpop.f32.mrf.mxu0
    %v3925 = vadd.f32 %v3744, %v3924
    %3926 = vdwg.mxu0
    %v3927 = vmul.f32 %v3816, 0.5
    %v3928 = vmul.f32 %v3818, 0.5
    %v3929 = vmul.f32 %v3905, 0.5
    %v3930 = vmul.f32 %v3907, 0.5
    %v3931 = vmul.f32 %v3822, 0.5
    %v3932 = vmul.f32 %v3824, 0.5
    %v3933 = vmul.f32 %v3911, 0.5
    %v3934 = vmul.f32 %v3913, 0.5
    %v3935 = vmul.f32 %v3828, 0.5
    %v3936 = vmul.f32 %v3830, 0.5
    %v3937 = vmul.f32 %v3917, 0.5
    %v3938 = vmul.f32 %v3919, 0.5
    %v3939 = vmul.f32 %v3834, 0.5
    %v3940 = vmul.f32 %v3836, 0.5
    %v3941 = vmul.f32 %v3923, 0.5
    %v3942 = vmul.f32 %v3925, 0.5
    %v3943 = vmul.f32 %v3816, 0.044715
    %v3944 = vmul.f32 %v3818, 0.044715
    %v3945 = vmul.f32 %v3905, 0.044715
    %v3946 = vmul.f32 %v3907, 0.044715
    %v3947 = vmul.f32 %v3822, 0.044715
    %v3948 = vmul.f32 %v3824, 0.044715
    %v3949 = vmul.f32 %v3911, 0.044715
    %v3950 = vmul.f32 %v3913, 0.044715
    %v3951 = vmul.f32 %v3828, 0.044715
    %v3952 = vmul.f32 %v3830, 0.044715
    %v3953 = vmul.f32 %v3917, 0.044715
    %v3954 = vmul.f32 %v3919, 0.044715
    %v3955 = vmul.f32 %v3834, 0.044715
    %v3956 = vmul.f32 %v3836, 0.044715
    %v3957 = vmul.f32 %v3923, 0.044715
    %v3958 = vmul.f32 %v3925, 0.044715
    %v3959 = vmul.f32 %v3943, %v3816
    %v3960 = vmul.f32 %v3944, %v3818
    %v3961 = vmul.f32 %v3945, %v3905
    %v3962 = vmul.f32 %v3946, %v3907
    %v3963 = vmul.f32 %v3947, %v3822
    %v3964 = vmul.f32 %v3948, %v3824
    %v3965 = vmul.f32 %v3949, %v3911
    %v3966 = vmul.f32 %v3950, %v3913
    %v3967 = vmul.f32 %v3951, %v3828
    %v3968 = vmul.f32 %v3952, %v3830
    %v3969 = vmul.f32 %v3953, %v3917
    %v3970 = vmul.f32 %v3954, %v3919
    %v3971 = vmul.f32 %v3955, %v3834
    %v3972 = vmul.f32 %v3956, %v3836
    %v3973 = vmul.f32 %v3957, %v3923
    %v3974 = vmul.f32 %v3958, %v3925
    %v3975 = vmul.f32 %v3959, %v3816
    %v3976 = vmul.f32 %v3960, %v3818
    %v3977 = vmul.f32 %v3961, %v3905
    %v3978 = vmul.f32 %v3962, %v3907
    %v3979 = vmul.f32 %v3963, %v3822
    %v3980 = vmul.f32 %v3964, %v3824
    %v3981 = vmul.f32 %v3965, %v3911
    %v3982 = vmul.f32 %v3966, %v3913
    %v3983 = vmul.f32 %v3967, %v3828
    %v3984 = vmul.f32 %v3968, %v3830
    %v3985 = vmul.f32 %v3969, %v3917
    %v3986 = vmul.f32 %v3970, %v3919
    %v3987 = vmul.f32 %v3971, %v3834
    %v3988 = vmul.f32 %v3972, %v3836
    %v3989 = vmul.f32 %v3973, %v3923
    %v3990 = vmul.f32 %v3974, %v3925
    %v3991 = vadd.f32 %v3816, %v3975
    %v3992 = vadd.f32 %v3818, %v3976
    %v3993 = vadd.f32 %v3905, %v3977
    %v3994 = vadd.f32 %v3907, %v3978
    %v3995 = vadd.f32 %v3822, %v3979
    %v3996 = vadd.f32 %v3824, %v3980
    %v3997 = vadd.f32 %v3911, %v3981
    %v3998 = vadd.f32 %v3913, %v3982
    %v3999 = vadd.f32 %v3828, %v3983
    %v4000 = vadd.f32 %v3830, %v3984
    %v4001 = vadd.f32 %v3917, %v3985
    %v4002 = vadd.f32 %v3919, %v3986
    %v4003 = vadd.f32 %v3834, %v3987
    %v4004 = vadd.f32 %v3836, %v3988
    %v4005 = vadd.f32 %v3923, %v3989
    %v4006 = vadd.f32 %v3925, %v3990
    %v4007 = vmul.f32 %v3991, 0.7978846
    %v4008 = vmul.f32 %v3992, 0.7978846
    %v4009 = vmul.f32 %v3993, 0.7978846
    %v4010 = vmul.f32 %v3994, 0.7978846
    %v4011 = vmul.f32 %v3995, 0.7978846
    %v4012 = vmul.f32 %v3996, 0.7978846
    %v4013 = vmul.f32 %v3997, 0.7978846
    %v4014 = vmul.f32 %v3998, 0.7978846
    %v4015 = vmul.f32 %v3999, 0.7978846
    %v4016 = vmul.f32 %v4000, 0.7978846
    %v4017 = vmul.f32 %v4001, 0.7978846
    %v4018 = vmul.f32 %v4002, 0.7978846
    %v4019 = vmul.f32 %v4003, 0.7978846
    %v4020 = vmul.f32 %v4004, 0.7978846
    %v4021 = vmul.f32 %v4005, 0.7978846
    %v4022 = vmul.f32 %v4006, 0.7978846
    %v4023 = vtanh.pop %v4007
    %v4024 = vtanh.pop %v4008
    %v4025 = vtanh.pop %v4009
    %v4026 = vtanh.pop %v4010
    %v4027 = vtanh.pop %v4011
    %v4028 = vtanh.pop %v4012
    %v4029 = vtanh.pop %v4013
    %v4030 = vtanh.pop %v4014
    %v4031 = vtanh.pop %v4015
    %v4032 = vtanh.pop %v4016
    %v4033 = vtanh.pop %v4017
    %v4034 = vtanh.pop %v4018
    %v4035 = vtanh.pop %v4019
    %v4036 = vtanh.pop %v4020
    %v4037 = vtanh.pop %v4021
    %v4038 = vtanh.pop %v4022
    %v4039 = vadd.f32 %v4023, 1.0
    %v4040 = vadd.f32 %v4024, 1.0
    %v4041 = vadd.f32 %v4025, 1.0
    %v4042 = vadd.f32 %v4026, 1.0
    %v4043 = vadd.f32 %v4027, 1.0
    %v4044 = vadd.f32 %v4028, 1.0
    %v4045 = vadd.f32 %v4029, 1.0
    %v4046 = vadd.f32 %v4030, 1.0
    %v4047 = vadd.f32 %v4031, 1.0
    %v4048 = vadd.f32 %v4032, 1.0
    %v4049 = vadd.f32 %v4033, 1.0
    %v4050 = vadd.f32 %v4034, 1.0
    %v4051 = vadd.f32 %v4035, 1.0
    %v4052 = vadd.f32 %v4036, 1.0
    %v4053 = vadd.f32 %v4037, 1.0
    %v4054 = vadd.f32 %v4038, 1.0
    %v4055 = vmul.f32 %v3927, %v4039
    %v4056 = vmul.f32 %v3928, %v4040
    %v4057 = vmul.f32 %v3929, %v4041
    %v4058 = vmul.f32 %v3930, %v4042
    %v4059 = vmul.f32 %v3931, %v4043
    %v4060 = vmul.f32 %v3932, %v4044
    %v4061 = vmul.f32 %v3933, %v4045
    %v4062 = vmul.f32 %v3934, %v4046
    %v4063 = vmul.f32 %v3935, %v4047
    %v4064 = vmul.f32 %v3936, %v4048
    %v4065 = vmul.f32 %v3937, %v4049
    %v4066 = vmul.f32 %v3938, %v4050
    %v4067 = vmul.f32 %v3939, %v4051
    %v4068 = vmul.f32 %v3940, %v4052
    %v4069 = vmul.f32 %v3941, %v4053
    %v4070 = vmul.f32 %v3942, %v4054
    %v4072 = vlaneseq
    %v4073 = vshrl.u32 %v4072, 7
    %v4074 = vsub.s32 0, %v4073
    %v4075 = vrot.slane %v682, %v4074
    %4077 = vmatprep.subr.mxu0 0.0
    %4078 = vmatpush1.msra.mxu0 %v632
    %4079 = vmatprep.subr.mxu0 0.0
    %4080 = vmatpush1.msra.mxu0 %v631
    %4081 = vmatprep.subr.mxu0 0.0
    %4082 = vmatpush1.msra.mxu0 %v630
    %4083 = vmatprep.subr.mxu0 0.0
    %4084 = vmatpush1.msra.mxu0 %v629
    %4085 = vmatprep.subr.mxu0 0.0
    %4086 = vmatpush1.msra.mxu0 %v628
    %4087 = vmatprep.subr.mxu0 0.0
    %4088 = vmatpush1.msra.mxu0 %v627
    %4089 = vmatprep.subr.mxu0 0.0
    %4090 = vmatpush1.msra.mxu0 %v626
    %4091 = vmatprep.subr.mxu0 0.0
    %4092 = vmatpush1.msra.mxu0 %v625
    %4093 = vmatprep.subr.mxu0 0.0
    %4094 = vmatpush1.msra.mxu0 %v624
    %4095 = vmatprep.subr.mxu0 0.0
    %4096 = vmatpush1.msra.mxu0 %v623
    %4097 = vmatprep.subr.mxu0 0.0
    %4098 = vmatpush1.msra.mxu0 %v622
    %4099 = vmatprep.subr.mxu0 0.0
    %4100 = vmatpush1.msra.mxu0 %v621
    %4101 = vmatprep.subr.mxu0 0.0
    %4102 = vmatpush1.msra.mxu0 %v620
    %4103 = vmatprep.subr.mxu0 0.0
    %4104 = vmatpush1.msra.mxu0 %v619
    %4105 = vmatprep.subr.mxu0 0.0
    %4106 = vmatpush1.msra.mxu0 %v618
    %4107 = vmatprep.subr.mxu0 0.0
    %4108 = vmatpush1.msra.mxu0 %v617
    %4109 = vmatprep.subr.mxu0 0.0
    %4110 = vmatpush2.msra.mxu0 %v648
    %4111 = vmatprep.subr.mxu0 0.0
    %4112 = vmatpush2.msra.mxu0 %v647
    %4113 = vmatprep.subr.mxu0 0.0
    %4114 = vmatpush2.msra.mxu0 %v646
    %4115 = vmatprep.subr.mxu0 0.0
    %4116 = vmatpush2.msra.mxu0 %v645
    %4117 = vmatprep.subr.mxu0 0.0
    %4118 = vmatpush2.msra.mxu0 %v644
    %4119 = vmatprep.subr.mxu0 0.0
    %4120 = vmatpush2.msra.mxu0 %v643
    %4121 = vmatprep.subr.mxu0 0.0
    %4122 = vmatpush2.msra.mxu0 %v642
    %4123 = vmatprep.subr.mxu0 0.0
    %4124 = vmatpush2.msra.mxu0 %v641
    %4125 = vmatprep.subr.mxu0 0.0
    %4126 = vmatpush2.msra.mxu0 %v640
    %4127 = vmatprep.subr.mxu0 0.0
    %4128 = vmatpush2.msra.mxu0 %v639
    %4129 = vmatprep.subr.mxu0 0.0
    %4130 = vmatpush2.msra.mxu0 %v638
    %4131 = vmatprep.subr.mxu0 0.0
    %4132 = vmatpush2.msra.mxu0 %v637
    %4133 = vmatprep.subr.mxu0 0.0
    %4134 = vmatpush2.msra.mxu0 %v636
    %4135 = vmatprep.subr.mxu0 0.0
    %4136 = vmatpush2.msra.mxu0 %v635
    %4137 = vmatprep.subr.mxu0 0.0
    %4138 = vmatpush2.msra.mxu0 %v634
    %4139 = vmatprep.subr.mxu0 0.0
    %4140 = vmatpush2.msra.mxu0 %v633
    %4141 = vmatprep.mubr.f32.mxu0 %v4056
    %4142 = vmatmul.mubr.f32.gmra.mxu0 %v4055
    %v4143 = vpop.f32.mrf.mxu0
    %v4144 = vadd.f32 %v4075, %v4143
    %v4145 = vpop.f32.mrf.mxu0
    %4146 = vmatprep.mubr.f32.mxu0 %v4060
    %4147 = vmatmul.mubr.f32.gmra.mxu0 %v4059
    %v4148 = vpop.f32.mrf.mxu0
    %v4149 = vpop.f32.mrf.mxu0
    %4150 = vmatprep.mubr.f32.mxu0 %v4064
    %4151 = vmatmul.mubr.f32.gmra.mxu0 %v4063
    %v4152 = vpop.f32.mrf.mxu0
    %v4153 = vadd.f32 %v4075, %v4152
    %v4154 = vpop.f32.mrf.mxu0
    %4155 = vmatprep.mubr.f32.mxu0 %v4068
    %4156 = vmatmul.mubr.f32.gmra.mxu0 %v4067
    %v4157 = vpop.f32.mrf.mxu0
    %v4158 = vpop.f32.mrf.mxu0
    %4159 = vdwg.mxu0
    %4160 = vmatprep.subr.mxu0 0.0
    %4161 = vmatpush1.msra.mxu0 %v664
    %4162 = vmatprep.subr.mxu0 0.0
    %4163 = vmatpush1.msra.mxu0 %v663
    %4164 = vmatprep.subr.mxu0 0.0
    %4165 = vmatpush1.msra.mxu0 %v662
    %4166 = vmatprep.subr.mxu0 0.0
    %4167 = vmatpush1.msra.mxu0 %v661
    %4168 = vmatprep.subr.mxu0 0.0
    %4169 = vmatpush1.msra.mxu0 %v660
    %4170 = vmatprep.subr.mxu0 0.0
    %4171 = vmatpush1.msra.mxu0 %v659
    %4172 = vmatprep.subr.mxu0 0.0
    %4173 = vmatpush1.msra.mxu0 %v658
    %4174 = vmatprep.subr.mxu0 0.0
    %4175 = vmatpush1.msra.mxu0 %v657
    %4176 = vmatprep.subr.mxu0 0.0
    %4177 = vmatpush1.msra.mxu0 %v656
    %4178 = vmatprep.subr.mxu0 0.0
    %4179 = vmatpush1.msra.mxu0 %v655
    %4180 = vmatprep.subr.mxu0 0.0
    %4181 = vmatpush1.msra.mxu0 %v654
    %4182 = vmatprep.subr.mxu0 0.0
    %4183 = vmatpush1.msra.mxu0 %v653
    %4184 = vmatprep.subr.mxu0 0.0
    %4185 = vmatpush1.msra.mxu0 %v652
    %4186 = vmatprep.subr.mxu0 0.0
    %4187 = vmatpush1.msra.mxu0 %v651
    %4188 = vmatprep.subr.mxu0 0.0
    %4189 = vmatpush1.msra.mxu0 %v650
    %4190 = vmatprep.subr.mxu0 0.0
    %4191 = vmatpush1.msra.mxu0 %v649
    %4192 = vmatprep.subr.mxu0 0.0
    %4193 = vmatpush2.msra.mxu0 %v680
    %4194 = vmatprep.subr.mxu0 0.0
    %4195 = vmatpush2.msra.mxu0 %v679
    %4196 = vmatprep.subr.mxu0 0.0
    %4197 = vmatpush2.msra.mxu0 %v678
    %4198 = vmatprep.subr.mxu0 0.0
    %4199 = vmatpush2.msra.mxu0 %v677
    %4200 = vmatprep.subr.mxu0 0.0
    %4201 = vmatpush2.msra.mxu0 %v676
    %4202 = vmatprep.subr.mxu0 0.0
    %4203 = vmatpush2.msra.mxu0 %v675
    %4204 = vmatprep.subr.mxu0 0.0
    %4205 = vmatpush2.msra.mxu0 %v674
    %4206 = vmatprep.subr.mxu0 0.0
    %4207 = vmatpush2.msra.mxu0 %v673
    %4208 = vmatprep.subr.mxu0 0.0
    %4209 = vmatpush2.msra.mxu0 %v672
    %4210 = vmatprep.subr.mxu0 0.0
    %4211 = vmatpush2.msra.mxu0 %v671
    %4212 = vmatprep.subr.mxu0 0.0
    %4213 = vmatpush2.msra.mxu0 %v670
    %4214 = vmatprep.subr.mxu0 0.0
    %4215 = vmatpush2.msra.mxu0 %v669
    %4216 = vmatprep.subr.mxu0 0.0
    %4217 = vmatpush2.msra.mxu0 %v668
    %4218 = vmatprep.subr.mxu0 0.0
    %4219 = vmatpush2.msra.mxu0 %v667
    %4220 = vmatprep.subr.mxu0 0.0
    %4221 = vmatpush2.msra.mxu0 %v666
    %4222 = vmatprep.subr.mxu0 0.0
    %4223 = vmatpush2.msra.mxu0 %v665
    %4224 = vmatprep.mubr.f32.mxu0 %v4058
    %4225 = vmatmul.mubr.f32.gmra.mxu0 %v4057
    %v4226 = vpop.f32.mrf.mxu0
    %v4227 = vadd.f32 %v4144, %v4226
    %v4228 = vpop.f32.mrf.mxu0
    %4229 = vmatprep.mubr.f32.mxu0 %v4062
    %4230 = vmatmul.mubr.f32.gmra.mxu0 %v4061
    %v4231 = vpop.f32.mrf.mxu0
    %v4232 = vpop.f32.mrf.mxu0
    %4233 = vmatprep.mubr.f32.mxu0 %v4066
    %4234 = vmatmul.mubr.f32.gmra.mxu0 %v4065
    %v4235 = vpop.f32.mrf.mxu0
    %v4236 = vadd.f32 %v4153, %v4235
    %v4237 = vpop.f32.mrf.mxu0
    %4238 = vmatprep.mubr.f32.mxu0 %v4070
    %4239 = vmatmul.mubr.f32.gmra.mxu0 %v4069
    %v4240 = vpop.f32.mrf.mxu0
    %v4241 = vpop.f32.mrf.mxu0
    %4242 = vdwg.mxu0
    %v4243 = vadd.f32 %v3724, %v4227
    %v4244 = vadd.f32 %v3726, %v4236
    %4245 = vadd.xlane.f32.xlu0 %v4243
    %v4246 = vpop.xlane.xlu0 %4245
    %4247 = vadd.xlane.f32.xlu0 %v4244
    %v4248 = vpop.xlane.xlu0 %4247
    %v4249 = vmul.f32 %v4246, %v736
    %v4250 = vmul.f32 %v4248, %v736
    %v4251 = vsub.f32 %v4243, %v4249
    %v4252 = vsub.f32 %v4244, %v4250
    %v4253 = vmul.f32 %v4251, %v4251
    %v4254 = vmul.f32 %v4252, %v4252
    %4255 = vadd.xlane.f32.xlu0 %v4253
    %v4256 = vpop.xlane.xlu0 %4255
    %4257 = vadd.xlane.f32.xlu0 %v4254
    %v4258 = vpop.xlane.xlu0 %4257
    %v4259 = vmul.f32 %v4256, %v736
    %v4260 = vmul.f32 %v4258, %v736
    %v4261 = vadd.f32 %v4259, 1e-12
    %v4262 = vadd.f32 %v4260, 1e-12
    %v4263 = vrsqrt.pop %v4261
    %v4264 = vrsqrt.pop %v4262
    %v4265 = vmul.f32 %v4251, %v4263
    %v4266 = vmul.f32 %v4252, %v4264
    %v4268 = vlaneseq
    %v4269 = vshrl.u32 %v4268, 7
    %v4270 = vsub.s32 0, %v4269
    %v4271 = vrot.slane %v684, %v4270
    %v4273 = vmul.f32 %v4265, %v4271
    %v4274 = vmul.f32 %v4266, %v4271
    %v4276 = vlaneseq
    %v4277 = vshrl.u32 %v4276, 7
    %v4278 = vsub.s32 0, %v4277
    %v4279 = vrot.slane %v686, %v4278
    %v4281 = vadd.f32 %v4273, %v4279
    %v4282 = vadd.f32 %v4274, %v4279
    %v4284 = vrot.slane %v4282, 7
    %vm4286 = vcmask 1040384
    %v4287 = vsel %vm4286, %v4281, %v4284
    %v4289 = vlaneseq
    %v4290 = vshrl.u32 %v4289, 7
    %v4291 = vsub.s32 0, %v4290
    %v4292 = vrot.slane %v708, %v4291
    %4294 = vmatprep.subr.mxu0 0.0
    %4295 = vmatpush1.msra.mxu0 %v707
    %4296 = vmatprep.subr.mxu0 0.0
    %4297 = vmatpush1.msra.mxu0 %v706
    %4298 = vmatprep.subr.mxu0 0.0
    %4299 = vmatpush1.msra.mxu0 %v705
    %4300 = vmatprep.subr.mxu0 0.0
    %4301 = vmatpush1.msra.mxu0 %v704
    %4302 = vmatprep.subr.mxu0 0.0
    %4303 = vmatpush1.msra.mxu0 %v703
    %4304 = vmatprep.subr.mxu0 0.0
    %4305 = vmatpush1.msra.mxu0 %v702
    %4306 = vmatprep.subr.mxu0 0.0
    %4307 = vmatpush1.msra.mxu0 %v701
    %4308 = vmatprep.subr.mxu0 0.0
    %4309 = vmatpush1.msra.mxu0 %v700
    %4310 = vmatprep.subr.mxu0 0.0
    %4311 = vmatpush1.msra.mxu0 %v699
    %4312 = vmatprep.subr.mxu0 0.0
    %4313 = vmatpush1.msra.mxu0 %v698
    %4314 = vmatprep.subr.mxu0 0.0
    %4315 = vmatpush1.msra.mxu0 %v697
    %4316 = vmatprep.subr.mxu0 0.0
    %4317 = vmatpush1.msra.mxu0 %v696
    %4318 = vmatprep.subr.mxu0 0.0
    %4319 = vmatpush1.msra.mxu0 %v695
    %4320 = vmatprep.subr.mxu0 0.0
    %4321 = vmatpush1.msra.mxu0 %v694
    %4322 = vmatprep.subr.mxu0 0.0
    %4323 = vmatpush1.msra.mxu0 %v693
    %4324 = vmatprep.subr.mxu0 0.0
    %4325 = vmatpush1.msra.mxu0 %v692
    %4326 = vmatprep.subr.mxu0 0.0
    %4327 = vmatpush2.msra.mxu0 0.0
    %4328 = vmatprep.subr.mxu0 0.0
    %4329 = vmatpush2.msra.mxu0 0.0
    %4330 = vmatprep.subr.mxu0 0.0
    %4331 = vmatpush2.msra.mxu0 0.0
    %4332 = vmatprep.subr.mxu0 0.0
    %4333 = vmatpush2.msra.mxu0 0.0
    %4334 = vmatprep.subr.mxu0 0.0
    %4335 = vmatpush2.msra.mxu0 0.0
    %4336 = vmatprep.subr.mxu0 0.0
    %4337 = vmatpush2.msra.mxu0 0.0
    %4338 = vmatprep.subr.mxu0 0.0
    %4339 = vmatpush2.msra.mxu0 0.0
    %4340 = vmatprep.subr.mxu0 0.0
    %4341 = vmatpush2.msra.mxu0 0.0
    %4342 = vmatprep.subr.mxu0 0.0
    %4343 = vmatpush2.msra.mxu0 0.0
    %4344 = vmatprep.subr.mxu0 0.0
    %4345 = vmatpush2.msra.mxu0 0.0
    %4346 = vmatprep.subr.mxu0 0.0
    %4347 = vmatpush2.msra.mxu0 0.0
    %4348 = vmatprep.subr.mxu0 0.0
    %4349 = vmatpush2.msra.mxu0 0.0
    %4350 = vmatprep.subr.mxu0 0.0
    %4351 = vmatpush2.msra.mxu0 0.0
    %4352 = vmatprep.subr.mxu0 0.0
    %4353 = vmatpush2.msra.mxu0 0.0
    %4354 = vmatprep.subr.mxu0 0.0
    %4355 = vmatpush2.msra.mxu0 0.0
    %4356 = vmatprep.subr.mxu0 0.0
    %4357 = vmatpush2.msra.mxu0 0.0
    %4358 = vmatprep.mubr.f32.mxu0 0.0
    %4359 = vmatmul.mubr.f32.gmra.mxu0 %v4287
    %v4360 = vpop.f32.mrf.mxu0
    %v4361 = vadd.f32 %v4292, %v4360
    %v4362 = vpop.f32.mrf.mxu0
    %4363 = vdwg.mxu0
    %v4364 = vtanh.pop %v4361
    %v4366 = vlaneseq
    %v4367 = vshrl.u32 %v4366, 7
    %v4368 = vsub.s32 0, %v4367
    %v4369 = vrot.slane %v725, %v4368
    %4371 = vmatprep.subr.mxu0 0.0
    %4372 = vmatpush1.msra.mxu0 %v724
    %4373 = vmatprep.subr.mxu0 0.0
    %4374 = vmatpush1.msra.mxu0 %v723
    %4375 = vmatprep.subr.mxu0 0.0
    %4376 = vmatpush1.msra.mxu0 %v722
    %4377 = vmatprep.subr.mxu0 0.0
    %4378 = vmatpush1.msra.mxu0 %v721
    %4379 = vmatprep.subr.mxu0 0.0
    %4380 = vmatpush1.msra.mxu0 %v720
    %4381 = vmatprep.subr.mxu0 0.0
    %4382 = vmatpush1.msra.mxu0 %v719
    %4383 = vmatprep.subr.mxu0 0.0
    %4384 = vmatpush1.msra.mxu0 %v718
    %4385 = vmatprep.subr.mxu0 0.0
    %4386 = vmatpush1.msra.mxu0 %v717
    %4387 = vmatprep.subr.mxu0 0.0
    %4388 = vmatpush1.msra.mxu0 %v716
    %4389 = vmatprep.subr.mxu0 0.0
    %4390 = vmatpush1.msra.mxu0 %v715
    %4391 = vmatprep.subr.mxu0 0.0
    %4392 = vmatpush1.msra.mxu0 %v714
    %4393 = vmatprep.subr.mxu0 0.0
    %4394 = vmatpush1.msra.mxu0 %v713
    %4395 = vmatprep.subr.mxu0 0.0
    %4396 = vmatpush1.msra.mxu0 %v712
    %4397 = vmatprep.subr.mxu0 0.0
    %4398 = vmatpush1.msra.mxu0 %v711
    %4399 = vmatprep.subr.mxu0 0.0
    %4400 = vmatpush1.msra.mxu0 %v710
    %4401 = vmatprep.subr.mxu0 0.0
    %4402 = vmatpush1.msra.mxu0 %v709
    %4403 = vmatprep.subr.mxu0 0.0
    %4404 = vmatpush2.msra.mxu0 0.0
    %4405 = vmatprep.subr.mxu0 0.0
    %4406 = vmatpush2.msra.mxu0 0.0
    %4407 = vmatprep.subr.mxu0 0.0
    %4408 = vmatpush2.msra.mxu0 0.0
    %4409 = vmatprep.subr.mxu0 0.0
    %4410 = vmatpush2.msra.mxu0 0.0
    %4411 = vmatprep.subr.mxu0 0.0
    %4412 = vmatpush2.msra.mxu0 0.0
    %4413 = vmatprep.subr.mxu0 0.0
    %4414 = vmatpush2.msra.mxu0 0.0
    %4415 = vmatprep.subr.mxu0 0.0
    %4416 = vmatpush2.msra.mxu0 0.0
    %4417 = vmatprep.subr.mxu0 0.0
    %4418 = vmatpush2.msra.mxu0 0.0
    %4419 = vmatprep.subr.mxu0 0.0
    %4420 = vmatpush2.msra.mxu0 0.0
    %4421 = vmatprep.subr.mxu0 0.0
    %4422 = vmatpush2.msra.mxu0 0.0
    %4423 = vmatprep.subr.mxu0 0.0
    %4424 = vmatpush2.msra.mxu0 0.0
    %4425 = vmatprep.subr.mxu0 0.0
    %4426 = vmatpush2.msra.mxu0 0.0
    %4427 = vmatprep.subr.mxu0 0.0
    %4428 = vmatpush2.msra.mxu0 0.0
    %4429 = vmatprep.subr.mxu0 0.0
    %4430 = vmatpush2.msra.mxu0 0.0
    %4431 = vmatprep.subr.mxu0 0.0
    %4432 = vmatpush2.msra.mxu0 0.0
    %4433 = vmatprep.subr.mxu0 0.0
    %4434 = vmatpush2.msra.mxu0 0.0
    %4435 = vmatprep.mubr.f32.mxu0 0.0
    %4436 = vmatmul.mubr.f32.gmra.mxu0 %v4364
    %v4437 = vpop.f32.mrf.mxu0
    %v4438 = vadd.f32 %v4369, %v4437
    %v4439 = vpop.f32.mrf.mxu0
    %4440 = vdwg.mxu0
    %vm4441 = vcmask 25600
    %4442 = vst.msk [vmem:[#allocation28] sm:$0x3] %vm4441, %v4438
    // Predicated region
    $region146: #{tpu_custom_call.1} parent=1 // pred_check
      _
    $region147: #{tpu_custom_call.1} parent=1 // pred_check_branch
      %4444 = sbr.rel (0) target = $region149
    $region148: #{tpu_custom_call.1} parent=1 // pred_region
      %s4446 = ssub.s32 32, 32
      %4447 = vsyncadd [#allocation4], %s4446
      %s4449 = sshll.u32 [#allocation28], 4
      %s4450 = int_to_ptr.vmem [resolvable:$true] %s4449
      %4452 = dma.vmem_to_hbm [thread:$0]  %s4450, 32, %s20, [#allocation4]
    $region149: #{tpu_custom_call.1} parent=1 // pred_fallthru
      _
    // Predicated region
    $region150: #{tpu_custom_call.1} parent=1 // pred_check
      _
    $region151: #{tpu_custom_call.1} parent=1 // pred_check_branch
      %4454 = sbr.rel (0) target = $region153
    $region152: #{tpu_custom_call.1} parent=1 // pred_region
      %4455 = dma.done [#allocation4], 32
    $region153: #{tpu_custom_call.1} parent=1 // pred_fallthru
      _
    %4456 = vsyncpa [#allocation3], 1
    %4457 = vsyncpa [#allocation6], 1
    %4458 = vsyncpa [#allocation9], 1
    %4459 = vsyncpa [#allocation12], 1
    %4460 = vsyncpa [#allocation15], 1
    %4461 = vsyncpa [#allocation18], 1
    %4462 = vsyncpa [#allocation21], 1
    %4463 = vsyncpa [#allocation24], 1
    %4464 = vsyncpa [#allocation27], 1
    %4465 = vsyncpa [#allocation4], 1

</llo_original>
